<compile_context>
chip_gen: v7x
topology: tpu7x:2x2x1
jax: 0.10.0
libtpu: 0.0.40
codegen_flags: <defaults>
</compile_context>

<pallas_src>
import functools

import jax
import jax.numpy as jnp
from jax.experimental import pallas as pl
from jax.experimental.pallas import tpu as pltpu

D_IN = 500           # size of each of the three input slices
D_TOT = 3 * D_IN     # 1500 raw input features
DP = 512             # lane-aligned (padded) slice width
DIM2 = 10            # hidden width of fc1 (module default)
DIM2P = 128          # lane-aligned (padded) hidden width


def _round_up(n, m):
    return ((n + m - 1) // m) * m


def masked_rank1_kernel(x_ref, wm_ref, bm_ref, w1a_ref, w1b_ref, b1_ref,
                        w2_ref, b2_ref, out_ref, s1p, s2p, rp):
    # ---- In-kernel repack: raw f32 row -> three lane-padded bf16 sections.
    # (Padding lanes are zeroed so stale VMEM NaNs can never leak in.)
    zpad = jnp.zeros((s1p.shape[0], DP - D_IN), jnp.bfloat16)
    s1p[:, :D_IN] = x_ref[:, 0:D_IN].astype(jnp.bfloat16)
    s1p[:, D_IN:] = zpad
    s2p[:, :D_IN] = x_ref[:, D_IN:2 * D_IN].astype(jnp.bfloat16)
    s2p[:, D_IN:] = zpad
    rp[:, :D_IN] = x_ref[:, 2 * D_IN:3 * D_IN].astype(jnp.bfloat16)
    rp[:, D_IN:] = zpad

    # ---- li_mask: Linear(500 -> 500) on the ref slice (bf16 MXU, f32 acc).
    proj = jnp.dot(rp[...], wm_ref[...],
                   preferred_element_type=jnp.float32) + bm_ref[...]

    # ---- Softmax over the feature dim (padded cols carry -1e30 bias -> 0).
    m = jnp.max(proj, axis=-1, keepdims=True)
    e = jnp.exp(proj - m)
    denom = jnp.sum(e, axis=-1, keepdims=True)
    mask_bf = (e * pl.reciprocal(denom, approx=True)).astype(jnp.bfloat16)

    masked_s1 = mask_bf * s1p[...]          # bf16 VALU, shared bf16 mask
    masked_s2 = mask_bf * s2p[...]

    # ---- fc1: Linear(1000 -> dim2) on [masked_s1 ; masked_s2] (split matmul).
    h = (jnp.dot(masked_s1, w1a_ref[...], preferred_element_type=jnp.float32)
         + jnp.dot(masked_s2, w1b_ref[...], preferred_element_type=jnp.float32)
         + b1_ref[...])
    h = jnp.tanh(h)                          # act_fun1 = Tanh
    # dp1: Dropout(0.5) -> identity in inference mode.
    # TODO(synk): training-mode dropout (random masking) not implemented.

    # ---- fc2: Linear(dim2 -> 1) computed as w2 @ h^T so the result is a
    # lane-dense (1, TB) row (unmasked stores, contiguous output DMA).
    out_row = jax.lax.dot_general(
        w2_ref[...], h, (((1,), (1,)), ((), ())),
        preferred_element_type=jnp.float32)
    out_ref[...] = out_row + b2_ref[...]     # (1, TB)


def prepare_params(params):
    """One-time packing: pad to lane-aligned sizes, pre-transpose, cast MXU
    operands to bf16.  Call once and cache alongside the params."""
    dim2 = params["w1"].shape[0]

    wm_t = jnp.zeros((DP, DP), jnp.float32).at[:D_IN, :D_IN].set(params["wm"].T)
    bm_p = jnp.full((1, DP), -1e30, jnp.float32).at[0, :D_IN].set(params["bm"])

    w1_t = params["w1"].T                                      # (1000, dim2)
    w1a = jnp.zeros((DP, DIM2P), jnp.float32).at[:D_IN, :dim2].set(w1_t[:D_IN])
    w1b = jnp.zeros((DP, DIM2P), jnp.float32).at[:D_IN, :dim2].set(w1_t[D_IN:])
    b1_p = jnp.zeros((1, DIM2P), jnp.float32).at[0, :dim2].set(params["b1"])

    w2_row = jnp.zeros((1, DIM2P), jnp.float32).at[0, :dim2].set(params["w2"][0])
    b2_p = params["b2"].reshape(1, 1).astype(jnp.float32)

    return {
        "wm": wm_t.astype(jnp.bfloat16),     # (512, 512) bf16
        "bm": bm_p,                          # (1, 512) f32 (-1e30 in padding)
        "w1a": w1a.astype(jnp.bfloat16),     # (512, 128) bf16
        "w1b": w1b.astype(jnp.bfloat16),     # (512, 128) bf16
        "b1": b1_p,                          # (1, 128) f32
        "w2": w2_row,                        # (1, 128) f32
        "b2": b2_p,                          # (1, 1) f32
    }


def _choose_tb(batch, tb):
    """Batch tile: multiple of 128 (lane-dense output blocks), <= tb, and
    split so the grid keeps >= 2 steps when the batch allows (v7x megacore)."""
    tb = max(128, _round_up(tb, 128))
    TB = min(tb, _round_up(batch, 128))
    if TB >= batch and batch > 128:
        TB = _round_up(pl.cdiv(batch, 2), 128)
    return TB


@functools.partial(jax.jit, static_argnames=("tb",))
def masked_model_rank1(x, prep, *, tb=1024):
    """x: (B, 1500) float32 -> (B, 1) float32 score."""
    B = x.shape[0]
    assert x.shape[1] == D_TOT
    x = x.astype(jnp.float32)

    TB = _choose_tb(B, tb)
    n_tiles = pl.cdiv(B, TB)     # block need not divide B; tail rows are junk
    rows = n_tiles * TB

    const = lambda i: (0, 0)
    grid_spec = pltpu.PrefetchScalarGridSpec(
        num_scalar_prefetch=0,
        grid=(n_tiles,),
        in_specs=[
            pl.BlockSpec((TB, D_TOT), lambda i: (i, 0)),   # raw f32 rows
            pl.BlockSpec((DP, DP), const),                 # wm (VMEM resident)
            pl.BlockSpec((1, DP), const),                  # bm
            pl.BlockSpec((DP, DIM2P), const),              # w1a
            pl.BlockSpec((DP, DIM2P), const),              # w1b
            pl.BlockSpec((1, DIM2P), const),               # b1
            pl.BlockSpec((1, DIM2P), const),               # w2 row
            pl.BlockSpec((1, 1), const),                   # b2
        ],
        out_specs=pl.BlockSpec((1, TB), lambda i: (0, i)), # lane-dense scores
        scratch_shapes=[pltpu.VMEM((TB, DP), jnp.bfloat16)] * 3,
    )

    flops = 2 * rows * (DP * DP + 2 * DP * DIM2P + DIM2P)
    transcendentals = rows * (DP + DIM2P)
    bytes_accessed = (rows * D_TOT * 4 + rows * 4
                      + (DP * DP + 2 * DP * DIM2P) * 2
                      + (DP + 2 * DIM2P + 1) * 4)

    out = pl.pallas_call(
        masked_rank1_kernel,
        out_shape=jax.ShapeDtypeStruct((1, rows), jnp.float32),
        grid_spec=grid_spec,
        compiler_params=pltpu.CompilerParams(
            dimension_semantics=("parallel",),
            vmem_limit_bytes=48 * 1024 * 1024),
        cost_estimate=pl.CostEstimate(
            flops=flops, transcendentals=transcendentals,
            bytes_accessed=bytes_accessed),
    )(x, prep["wm"], prep["bm"], prep["w1a"], prep["w1b"], prep["b1"],
      prep["w2"], prep["b2"])

    return out[0, :B].reshape(B, 1)


def init_params(key, dim2=DIM2):
    """Deterministic init mimicking PyTorch Linear default U(-1/sqrt(fan_in), ...)."""
    ks = jax.random.split(key, 6)

    def lin(kw, kb, fan_out, fan_in):
        bound = 1.0 / jnp.sqrt(fan_in)
        w = jax.random.uniform(kw, (fan_out, fan_in), jnp.float32, -bound, bound)
        b = jax.random.uniform(kb, (fan_out,), jnp.float32, -bound, bound)
        return w, b

    wm, bm = lin(ks[0], ks[1], 500, 500)          # li_mask
    w1, b1 = lin(ks[2], ks[3], dim2, 1000)        # fc1
    w2, b2 = lin(ks[4], ks[5], 1, dim2)           # fc2
    return {"wm": wm, "bm": bm, "w1": w1, "b1": b1, "w2": w2, "b2": b2}


def reference_forward(x, params):
    """Pure-JAX f32 reference of the module forward."""
    s1, s2, r = x[:, :500], x[:, 500:1000], x[:, 1000:]
    proj = r @ params["wm"].T + params["bm"]
    mask = jax.nn.softmax(proj, axis=-1)
    flat = jnp.concatenate([mask * s1, mask * s2], axis=-1)
    h = jnp.tanh(flat @ params["w1"].T + params["b1"])
    return h @ params["w2"].T + params["b2"]


def reference_forward_bf16(x, params):
    """Pure-JAX reference emulating the kernel's bf16-MXU / bf16-mask path."""
    xb = x.astype(jnp.bfloat16)
    s1, s2, r = xb[:, :500], xb[:, 500:1000], xb[:, 1000:]
    proj = jnp.dot(r, params["wm"].T.astype(jnp.bfloat16),
                   preferred_element_type=jnp.float32) + params["bm"]
    mask_bf = jax.nn.softmax(proj, axis=-1).astype(jnp.bfloat16)
    ms1 = mask_bf * s1
    ms2 = mask_bf * s2
    w1_t = params["w1"].T.astype(jnp.bfloat16)
    h = jnp.tanh(jnp.dot(ms1, w1_t[:500], preferred_element_type=jnp.float32)
                 + jnp.dot(ms2, w1_t[500:], preferred_element_type=jnp.float32)
                 + params["b1"])
    return jnp.sum(h * params["w2"][0], axis=-1, keepdims=True) + params["b2"]


if __name__ == "__main__":
    key = jax.random.PRNGKey(0)
    kx, kp = jax.random.split(key)

    # B=200 exercises two grid steps (TB=128 via the megacore split) plus a
    # ragged tail tile; input is (200, 1500) f32 (~1.2 MB).
    B = 200
    x = jax.random.normal(kx, (B, D_TOT), dtype=jnp.float32)
    params = init_params(kp, DIM2)
    prep = prepare_params(params)   # one-time packing, cached with the params

    out = masked_model_rank1(x, prep)
    out = jax.block_until_ready(out)

    ref_bf16 = reference_forward_bf16(x, params)
    ref_f32 = reference_forward(x, params)
    assert out.shape == (B, 1)
    assert bool(jnp.all(jnp.isfinite(out)))
    # Tight check vs a reference that uses the same bf16 ops.
    assert jnp.allclose(out, ref_bf16, atol=5e-3, rtol=5e-3), "mismatch vs bf16 reference"
    # Looser sanity check vs the full-f32 reference.
    assert jnp.allclose(out, ref_f32, atol=3e-2, rtol=3e-2), "mismatch vs f32 reference"

    print("KERNEL_OK")
</pallas_src>

<mosaic_0001>
module attributes {stable_mosaic.version = 11 : i64} {
  func.func @masked_rank1_kernel(%arg0: i32, %arg1: memref<128x1500xf32, #tpu.memory_space<vmem>>, %arg2: memref<512x512xbf16, #tpu.memory_space<vmem>>, %arg3: memref<1x512xf32, #tpu.memory_space<vmem>>, %arg4: memref<512x128xbf16, #tpu.memory_space<vmem>>, %arg5: memref<512x128xbf16, #tpu.memory_space<vmem>>, %arg6: memref<1x128xf32, #tpu.memory_space<vmem>>, %arg7: memref<1x128xf32, #tpu.memory_space<vmem>>, %arg8: memref<1x1xf32, #tpu.memory_space<vmem>>, %arg9: memref<1x128xf32, #tpu.memory_space<vmem>>, %arg10: memref<128x512xbf16, #tpu.memory_space<vmem>>, %arg11: memref<128x512xbf16, #tpu.memory_space<vmem>>, %arg12: memref<128x512xbf16, #tpu.memory_space<vmem>>) attributes {dimension_semantics = [#tpu.dimension_semantics<parallel>], iteration_bounds = array<i64: 2>, scalar_prefetch = 0 : i64, scratch_operands = 3 : i64, tpu.core_type = #tpu.core_type<tc>, window_params = [{transform_indices = @transform_0, window_bounds = array<i64: 128, 1500>}, {pipeline_mode = #tpu.pipeline_mode<synchronous>, transform_indices = @transform_1, window_bounds = array<i64: 512, 512>}, {pipeline_mode = #tpu.pipeline_mode<synchronous>, transform_indices = @transform_2, window_bounds = array<i64: 1, 512>}, {pipeline_mode = #tpu.pipeline_mode<synchronous>, transform_indices = @transform_3, window_bounds = array<i64: 512, 128>}, {pipeline_mode = #tpu.pipeline_mode<synchronous>, transform_indices = @transform_4, window_bounds = array<i64: 512, 128>}, {pipeline_mode = #tpu.pipeline_mode<synchronous>, transform_indices = @transform_5, window_bounds = array<i64: 1, 128>}, {pipeline_mode = #tpu.pipeline_mode<synchronous>, transform_indices = @transform_6, window_bounds = array<i64: 1, 128>}, {pipeline_mode = #tpu.pipeline_mode<synchronous>, transform_indices = @transform_7, window_bounds = array<i64: 1, 1>}, {transform_indices = @transform_8, window_bounds = array<i64: 1, 128>}]} {
    %cst = arith.constant 0.000000e+00 : bf16
    %0 = vector.broadcast %cst : bf16 to vector<128x12xbf16>
    %c0 = arith.constant 0 : index
    %c0_0 = arith.constant 0 : index
    %1 = vector.load %arg1[%c0, %c0_0] : memref<128x1500xf32, #tpu.memory_space<vmem>>, vector<128x500xf32>
    %2 = arith.truncf %1 : vector<128x500xf32> to vector<128x500xbf16>
    %c0_1 = arith.constant 0 : index
    %c0_2 = arith.constant 0 : index
    %3 = vector.load %arg10[%c0_1, %c0_2] : memref<128x512xbf16, #tpu.memory_space<vmem>>, vector<128x500xbf16>
    tpu.vector_store %arg10[%c0_1, %c0_2], %2 {strides = array<i32>} : memref<128x512xbf16, #tpu.memory_space<vmem>>, vector<128x500xbf16>,
    %c0_3 = arith.constant 0 : index
    %c500 = arith.constant 500 : index
    %4 = vector.load %arg10[%c0_3, %c500] : memref<128x512xbf16, #tpu.memory_space<vmem>>, vector<128x12xbf16>
    tpu.vector_store %arg10[%c0_3, %c500], %0 {strides = array<i32>} : memref<128x512xbf16, #tpu.memory_space<vmem>>, vector<128x12xbf16>,
    %c0_4 = arith.constant 0 : index
    %c500_5 = arith.constant 500 : index
    %5 = vector.load %arg1[%c0_4, %c500_5] : memref<128x1500xf32, #tpu.memory_space<vmem>>, vector<128x500xf32>
    %6 = arith.truncf %5 : vector<128x500xf32> to vector<128x500xbf16>
    %c0_6 = arith.constant 0 : index
    %c0_7 = arith.constant 0 : index
    %7 = vector.load %arg11[%c0_6, %c0_7] : memref<128x512xbf16, #tpu.memory_space<vmem>>, vector<128x500xbf16>
    tpu.vector_store %arg11[%c0_6, %c0_7], %6 {strides = array<i32>} : memref<128x512xbf16, #tpu.memory_space<vmem>>, vector<128x500xbf16>,
    %c0_8 = arith.constant 0 : index
    %c500_9 = arith.constant 500 : index
    %8 = vector.load %arg11[%c0_8, %c500_9] : memref<128x512xbf16, #tpu.memory_space<vmem>>, vector<128x12xbf16>
    tpu.vector_store %arg11[%c0_8, %c500_9], %0 {strides = array<i32>} : memref<128x512xbf16, #tpu.memory_space<vmem>>, vector<128x12xbf16>,
    %c0_10 = arith.constant 0 : index
    %c1000 = arith.constant 1000 : index
    %9 = vector.load %arg1[%c0_10, %c1000] : memref<128x1500xf32, #tpu.memory_space<vmem>>, vector<128x500xf32>
    %10 = arith.truncf %9 : vector<128x500xf32> to vector<128x500xbf16>
    %c0_11 = arith.constant 0 : index
    %c0_12 = arith.constant 0 : index
    %11 = vector.load %arg12[%c0_11, %c0_12] : memref<128x512xbf16, #tpu.memory_space<vmem>>, vector<128x500xbf16>
    tpu.vector_store %arg12[%c0_11, %c0_12], %10 {strides = array<i32>} : memref<128x512xbf16, #tpu.memory_space<vmem>>, vector<128x500xbf16>,
    %c0_13 = arith.constant 0 : index
    %c500_14 = arith.constant 500 : index
    %12 = vector.load %arg12[%c0_13, %c500_14] : memref<128x512xbf16, #tpu.memory_space<vmem>>, vector<128x12xbf16>
    tpu.vector_store %arg12[%c0_13, %c500_14], %0 {strides = array<i32>} : memref<128x512xbf16, #tpu.memory_space<vmem>>, vector<128x12xbf16>,
    %c0_15 = arith.constant 0 : index
    %c0_16 = arith.constant 0 : index
    %13 = vector.load %arg12[%c0_15, %c0_16] : memref<128x512xbf16, #tpu.memory_space<vmem>>, vector<128x512xbf16>
    %c0_17 = arith.constant 0 : index
    %c0_18 = arith.constant 0 : index
    %14 = vector.load %arg2[%c0_17, %c0_18] : memref<512x512xbf16, #tpu.memory_space<vmem>>, vector<512x512xbf16>
    %cst_19 = arith.constant dense<0.000000e+00> : vector<128x512xf32>
    %15 = tpu.matmul %13, %14, %cst_19 {dimension_numbers = #tpu.dot_dimension_numbers<[1], [0], [0], [1], [0, 0, 1, 1], [], []>} : vector<128x512xbf16>, vector<512x512xbf16>, vector<128x512xf32> -> vector<128x512xf32>
    %c0_20 = arith.constant 0 : index
    %c0_21 = arith.constant 0 : index
    %16 = vector.load %arg3[%c0_20, %c0_21] : memref<1x512xf32, #tpu.memory_space<vmem>>, vector<1x512xf32>
    %17 = vector.broadcast %16 : vector<1x512xf32> to vector<128x512xf32>
    %18 = arith.addf %15, %17 : vector<128x512xf32>
    %cst_22 = arith.constant dense<0xFF800000> : vector<128xf32>
    %19 = vector.multi_reduction <maximumf>, %18, %cst_22 [1] : vector<128x512xf32> to vector<128xf32>
    %20 = vector.shape_cast %19 : vector<128xf32> to vector<128x1xf32>
    %21 = vector.broadcast %20 : vector<128x1xf32> to vector<128x512xf32>
    %22 = arith.subf %18, %21 : vector<128x512xf32>
    %23 = math.exp %22 : vector<128x512xf32>
    %cst_23 = arith.constant dense<0.000000e+00> : vector<128xf32>
    %24 = vector.multi_reduction <add>, %23, %cst_23 [1] : vector<128x512xf32> to vector<128xf32>
    %25 = vector.shape_cast %24 : vector<128xf32> to vector<128x1xf32>
    %26 = tpu.reciprocal %25 {approx = true} : vector<128x1xf32> -> vector<128x1xf32>
    %27 = vector.broadcast %26 : vector<128x1xf32> to vector<128x512xf32>
    %28 = arith.mulf %23, %27 : vector<128x512xf32>
    %29 = arith.truncf %28 : vector<128x512xf32> to vector<128x512xbf16>
    %c0_24 = arith.constant 0 : index
    %c0_25 = arith.constant 0 : index
    %30 = vector.load %arg10[%c0_24, %c0_25] : memref<128x512xbf16, #tpu.memory_space<vmem>>, vector<128x512xbf16>
    %31 = arith.mulf %29, %30 : vector<128x512xbf16>
    %c0_26 = arith.constant 0 : index
    %c0_27 = arith.constant 0 : index
    %32 = vector.load %arg11[%c0_26, %c0_27] : memref<128x512xbf16, #tpu.memory_space<vmem>>, vector<128x512xbf16>
    %33 = arith.mulf %29, %32 : vector<128x512xbf16>
    %c0_28 = arith.constant 0 : index
    %c0_29 = arith.constant 0 : index
    %34 = vector.load %arg4[%c0_28, %c0_29] : memref<512x128xbf16, #tpu.memory_space<vmem>>, vector<512x128xbf16>
    %cst_30 = arith.constant dense<0.000000e+00> : vector<128x128xf32>
    %35 = tpu.matmul %31, %34, %cst_30 {dimension_numbers = #tpu.dot_dimension_numbers<[1], [0], [0], [1], [0, 0, 1, 1], [], []>} : vector<128x512xbf16>, vector<512x128xbf16>, vector<128x128xf32> -> vector<128x128xf32>
    %c0_31 = arith.constant 0 : index
    %c0_32 = arith.constant 0 : index
    %36 = vector.load %arg5[%c0_31, %c0_32] : memref<512x128xbf16, #tpu.memory_space<vmem>>, vector<512x128xbf16>
    %cst_33 = arith.constant dense<0.000000e+00> : vector<128x128xf32>
    %37 = tpu.matmul %33, %36, %cst_33 {dimension_numbers = #tpu.dot_dimension_numbers<[1], [0], [0], [1], [0, 0, 1, 1], [], []>} : vector<128x512xbf16>, vector<512x128xbf16>, vector<128x128xf32> -> vector<128x128xf32>
    %38 = arith.addf %35, %37 : vector<128x128xf32>
    %c0_34 = arith.constant 0 : index
    %c0_35 = arith.constant 0 : index
    %39 = vector.load %arg6[%c0_34, %c0_35] : memref<1x128xf32, #tpu.memory_space<vmem>>, vector<1x128xf32>
    %40 = vector.broadcast %39 : vector<1x128xf32> to vector<128x128xf32>
    %41 = arith.addf %38, %40 : vector<128x128xf32>
    %42 = math.tanh %41 : vector<128x128xf32>
    %c0_36 = arith.constant 0 : index
    %c0_37 = arith.constant 0 : index
    %43 = vector.load %arg7[%c0_36, %c0_37] : memref<1x128xf32, #tpu.memory_space<vmem>>, vector<1x128xf32>
    %cst_38 = arith.constant dense<0.000000e+00> : vector<1x128xf32>
    %44 = tpu.matmul %43, %42, %cst_38 {dimension_numbers = #tpu.dot_dimension_numbers<[1], [1], [0], [0], [0, 0, 1, 0], [], []>} : vector<1x128xf32>, vector<128x128xf32>, vector<1x128xf32> -> vector<1x128xf32>
    %c0_39 = arith.constant 0 : index
    %c0_40 = arith.constant 0 : index
    %45 = vector.load %arg8[%c0_39, %c0_40] : memref<1x1xf32, #tpu.memory_space<vmem>>, vector<1x1xf32>
    %46 = vector.broadcast %45 : vector<1x1xf32> to vector<1x128xf32>
    %47 = arith.addf %44, %46 : vector<1x128xf32>
    %c0_41 = arith.constant 0 : index
    %c0_42 = arith.constant 0 : index
    %48 = vector.load %arg9[%c0_41, %c0_42] : memref<1x128xf32, #tpu.memory_space<vmem>>, vector<1x128xf32>
    tpu.vector_store %arg9[%c0_41, %c0_42], %47 {strides = array<i32>} : memref<1x128xf32, #tpu.memory_space<vmem>>, vector<1x128xf32>,
    return
  }
  func.func @transform_0(%arg0: i32) -> (i32, i32) {
    %c0_i32 = arith.constant 0 : i32
    %c0_i32_0 = arith.constant 0 : i32
    return %arg0, %c0_i32 : i32, i32
  }
  func.func @transform_1(%arg0: i32) -> (i32, i32) {
    %c0_i32 = arith.constant 0 : i32
    %c0_i32_0 = arith.constant 0 : i32
    %c0_i32_1 = arith.constant 0 : i32
    return %c0_i32, %c0_i32_0 : i32, i32
  }
  func.func @transform_2(%arg0: i32) -> (i32, i32) {
    %c0_i32 = arith.constant 0 : i32
    %c0_i32_0 = arith.constant 0 : i32
    %c0_i32_1 = arith.constant 0 : i32
    return %c0_i32, %c0_i32_0 : i32, i32
  }
  func.func @transform_3(%arg0: i32) -> (i32, i32) {
    %c0_i32 = arith.constant 0 : i32
    %c0_i32_0 = arith.constant 0 : i32
    %c0_i32_1 = arith.constant 0 : i32
    return %c0_i32, %c0_i32_0 : i32, i32
  }
  func.func @transform_4(%arg0: i32) -> (i32, i32) {
    %c0_i32 = arith.constant 0 : i32
    %c0_i32_0 = arith.constant 0 : i32
    %c0_i32_1 = arith.constant 0 : i32
    return %c0_i32, %c0_i32_0 : i32, i32
  }
  func.func @transform_5(%arg0: i32) -> (i32, i32) {
    %c0_i32 = arith.constant 0 : i32
    %c0_i32_0 = arith.constant 0 : i32
    %c0_i32_1 = arith.constant 0 : i32
    return %c0_i32, %c0_i32_0 : i32, i32
  }
  func.func @transform_6(%arg0: i32) -> (i32, i32) {
    %c0_i32 = arith.constant 0 : i32
    %c0_i32_0 = arith.constant 0 : i32
    %c0_i32_1 = arith.constant 0 : i32
    return %c0_i32, %c0_i32_0 : i32, i32
  }
  func.func @transform_7(%arg0: i32) -> (i32, i32) {
    %c0_i32 = arith.constant 0 : i32
    %c0_i32_0 = arith.constant 0 : i32
    %c0_i32_1 = arith.constant 0 : i32
    return %c0_i32, %c0_i32_0 : i32, i32
  }
  func.func @transform_8(%arg0: i32) -> (i32, i32) {
    %c0_i32 = arith.constant 0 : i32
    %c0_i32_0 = arith.constant 0 : i32
    return %c0_i32, %arg0 : i32, i32
  }
}

</mosaic_0001>

<llo_original>
// kernel: masked_model_rank1.1
$region0: #{masked_model_rank1.1}
  #allocation0 [shape = 'u32[]', space=smem, size = 0x4, offset = 0x4, fixed_abs, tag = 'smem constant byte address 0x4 - core index']
  #allocation1 [shape = 'u32[144,128]{1,0:T(1,128)}', space=vmem, size = 0x12000, scoped, tag = 'internal scratch']
  #allocation2 [shape = 'bf16[128,512]{1,0:T(16,128)(2,1)}', space=vmem, size = 0x20000, scoped, tag = 'scratch operand']
  #allocation3 [shape = 'bf16[128,512]{1,0:T(16,128)(2,1)}', space=vmem, size = 0x20000, scoped, tag = 'scratch operand']
  #allocation4 [shape = 'bf16[128,512]{1,0:T(16,128)(2,1)}', space=vmem, size = 0x20000, scoped, tag = 'scratch operand']
  #allocation5 [shape = 'f32[1,1]{1,0:T(1,128)S(1)}', space=vmem, size = 0x200, scoped, tag = 'scoped memory for masked_model_rank1.1']
  %s0 = inlined_call_operand.hbm [shape: f32[200,1500], index: 0, kind: input, shape index: {}]
  %s1 = inlined_call_operand.hbm [shape: bf16[512,512], index: 1, kind: input, shape index: {}]
  %s2 = inlined_call_operand.hbm [shape: f32[1,512], index: 2, kind: input, shape index: {}]
  %s3 = inlined_call_operand.hbm [shape: bf16[512,128], index: 3, kind: input, shape index: {}]
  %s4 = inlined_call_operand.hbm [shape: bf16[512,128], index: 4, kind: input, shape index: {}]
  %s5 = inlined_call_operand.hbm [shape: f32[1,128], index: 5, kind: input, shape index: {}]
  %s6 = inlined_call_operand.hbm [shape: f32[1,128], index: 6, kind: input, shape index: {}]
  %s7 = inlined_call_operand.<no memory space> [shape: f32[1,1], index: 7, kind: input, shape index: {}]
  %s8 = inlined_call_operand.vmem [shape: f32[1,256], index: 8, kind: output, shape index: {}]
  %s9 = sld [smem:[#allocation0]]
  $region93: #{masked_model_rank1.1} parent=0
    _
  %s11 = ssub.s32 1, %s9
  %s12 = scalar_select 0, %s11, %s9
  %v13 = vstv %s7
  %14 = vst [vmem:[#allocation5] sm:$0x1] %v13
  $region1: #{masked_model_rank1.1} parent=0
    #allocation6 [shape = 'u8[1572864]{0}', space=vmem, size = 0x180000, scoped, tag = 'input window, operand 0']
    #allocation7 [shape = 's32[2]{0}', space=sflag, size = 0x8, scoped, tag = 'scoped memory for masked_model_rank1.1']
    #allocation8 [shape = 'u8[524288]{0}', space=vmem, size = 0x80000, scoped, tag = 'input window, operand 1, single buffered']
    #allocation9 [shape = 's32[1]{0}', space=sflag, size = 0x4, scoped, tag = 'scoped memory for masked_model_rank1.1']
    #allocation10 [shape = 'u8[2048]{0}', space=vmem, size = 0x800, scoped, tag = 'input window, operand 2, single buffered']
    #allocation11 [shape = 'u8[131072]{0}', space=vmem, size = 0x20000, scoped, tag = 'input window, operand 3, single buffered']
    #allocation12 [shape = 's32[1]{0}', space=sflag, size = 0x4, scoped, tag = 'scoped memory for masked_model_rank1.1']
    #allocation13 [shape = 'u8[131072]{0}', space=vmem, size = 0x20000, scoped, tag = 'input window, operand 4, single buffered']
    #allocation14 [shape = 'u8[512]{0}', space=vmem, size = 0x400, scoped, tag = 'input window, operand 5, single buffered']
    #allocation15 [shape = 's32[1]{0}', space=sflag, size = 0x4, scoped, tag = 'scoped memory for masked_model_rank1.1']
    #allocation16 [shape = 'u8[512]{0}', space=vmem, size = 0x400, scoped, tag = 'input window, operand 6, single buffered']
    %15 = vsyncpa [#allocation7], 0
    %s16 = scalar_lea.sflag [#allocation7], 1
    %17 = vsyncpa %s16, 0
    %18 = vsyncpa [#allocation9], 0
    %19 = vsyncpa [#allocation12], 0
    %20 = vsyncpa [#allocation15], 0
    loop: start=0, step=1, limit=4
    $region2: #{masked_model_rank1.1} parent=1 // loop_pre_header
      _
    $region3: #{masked_model_rank1.1} parent=1 // loop_header
      %s22 = sphi 0, %s26
      %p23 = scmp.ge.s32.totalorder %s22, 4
      %s32 = sphi 0, %s34
      %s35 = sphi 0, %s32
      %s36 = sphi 0, %s35
      %s52 = sphi 0, %s36
      %s56 = sphi 0, %s56
      %s58 = sphi 0, %s56
      %s59 = sphi 0, %s58
      %s73 = sphi 0, %s59
      %s77 = sphi 0, %s77
      %s79 = sphi 0, %s77
      %s80 = sphi 0, %s79
      %s94 = sphi 0, %s80
      %s98 = sphi 0, %s98
      %s100 = sphi 0, %s98
      %s101 = sphi 0, %s100
      %s115 = sphi 0, %s101
      %s119 = sphi 0, %s119
      %s121 = sphi 0, %s119
      %s122 = sphi 0, %s121
      %s136 = sphi 0, %s122
      %s140 = sphi 0, %s140
      %s142 = sphi 0, %s140
      %s143 = sphi 0, %s142
      %s157 = sphi 0, %s143
      %s161 = sphi 0, %s161
      %s163 = sphi 0, %s161
      %s164 = sphi 0, %s163
      %s178 = sphi 0, %s164
      %s182 = sphi 0, %s182
      %s184 = sphi 0, %s182
      %s185 = sphi 0, %s184
      %s199 = sphi 0, %s185
      %s205 = sphi 0, %s207
      %s208 = sphi 0, %s205
      %s209 = sphi 0, %s208
      %s225 = sphi 0, %s209
    $region4: #{masked_model_rank1.1} parent=1 // loop_header_branch
      %25 = sbr.rel (%p23) target = $region8
    $region5: #{masked_model_rank1.1} parent=1 // loop_body
      %s27 = ssub.s32 %s22, 1
      %s28 = ssub.s32 %s22, 2
      %s29 = sadd.s32 %s22, 1
      %s30 = ssub.s32 %s22, %s29
      %p31 = scmp.eq.s32.totalorder %s30, 0
      %s33 = sadd.s32 %s32, 1
      %s34 = scalar_select %p31, %s32, %s33
      %p37 = pneg %p31
      %p38 = scmp.eq.s32.totalorder %s22, 1
      %p39 = por %p37, %p38
      %p40 = scmp.ne.s32.totalorder %s32, %s35
      %p41 = scmp.eq.s32.totalorder %s22, 0
      %p42 = por %p40, %p41
      %p43 = scmp.ne.s32.totalorder %s32, %s35
      %p44 = scmp.eq.s32.totalorder %s27, 1
      %p45 = por %p43, %p44
      %p46 = scmp.ne.s32.totalorder %s35, %s36
      %p47 = scmp.eq.s32.totalorder %s27, 0
      %p48 = por %p46, %p47
      %p49 = scmp.ne.s32.totalorder %s35, %s36
      %p50 = scmp.eq.s32.totalorder %s28, 1
      %p51 = por %p49, %p50
      %p53 = scmp.ne.s32.totalorder %s36, %s52
      %p54 = scmp.eq.s32.totalorder %s28, 0
      %p55 = por %p53, %p54
      %s57 = sadd.s32 %s56, 1
      %p60 = scmp.eq.s32.totalorder %s22, 1
      %p61 = scmp.ne.s32.totalorder %s56, %s58
      %p62 = scmp.eq.s32.totalorder %s22, 0
      %p63 = por %p61, %p62
      %p64 = scmp.ne.s32.totalorder %s56, %s58
      %p65 = scmp.eq.s32.totalorder %s27, 1
      %p66 = por %p64, %p65
      %p67 = scmp.ne.s32.totalorder %s58, %s59
      %p68 = scmp.eq.s32.totalorder %s27, 0
      %p69 = por %p67, %p68
      %p70 = scmp.ne.s32.totalorder %s58, %s59
      %p71 = scmp.eq.s32.totalorder %s28, 1
      %p72 = por %p70, %p71
      %p74 = scmp.ne.s32.totalorder %s59, %s73
      %p75 = scmp.eq.s32.totalorder %s28, 0
      %p76 = por %p74, %p75
      %s78 = sadd.s32 %s77, 1
      %p81 = scmp.eq.s32.totalorder %s22, 1
      %p82 = scmp.ne.s32.totalorder %s77, %s79
      %p83 = scmp.eq.s32.totalorder %s22, 0
      %p84 = por %p82, %p83
      %p85 = scmp.ne.s32.totalorder %s77, %s79
      %p86 = scmp.eq.s32.totalorder %s27, 1
      %p87 = por %p85, %p86
      %p88 = scmp.ne.s32.totalorder %s79, %s80
      %p89 = scmp.eq.s32.totalorder %s27, 0
      %p90 = por %p88, %p89
      %p91 = scmp.ne.s32.totalorder %s79, %s80
      %p92 = scmp.eq.s32.totalorder %s28, 1
      %p93 = por %p91, %p92
      %p95 = scmp.ne.s32.totalorder %s80, %s94
      %p96 = scmp.eq.s32.totalorder %s28, 0
      %p97 = por %p95, %p96
      %s99 = sadd.s32 %s98, 1
      %p102 = scmp.eq.s32.totalorder %s22, 1
      %p103 = scmp.ne.s32.totalorder %s98, %s100
      %p104 = scmp.eq.s32.totalorder %s22, 0
      %p105 = por %p103, %p104
      %p106 = scmp.ne.s32.totalorder %s98, %s100
      %p107 = scmp.eq.s32.totalorder %s27, 1
      %p108 = por %p106, %p107
      %p109 = scmp.ne.s32.totalorder %s100, %s101
      %p110 = scmp.eq.s32.totalorder %s27, 0
      %p111 = por %p109, %p110
      %p112 = scmp.ne.s32.totalorder %s100, %s101
      %p113 = scmp.eq.s32.totalorder %s28, 1
      %p114 = por %p112, %p113
      %p116 = scmp.ne.s32.totalorder %s101, %s115
      %p117 = scmp.eq.s32.totalorder %s28, 0
      %p118 = por %p116, %p117
      %s120 = sadd.s32 %s119, 1
      %p123 = scmp.eq.s32.totalorder %s22, 1
      %p124 = scmp.ne.s32.totalorder %s119, %s121
      %p125 = scmp.eq.s32.totalorder %s22, 0
      %p126 = por %p124, %p125
      %p127 = scmp.ne.s32.totalorder %s119, %s121
      %p128 = scmp.eq.s32.totalorder %s27, 1
      %p129 = por %p127, %p128
      %p130 = scmp.ne.s32.totalorder %s121, %s122
      %p131 = scmp.eq.s32.totalorder %s27, 0
      %p132 = por %p130, %p131
      %p133 = scmp.ne.s32.totalorder %s121, %s122
      %p134 = scmp.eq.s32.totalorder %s28, 1
      %p135 = por %p133, %p134
      %p137 = scmp.ne.s32.totalorder %s122, %s136
      %p138 = scmp.eq.s32.totalorder %s28, 0
      %p139 = por %p137, %p138
      %s141 = sadd.s32 %s140, 1
      %p144 = scmp.eq.s32.totalorder %s22, 1
      %p145 = scmp.ne.s32.totalorder %s140, %s142
      %p146 = scmp.eq.s32.totalorder %s22, 0
      %p147 = por %p145, %p146
      %p148 = scmp.ne.s32.totalorder %s140, %s142
      %p149 = scmp.eq.s32.totalorder %s27, 1
      %p150 = por %p148, %p149
      %p151 = scmp.ne.s32.totalorder %s142, %s143
      %p152 = scmp.eq.s32.totalorder %s27, 0
      %p153 = por %p151, %p152
      %p154 = scmp.ne.s32.totalorder %s142, %s143
      %p155 = scmp.eq.s32.totalorder %s28, 1
      %p156 = por %p154, %p155
      %p158 = scmp.ne.s32.totalorder %s143, %s157
      %p159 = scmp.eq.s32.totalorder %s28, 0
      %p160 = por %p158, %p159
      %s162 = sadd.s32 %s161, 1
      %p165 = scmp.eq.s32.totalorder %s22, 1
      %p166 = scmp.ne.s32.totalorder %s161, %s163
      %p167 = scmp.eq.s32.totalorder %s22, 0
      %p168 = por %p166, %p167
      %p169 = scmp.ne.s32.totalorder %s161, %s163
      %p170 = scmp.eq.s32.totalorder %s27, 1
      %p171 = por %p169, %p170
      %p172 = scmp.ne.s32.totalorder %s163, %s164
      %p173 = scmp.eq.s32.totalorder %s27, 0
      %p174 = por %p172, %p173
      %p175 = scmp.ne.s32.totalorder %s163, %s164
      %p176 = scmp.eq.s32.totalorder %s28, 1
      %p177 = por %p175, %p176
      %p179 = scmp.ne.s32.totalorder %s164, %s178
      %p180 = scmp.eq.s32.totalorder %s28, 0
      %p181 = por %p179, %p180
      %s183 = sadd.s32 %s182, 1
      %p186 = scmp.eq.s32.totalorder %s22, 1
      %p187 = scmp.ne.s32.totalorder %s182, %s184
      %p188 = scmp.eq.s32.totalorder %s22, 0
      %p189 = por %p187, %p188
      %p190 = scmp.ne.s32.totalorder %s182, %s184
      %p191 = scmp.eq.s32.totalorder %s27, 1
      %p192 = por %p190, %p191
      %p193 = scmp.ne.s32.totalorder %s184, %s185
      %p194 = scmp.eq.s32.totalorder %s27, 0
      %p195 = por %p193, %p194
      %p196 = scmp.ne.s32.totalorder %s184, %s185
      %p197 = scmp.eq.s32.totalorder %s28, 1
      %p198 = por %p196, %p197
      %p200 = scmp.ne.s32.totalorder %s185, %s199
      %p201 = scmp.eq.s32.totalorder %s28, 0
      %p202 = por %p200, %p201
      %s203 = ssub.s32 %s22, %s29
      %p204 = scmp.eq.s32.totalorder %s203, 0
      %s206 = sadd.s32 %s205, 1
      %s207 = scalar_select %p204, %s205, %s206
      %p210 = pneg %p204
      %p211 = scmp.eq.s32.totalorder %s22, 1
      %p212 = por %p210, %p211
      %p213 = scmp.ne.s32.totalorder %s205, %s208
      %p214 = scmp.eq.s32.totalorder %s22, 0
      %p215 = por %p213, %p214
      %p216 = scmp.ne.s32.totalorder %s205, %s208
      %p217 = scmp.eq.s32.totalorder %s27, 1
      %p218 = por %p216, %p217
      %p219 = scmp.ne.s32.totalorder %s208, %s209
      %p220 = scmp.eq.s32.totalorder %s27, 0
      %p221 = por %p219, %p220
      %p222 = scmp.ne.s32.totalorder %s208, %s209
      %p223 = scmp.eq.s32.totalorder %s28, 1
      %p224 = por %p222, %p223
      %p226 = scmp.ne.s32.totalorder %s209, %s225
      %p227 = scmp.eq.s32.totalorder %s28, 0
      %p228 = por %p226, %p227
      %p229 = scmp.le.s32.totalorder 1, %s22
      %p230 = scmp.lt.s32.totalorder %s22, 3
      %p231 = pnand %p229, %p230
      %p232 = pneg %p231
      // Predicated region
      $region9: #{masked_model_rank1.1} parent=5 // pred_check
        _
      $region10: #{masked_model_rank1.1} parent=5 // pred_check_branch
        %234 = sbr.rel (%p231) target = $region12
      $region11: #{masked_model_rank1.1} parent=5 // pred_region
        %s235 = ssub.s32 %s22, 1
        // Predicated region
        $region13: #{masked_model_rank1.1} parent=11 // pred_check
          %p236 = pneg %p69
        $region14: #{masked_model_rank1.1} parent=11 // pred_check_branch
          %238 = sbr.rel (%p236) target = $region16
        $region15: #{masked_model_rank1.1} parent=11 // pred_region
          %s240 = ssub.s32 16384, 16384
          %241 = vsyncadd [#allocation9], %s240
          %s242 = sshll.u32 [#allocation8], 4
          %s243 = int_to_ptr.vmem [resolvable:$true] %s242
          %248 = dma.hbm_to_vmem [thread:$0]  %s1, 16384, %s243, [#allocation9], 256, 256, 16
        $region16: #{masked_model_rank1.1} parent=11 // pred_fallthru
          _
        // Predicated region
        $region17: #{masked_model_rank1.1} parent=11 // pred_check
          %p249 = pneg %p90
        $region18: #{masked_model_rank1.1} parent=11 // pred_check_branch
          %251 = sbr.rel (%p249) target = $region20
        $region19: #{masked_model_rank1.1} parent=11 // pred_region
          %s253 = ssub.s32 64, 64
          %254 = vsyncadd [#allocation9], %s253
          %s256 = sshll.u32 [#allocation10], 4
          %s257 = int_to_ptr.vmem [resolvable:$true] %s256
          %259 = dma.hbm_to_vmem [thread:$0]  %s2, 64, %s257, [#allocation9]
        $region20: #{masked_model_rank1.1} parent=11 // pred_fallthru
          _
        // Predicated region
        $region21: #{masked_model_rank1.1} parent=11 // pred_check
          %p260 = pneg %p111
        $region22: #{masked_model_rank1.1} parent=11 // pred_check_branch
          %262 = sbr.rel (%p260) target = $region24
        $region23: #{masked_model_rank1.1} parent=11 // pred_region
          %s264 = ssub.s32 4096, 4096
          %265 = vsyncadd [#allocation12], %s264
          %s266 = sshll.u32 [#allocation11], 4
          %s267 = int_to_ptr.vmem [resolvable:$true] %s266
          %272 = dma.hbm_to_vmem [thread:$0]  %s3, 4096, %s267, [#allocation12], 64, 64, 4
        $region24: #{masked_model_rank1.1} parent=11 // pred_fallthru
          _
        // Predicated region
        $region25: #{masked_model_rank1.1} parent=11 // pred_check
          %p273 = pneg %p132
        $region26: #{masked_model_rank1.1} parent=11 // pred_check_branch
          %275 = sbr.rel (%p273) target = $region28
        $region27: #{masked_model_rank1.1} parent=11 // pred_region
          %s277 = ssub.s32 4096, 4096
          %278 = vsyncadd [#allocation12], %s277
          %s279 = sshll.u32 [#allocation13], 4
          %s280 = int_to_ptr.vmem [resolvable:$true] %s279
          %285 = dma.hbm_to_vmem [thread:$0]  %s4, 4096, %s280, [#allocation12], 64, 64, 4
        $region28: #{masked_model_rank1.1} parent=11 // pred_fallthru
          _
        // Predicated region
        $region29: #{masked_model_rank1.1} parent=11 // pred_check
          %p286 = pneg %p153
        $region30: #{masked_model_rank1.1} parent=11 // pred_check_branch
          %288 = sbr.rel (%p286) target = $region32
        $region31: #{masked_model_rank1.1} parent=11 // pred_region
          %s290 = ssub.s32 16, 16
          %291 = vsyncadd [#allocation15], %s290
          %s293 = sshll.u32 [#allocation14], 4
          %s294 = int_to_ptr.vmem [resolvable:$true] %s293
          %296 = dma.hbm_to_vmem [thread:$0]  %s5, 16, %s294, [#allocation15]
        $region32: #{masked_model_rank1.1} parent=11 // pred_fallthru
          _
        // Predicated region
        $region33: #{masked_model_rank1.1} parent=11 // pred_check
          %p297 = pneg %p174
        $region34: #{masked_model_rank1.1} parent=11 // pred_check_branch
          %299 = sbr.rel (%p297) target = $region36
        $region35: #{masked_model_rank1.1} parent=11 // pred_region
          %s301 = ssub.s32 16, 16
          %302 = vsyncadd [#allocation15], %s301
          %s304 = sshll.u32 [#allocation16], 4
          %s305 = int_to_ptr.vmem [resolvable:$true] %s304
          %307 = dma.hbm_to_vmem [thread:$0]  %s6, 16, %s305, [#allocation15]
        $region36: #{masked_model_rank1.1} parent=11 // pred_fallthru
          _
        // Predicated region
        $region37: #{masked_model_rank1.1} parent=11 // pred_check
          %p308 = pneg %p195
        $region38: #{masked_model_rank1.1} parent=11 // pred_check_branch
          %310 = sbr.rel (%p308) target = $region40
        $region39: #{masked_model_rank1.1} parent=11 // pred_region
          _
        $region40: #{masked_model_rank1.1} parent=11 // pred_fallthru
          _
      $region12: #{masked_model_rank1.1} parent=5 // pred_fallthru
        _
      %p311 = scmp.lt.s32.totalorder %s22, 2
      // Predicated region
      $region41: #{masked_model_rank1.1} parent=5 // pred_check
        %p312 = pneg %p311
      $region42: #{masked_model_rank1.1} parent=5 // pred_check_branch
        %314 = sbr.rel (%p312) target = $region44
      $region43: #{masked_model_rank1.1} parent=5 // pred_region
        // Predicated region
        $region45: #{masked_model_rank1.1} parent=43 // pred_check
          %p315 = pneg %p42
        $region46: #{masked_model_rank1.1} parent=43 // pred_check_branch
          %317 = sbr.rel (%p315) target = $region48
        $region47: #{masked_model_rank1.1} parent=43 // pred_region
          %s318 = sand.u32 %s32, 1
          %s319 = scalar_lea.sflag [#allocation7], %s318
          %s320 = sand.u32 %s32, 1
          %s321 = smul.addr %s320, 1536
          %s322 = scalar_lea.vmem [#allocation6], %s321
          %s323 = smul.u32 16, %s22
          %s324 = ssub.s32 25, %s323
          %p325 = scmp.lt.s32.totalorder %s324, 16
          %s326 = scalar_select %p325, %s324, 16
          %s327 = smul.u32 128, %s326
          %s328 = smul.u32 %s327, 12
          %s330 = ssub.s32 24576, %s328
          %331 = vsyncadd %s319, %s330
          %p332 = scmp.ne.s32.totalorder 0, %s328
          %s333 = smul.addr %s323, 12
          %s334 = smul.addr %s333, 128
          %s335 = scalar_lea.hbm %s0, %s334
          %s336 = smul.u32 96, %s326
          %s337 = sshll.u32 %s322, 4
          %s338 = int_to_ptr.vmem [resolvable:$true] %s337
          %s339 = sshll.u32 %s336, 4
          %343 = dma.hbm_to_vmem [thread:$0]  (%p332), %s335, %s339, %s338, %s319, 1536, 1536, 96
        $region48: #{masked_model_rank1.1} parent=43 // pred_fallthru
          _
      $region44: #{masked_model_rank1.1} parent=5 // pred_fallthru
        _
      %p344 = scmp.le.s32.totalorder 1, %s22
      %p345 = scmp.lt.s32.totalorder %s22, 3
      %p346 = pnand %p344, %p345
      %p347 = pneg %p346
      // Predicated region
      $region49: #{masked_model_rank1.1} parent=5 // pred_check
        _
      $region50: #{masked_model_rank1.1} parent=5 // pred_check_branch
        %349 = sbr.rel (%p346) target = $region52
      $region51: #{masked_model_rank1.1} parent=5 // pred_region
        %s350 = ssub.s32 %s22, 1
        %s351 = sand.u32 %s35, 1
        %s352 = scalar_lea.sflag [#allocation7], %s351
        %s353 = sand.u32 %s35, 1
        %s354 = smul.addr %s353, 1536
        %s355 = scalar_lea.vmem [#allocation6], %s354
        // Predicated region
        $region53: #{masked_model_rank1.1} parent=51 // pred_check
          %p356 = pneg %p48
        $region54: #{masked_model_rank1.1} parent=51 // pred_check_branch
          %358 = sbr.rel (%p356) target = $region56
        $region55: #{masked_model_rank1.1} parent=51 // pred_region
          %359 = dma.done %s352, 24576
        $region56: #{masked_model_rank1.1} parent=51 // pred_fallthru
          _
        // Predicated region
        $region57: #{masked_model_rank1.1} parent=51 // pred_check
          %p360 = pneg %p69
        $region58: #{masked_model_rank1.1} parent=51 // pred_check_branch
          %362 = sbr.rel (%p360) target = $region60
        $region59: #{masked_model_rank1.1} parent=51 // pred_region
          %363 = dma.done [#allocation9], 16384
        $region60: #{masked_model_rank1.1} parent=51 // pred_fallthru
          _
        // Predicated region
        $region61: #{masked_model_rank1.1} parent=51 // pred_check
          %p364 = pneg %p90
        $region62: #{masked_model_rank1.1} parent=51 // pred_check_branch
          %366 = sbr.rel (%p364) target = $region64
        $region63: #{masked_model_rank1.1} parent=51 // pred_region
          %367 = dma.done [#allocation9], 64
        $region64: #{masked_model_rank1.1} parent=51 // pred_fallthru
          _
        // Predicated region
        $region65: #{masked_model_rank1.1} parent=51 // pred_check
          %p368 = pneg %p111
        $region66: #{masked_model_rank1.1} parent=51 // pred_check_branch
          %370 = sbr.rel (%p368) target = $region68
        $region67: #{masked_model_rank1.1} parent=51 // pred_region
          %371 = dma.done [#allocation12], 4096
        $region68: #{masked_model_rank1.1} parent=51 // pred_fallthru
          _
        // Predicated region
        $region69: #{masked_model_rank1.1} parent=51 // pred_check
          %p372 = pneg %p132
        $region70: #{masked_model_rank1.1} parent=51 // pred_check_branch
          %374 = sbr.rel (%p372) target = $region72
        $region71: #{masked_model_rank1.1} parent=51 // pred_region
          %375 = dma.done [#allocation12], 4096
        $region72: #{masked_model_rank1.1} parent=51 // pred_fallthru
          _
        // Predicated region
        $region73: #{masked_model_rank1.1} parent=51 // pred_check
          %p376 = pneg %p153
        $region74: #{masked_model_rank1.1} parent=51 // pred_check_branch
          %378 = sbr.rel (%p376) target = $region76
        $region75: #{masked_model_rank1.1} parent=51 // pred_region
          %379 = dma.done [#allocation15], 16
        $region76: #{masked_model_rank1.1} parent=51 // pred_fallthru
          _
        // Predicated region
        $region77: #{masked_model_rank1.1} parent=51 // pred_check
          %p380 = pneg %p174
        $region78: #{masked_model_rank1.1} parent=51 // pred_check_branch
          %382 = sbr.rel (%p380) target = $region80
        $region79: #{masked_model_rank1.1} parent=51 // pred_region
          %383 = dma.done [#allocation15], 16
        $region80: #{masked_model_rank1.1} parent=51 // pred_fallthru
          _
        %s384 = sand.u32 %s35, 1
        %s385 = scalar_lea.sflag [#allocation7], %s384
        %s386 = sand.u32 %s35, 1
        %s387 = smul.addr %s386, 1536
        %s388 = scalar_lea.vmem [#allocation6], %s387
        %p389 = pneg %p48
        %p390 = pneg %p45
        %p391 = pneg %p69
        %p392 = pneg %p66
        %p393 = pneg %p90
        %p394 = pneg %p87
        %p395 = pneg %p111
        %p396 = pneg %p108
        %p397 = pneg %p132
        %p398 = pneg %p129
        %p399 = pneg %p153
        %p400 = pneg %p150
        %p401 = pneg %p174
        %p402 = pneg %p171
        %p403 = pneg %p195
        %p404 = pneg %p192
        %p405 = pneg %p221
        %p406 = pneg %p218
        %p407 = scmp.lt.s32.totalorder %s27, 1
        %s408 = scalar_select %p407, %s27, 1
        %s409 = scalar_lea.vmem %s8, %s408
        %s410 = smul.u32 16, %s27
        %s411 = ssub.s32 25, %s410
        %p412 = scmp.lt.s32.totalorder %s411, 16
        %s413 = scalar_select %p412, %s411, 16
        %s414 = smul.u32 128, %s413
        %s415 = smul.u32 %s414, 12
        %p416 = scmp.lt.s32.totalorder %s27, 1
        %s417 = scalar_select %p416, %s27, 1
        %s418 = scalar_lea.vmem %s8, %s417
        %v420 = vld [vmem:[%s355] sm:$0xff]
        %v421 = vld [vmem:[%s355 + $0x8] sm:$0xff]
        %v422 = vld [vmem:[%s355 + $0x10] sm:$0xff]
        %v423 = vld [vmem:[%s355 + $0x18] sm:$0xff]
        %v424 = vld [vmem:[%s355 + $0x60] sm:$0xff]
        %v425 = vld [vmem:[%s355 + $0x68] sm:$0xff]
        %v426 = vld [vmem:[%s355 + $0x70] sm:$0xff]
        %v427 = vld [vmem:[%s355 + $0x78] sm:$0xff]
        %v428 = vld [vmem:[%s355 + $0xc0] sm:$0xff]
        %v429 = vld [vmem:[%s355 + $0xc8] sm:$0xff]
        %v430 = vld [vmem:[%s355 + $0xd0] sm:$0xff]
        %v431 = vld [vmem:[%s355 + $0xd8] sm:$0xff]
        %v432 = vld [vmem:[%s355 + $0x120] sm:$0xff]
        %v433 = vld [vmem:[%s355 + $0x128] sm:$0xff]
        %v434 = vld [vmem:[%s355 + $0x130] sm:$0xff]
        %v435 = vld [vmem:[%s355 + $0x138] sm:$0xff]
        %v436 = vld [vmem:[%s355 + $0x180] sm:$0xff]
        %v437 = vld [vmem:[%s355 + $0x188] sm:$0xff]
        %v438 = vld [vmem:[%s355 + $0x190] sm:$0xff]
        %v439 = vld [vmem:[%s355 + $0x198] sm:$0xff]
        %v440 = vld [vmem:[%s355 + $0x1e0] sm:$0xff]
        %v441 = vld [vmem:[%s355 + $0x1e8] sm:$0xff]
        %v442 = vld [vmem:[%s355 + $0x1f0] sm:$0xff]
        %v443 = vld [vmem:[%s355 + $0x1f8] sm:$0xff]
        %v444 = vld [vmem:[%s355 + $0x240] sm:$0xff]
        %v445 = vld [vmem:[%s355 + $0x248] sm:$0xff]
        %v446 = vld [vmem:[%s355 + $0x250] sm:$0xff]
        %v447 = vld [vmem:[%s355 + $0x258] sm:$0xff]
        %v448 = vld [vmem:[%s355 + $0x2a0] sm:$0xff]
        %v449 = vld [vmem:[%s355 + $0x2a8] sm:$0xff]
        %v450 = vld [vmem:[%s355 + $0x2b0] sm:$0xff]
        %v451 = vld [vmem:[%s355 + $0x2b8] sm:$0xff]
        %v452 = vld [vmem:[%s355 + $0x300] sm:$0xff]
        %v453 = vld [vmem:[%s355 + $0x308] sm:$0xff]
        %v454 = vld [vmem:[%s355 + $0x310] sm:$0xff]
        %v455 = vld [vmem:[%s355 + $0x318] sm:$0xff]
        %v456 = vld [vmem:[%s355 + $0x360] sm:$0xff]
        %v457 = vld [vmem:[%s355 + $0x368] sm:$0xff]
        %v458 = vld [vmem:[%s355 + $0x370] sm:$0xff]
        %v459 = vld [vmem:[%s355 + $0x378] sm:$0xff]
        %v460 = vld [vmem:[%s355 + $0x3c0] sm:$0xff]
        %v461 = vld [vmem:[%s355 + $0x3c8] sm:$0xff]
        %v462 = vld [vmem:[%s355 + $0x3d0] sm:$0xff]
        %v463 = vld [vmem:[%s355 + $0x3d8] sm:$0xff]
        %v464 = vld [vmem:[%s355 + $0x420] sm:$0xff]
        %v465 = vld [vmem:[%s355 + $0x428] sm:$0xff]
        %v466 = vld [vmem:[%s355 + $0x430] sm:$0xff]
        %v467 = vld [vmem:[%s355 + $0x438] sm:$0xff]
        %v468 = vld [vmem:[%s355 + $0x480] sm:$0xff]
        %v469 = vld [vmem:[%s355 + $0x488] sm:$0xff]
        %v470 = vld [vmem:[%s355 + $0x490] sm:$0xff]
        %v471 = vld [vmem:[%s355 + $0x498] sm:$0xff]
        %v472 = vld [vmem:[%s355 + $0x4e0] sm:$0xff]
        %v473 = vld [vmem:[%s355 + $0x4e8] sm:$0xff]
        %v474 = vld [vmem:[%s355 + $0x4f0] sm:$0xff]
        %v475 = vld [vmem:[%s355 + $0x4f8] sm:$0xff]
        %v476 = vld [vmem:[%s355 + $0x540] sm:$0xff]
        %v477 = vld [vmem:[%s355 + $0x548] sm:$0xff]
        %v478 = vld [vmem:[%s355 + $0x550] sm:$0xff]
        %v479 = vld [vmem:[%s355 + $0x558] sm:$0xff]
        %v480 = vld [vmem:[%s355 + $0x5a0] sm:$0xff]
        %v481 = vld [vmem:[%s355 + $0x5a8] sm:$0xff]
        %v482 = vld [vmem:[%s355 + $0x5b0] sm:$0xff]
        %v483 = vld [vmem:[%s355 + $0x5b8] sm:$0xff]
        %v484 = vpack.c.bf16 %v424, %v420
        %v485 = vpack.c.bf16 %v425, %v421
        %v486 = vpack.c.bf16 %v426, %v422
        %v487 = vpack.c.bf16 %v427, %v423
        %v488 = vpack.c.bf16 %v432, %v428
        %v489 = vpack.c.bf16 %v433, %v429
        %v490 = vpack.c.bf16 %v434, %v430
        %v491 = vpack.c.bf16 %v435, %v431
        %v492 = vpack.c.bf16 %v440, %v436
        %v493 = vpack.c.bf16 %v441, %v437
        %v494 = vpack.c.bf16 %v442, %v438
        %v495 = vpack.c.bf16 %v443, %v439
        %v496 = vpack.c.bf16 %v448, %v444
        %v497 = vpack.c.bf16 %v449, %v445
        %v498 = vpack.c.bf16 %v450, %v446
        %v499 = vpack.c.bf16 %v451, %v447
        %v500 = vpack.c.bf16 %v456, %v452
        %v501 = vpack.c.bf16 %v457, %v453
        %v502 = vpack.c.bf16 %v458, %v454
        %v503 = vpack.c.bf16 %v459, %v455
        %v504 = vpack.c.bf16 %v464, %v460
        %v505 = vpack.c.bf16 %v465, %v461
        %v506 = vpack.c.bf16 %v466, %v462
        %v507 = vpack.c.bf16 %v467, %v463
        %v508 = vpack.c.bf16 %v472, %v468
        %v509 = vpack.c.bf16 %v473, %v469
        %v510 = vpack.c.bf16 %v474, %v470
        %v511 = vpack.c.bf16 %v475, %v471
        %v512 = vpack.c.bf16 %v480, %v476
        %v513 = vpack.c.bf16 %v481, %v477
        %v514 = vpack.c.bf16 %v482, %v478
        %v515 = vpack.c.bf16 %v483, %v479
        %516 = vst [vmem:[#allocation2] sm:$0xff] %v484
        %517 = vst [vmem:[#allocation2 + $0x8] sm:$0xff] %v485
        %518 = vst [vmem:[#allocation2 + $0x10] sm:$0xff] %v486
        %vm519 = vcmask 949248
        %520 = vst.msk [vmem:[#allocation2 + $0x18] sm:$0xff] %vm519, %v487
        %521 = vst [vmem:[#allocation2 + $0x20] sm:$0xff] %v488
        %522 = vst [vmem:[#allocation2 + $0x28] sm:$0xff] %v489
        %523 = vst [vmem:[#allocation2 + $0x30] sm:$0xff] %v490
        %524 = vst.msk [vmem:[#allocation2 + $0x38] sm:$0xff] %vm519, %v491
        %525 = vst [vmem:[#allocation2 + $0x40] sm:$0xff] %v492
        %526 = vst [vmem:[#allocation2 + $0x48] sm:$0xff] %v493
        %527 = vst [vmem:[#allocation2 + $0x50] sm:$0xff] %v494
        %528 = vst.msk [vmem:[#allocation2 + $0x58] sm:$0xff] %vm519, %v495
        %529 = vst [vmem:[#allocation2 + $0x60] sm:$0xff] %v496
        %530 = vst [vmem:[#allocation2 + $0x68] sm:$0xff] %v497
        %531 = vst [vmem:[#allocation2 + $0x70] sm:$0xff] %v498
        %532 = vst.msk [vmem:[#allocation2 + $0x78] sm:$0xff] %vm519, %v499
        %533 = vst [vmem:[#allocation2 + $0x80] sm:$0xff] %v500
        %534 = vst [vmem:[#allocation2 + $0x88] sm:$0xff] %v501
        %535 = vst [vmem:[#allocation2 + $0x90] sm:$0xff] %v502
        %536 = vst.msk [vmem:[#allocation2 + $0x98] sm:$0xff] %vm519, %v503
        %537 = vst [vmem:[#allocation2 + $0xa0] sm:$0xff] %v504
        %538 = vst [vmem:[#allocation2 + $0xa8] sm:$0xff] %v505
        %539 = vst [vmem:[#allocation2 + $0xb0] sm:$0xff] %v506
        %540 = vst.msk [vmem:[#allocation2 + $0xb8] sm:$0xff] %vm519, %v507
        %541 = vst [vmem:[#allocation2 + $0xc0] sm:$0xff] %v508
        %542 = vst [vmem:[#allocation2 + $0xc8] sm:$0xff] %v509
        %543 = vst [vmem:[#allocation2 + $0xd0] sm:$0xff] %v510
        %544 = vst.msk [vmem:[#allocation2 + $0xd8] sm:$0xff] %vm519, %v511
        %545 = vst [vmem:[#allocation2 + $0xe0] sm:$0xff] %v512
        %546 = vst [vmem:[#allocation2 + $0xe8] sm:$0xff] %v513
        %547 = vst [vmem:[#allocation2 + $0xf0] sm:$0xff] %v514
        %548 = vst.msk [vmem:[#allocation2 + $0xf8] sm:$0xff] %vm519, %v515
        %vm549 = vcmask 1048480
        %550 = vst.msk [vmem:[#allocation2 + $0x18] sm:$0xff] %vm549, 0
        %551 = vst.msk [vmem:[#allocation2 + $0x38] sm:$0xff] %vm549, 0
        %552 = vst.msk [vmem:[#allocation2 + $0x58] sm:$0xff] %vm549, 0
        %553 = vst.msk [vmem:[#allocation2 + $0x78] sm:$0xff] %vm549, 0
        %554 = vst.msk [vmem:[#allocation2 + $0x98] sm:$0xff] %vm549, 0
        %555 = vst.msk [vmem:[#allocation2 + $0xb8] sm:$0xff] %vm549, 0
        %556 = vst.msk [vmem:[#allocation2 + $0xd8] sm:$0xff] %vm549, 0
        %557 = vst.msk [vmem:[#allocation2 + $0xf8] sm:$0xff] %vm549, 0
        %v558 = vld [vmem:[%s355 + $0x18] sm:$0xff]
        %v559 = vld [vmem:[%s355 + $0x20] sm:$0xff]
        %v560 = vld [vmem:[%s355 + $0x28] sm:$0xff]
        %v561 = vld [vmem:[%s355 + $0x30] sm:$0xff]
        %v562 = vld [vmem:[%s355 + $0x38] sm:$0xff]
        %v563 = vld [vmem:[%s355 + $0x78] sm:$0xff]
        %v564 = vld [vmem:[%s355 + $0x80] sm:$0xff]
        %v565 = vld [vmem:[%s355 + $0x88] sm:$0xff]
        %v566 = vld [vmem:[%s355 + $0x90] sm:$0xff]
        %v567 = vld [vmem:[%s355 + $0x98] sm:$0xff]
        %v568 = vld [vmem:[%s355 + $0xd8] sm:$0xff]
        %v569 = vld [vmem:[%s355 + $0xe0] sm:$0xff]
        %v570 = vld [vmem:[%s355 + $0xe8] sm:$0xff]
        %v571 = vld [vmem:[%s355 + $0xf0] sm:$0xff]
        %v572 = vld [vmem:[%s355 + $0xf8] sm:$0xff]
        %v573 = vld [vmem:[%s355 + $0x138] sm:$0xff]
        %v574 = vld [vmem:[%s355 + $0x140] sm:$0xff]
        %v575 = vld [vmem:[%s355 + $0x148] sm:$0xff]
        %v576 = vld [vmem:[%s355 + $0x150] sm:$0xff]
        %v577 = vld [vmem:[%s355 + $0x158] sm:$0xff]
        %v578 = vld [vmem:[%s355 + $0x198] sm:$0xff]
        %v579 = vld [vmem:[%s355 + $0x1a0] sm:$0xff]
        %v580 = vld [vmem:[%s355 + $0x1a8] sm:$0xff]
        %v581 = vld [vmem:[%s355 + $0x1b0] sm:$0xff]
        %v582 = vld [vmem:[%s355 + $0x1b8] sm:$0xff]
        %v583 = vld [vmem:[%s355 + $0x1f8] sm:$0xff]
        %v584 = vld [vmem:[%s355 + $0x200] sm:$0xff]
        %v585 = vld [vmem:[%s355 + $0x208] sm:$0xff]
        %v586 = vld [vmem:[%s355 + $0x210] sm:$0xff]
        %v587 = vld [vmem:[%s355 + $0x218] sm:$0xff]
        %v588 = vld [vmem:[%s355 + $0x258] sm:$0xff]
        %v589 = vld [vmem:[%s355 + $0x260] sm:$0xff]
        %v590 = vld [vmem:[%s355 + $0x268] sm:$0xff]
        %v591 = vld [vmem:[%s355 + $0x270] sm:$0xff]
        %v592 = vld [vmem:[%s355 + $0x278] sm:$0xff]
        %v593 = vld [vmem:[%s355 + $0x2b8] sm:$0xff]
        %v594 = vld [vmem:[%s355 + $0x2c0] sm:$0xff]
        %v595 = vld [vmem:[%s355 + $0x2c8] sm:$0xff]
        %v596 = vld [vmem:[%s355 + $0x2d0] sm:$0xff]
        %v597 = vld [vmem:[%s355 + $0x2d8] sm:$0xff]
        %v598 = vld [vmem:[%s355 + $0x318] sm:$0xff]
        %v599 = vld [vmem:[%s355 + $0x320] sm:$0xff]
        %v600 = vld [vmem:[%s355 + $0x328] sm:$0xff]
        %v601 = vld [vmem:[%s355 + $0x330] sm:$0xff]
        %v602 = vld [vmem:[%s355 + $0x338] sm:$0xff]
        %v603 = vld [vmem:[%s355 + $0x378] sm:$0xff]
        %v604 = vld [vmem:[%s355 + $0x380] sm:$0xff]
        %v605 = vld [vmem:[%s355 + $0x388] sm:$0xff]
        %v606 = vld [vmem:[%s355 + $0x390] sm:$0xff]
        %v607 = vld [vmem:[%s355 + $0x398] sm:$0xff]
        %v608 = vld [vmem:[%s355 + $0x3d8] sm:$0xff]
        %v609 = vld [vmem:[%s355 + $0x3e0] sm:$0xff]
        %v610 = vld [vmem:[%s355 + $0x3e8] sm:$0xff]
        %v611 = vld [vmem:[%s355 + $0x3f0] sm:$0xff]
        %v612 = vld [vmem:[%s355 + $0x3f8] sm:$0xff]
        %v613 = vld [vmem:[%s355 + $0x438] sm:$0xff]
        %v614 = vld [vmem:[%s355 + $0x440] sm:$0xff]
        %v615 = vld [vmem:[%s355 + $0x448] sm:$0xff]
        %v616 = vld [vmem:[%s355 + $0x450] sm:$0xff]
        %v617 = vld [vmem:[%s355 + $0x458] sm:$0xff]
        %v618 = vld [vmem:[%s355 + $0x498] sm:$0xff]
        %v619 = vld [vmem:[%s355 + $0x4a0] sm:$0xff]
        %v620 = vld [vmem:[%s355 + $0x4a8] sm:$0xff]
        %v621 = vld [vmem:[%s355 + $0x4b0] sm:$0xff]
        %v622 = vld [vmem:[%s355 + $0x4b8] sm:$0xff]
        %v623 = vld [vmem:[%s355 + $0x4f8] sm:$0xff]
        %v624 = vld [vmem:[%s355 + $0x500] sm:$0xff]
        %v625 = vld [vmem:[%s355 + $0x508] sm:$0xff]
        %v626 = vld [vmem:[%s355 + $0x510] sm:$0xff]
        %v627 = vld [vmem:[%s355 + $0x518] sm:$0xff]
        %v628 = vld [vmem:[%s355 + $0x558] sm:$0xff]
        %v629 = vld [vmem:[%s355 + $0x560] sm:$0xff]
        %v630 = vld [vmem:[%s355 + $0x568] sm:$0xff]
        %v631 = vld [vmem:[%s355 + $0x570] sm:$0xff]
        %v632 = vld [vmem:[%s355 + $0x578] sm:$0xff]
        %v633 = vld [vmem:[%s355 + $0x5b8] sm:$0xff]
        %v634 = vld [vmem:[%s355 + $0x5c0] sm:$0xff]
        %v635 = vld [vmem:[%s355 + $0x5c8] sm:$0xff]
        %v636 = vld [vmem:[%s355 + $0x5d0] sm:$0xff]
        %v637 = vld [vmem:[%s355 + $0x5d8] sm:$0xff]
        %v638 = vpack.c.bf16 %v563, %v558
        %v639 = vpack.c.bf16 %v564, %v559
        %v640 = vpack.c.bf16 %v565, %v560
        %v641 = vpack.c.bf16 %v566, %v561
        %v642 = vpack.c.bf16 %v567, %v562
        %v643 = vpack.c.bf16 %v573, %v568
        %v644 = vpack.c.bf16 %v574, %v569
        %v645 = vpack.c.bf16 %v575, %v570
        %v646 = vpack.c.bf16 %v576, %v571
        %v647 = vpack.c.bf16 %v577, %v572
        %v648 = vpack.c.bf16 %v583, %v578
        %v649 = vpack.c.bf16 %v584, %v579
        %v650 = vpack.c.bf16 %v585, %v580
        %v651 = vpack.c.bf16 %v586, %v581
        %v652 = vpack.c.bf16 %v587, %v582
        %v653 = vpack.c.bf16 %v593, %v588
        %v654 = vpack.c.bf16 %v594, %v589
        %v655 = vpack.c.bf16 %v595, %v590
        %v656 = vpack.c.bf16 %v596, %v591
        %v657 = vpack.c.bf16 %v597, %v592
        %v658 = vpack.c.bf16 %v603, %v598
        %v659 = vpack.c.bf16 %v604, %v599
        %v660 = vpack.c.bf16 %v605, %v600
        %v661 = vpack.c.bf16 %v606, %v601
        %v662 = vpack.c.bf16 %v607, %v602
        %v663 = vpack.c.bf16 %v613, %v608
        %v664 = vpack.c.bf16 %v614, %v609
        %v665 = vpack.c.bf16 %v615, %v610
        %v666 = vpack.c.bf16 %v616, %v611
        %v667 = vpack.c.bf16 %v617, %v612
        %v668 = vpack.c.bf16 %v623, %v618
        %v669 = vpack.c.bf16 %v624, %v619
        %v670 = vpack.c.bf16 %v625, %v620
        %v671 = vpack.c.bf16 %v626, %v621
        %v672 = vpack.c.bf16 %v627, %v622
        %v673 = vpack.c.bf16 %v633, %v628
        %v674 = vpack.c.bf16 %v634, %v629
        %v675 = vpack.c.bf16 %v635, %v630
        %v676 = vpack.c.bf16 %v636, %v631
        %v677 = vpack.c.bf16 %v637, %v632
        %718 = vrot.lane.b32.xlu0 %v638, 12
        %v719 = vpop.permute.xlu0 %718
        %720 = vrot.lane.b32.xlu0 %v639, 12
        %v721 = vpop.permute.xlu0 %720
        %722 = vrot.lane.b32.xlu0 %v640, 12
        %v723 = vpop.permute.xlu0 %722
        %724 = vrot.lane.b32.xlu0 %v641, 12
        %v725 = vpop.permute.xlu0 %724
        %726 = vrot.lane.b32.xlu0 %v642, 12
        %v727 = vpop.permute.xlu0 %726
        %728 = vrot.lane.b32.xlu0 %v643, 12
        %v729 = vpop.permute.xlu0 %728
        %730 = vrot.lane.b32.xlu0 %v644, 12
        %v731 = vpop.permute.xlu0 %730
        %732 = vrot.lane.b32.xlu0 %v645, 12
        %v733 = vpop.permute.xlu0 %732
        %734 = vrot.lane.b32.xlu0 %v646, 12
        %v735 = vpop.permute.xlu0 %734
        %736 = vrot.lane.b32.xlu0 %v647, 12
        %v737 = vpop.permute.xlu0 %736
        %738 = vrot.lane.b32.xlu0 %v648, 12
        %v739 = vpop.permute.xlu0 %738
        %740 = vrot.lane.b32.xlu0 %v649, 12
        %v741 = vpop.permute.xlu0 %740
        %742 = vrot.lane.b32.xlu0 %v650, 12
        %v743 = vpop.permute.xlu0 %742
        %744 = vrot.lane.b32.xlu0 %v651, 12
        %v745 = vpop.permute.xlu0 %744
        %746 = vrot.lane.b32.xlu0 %v652, 12
        %v747 = vpop.permute.xlu0 %746
        %748 = vrot.lane.b32.xlu0 %v653, 12
        %v749 = vpop.permute.xlu0 %748
        %750 = vrot.lane.b32.xlu0 %v654, 12
        %v751 = vpop.permute.xlu0 %750
        %752 = vrot.lane.b32.xlu0 %v655, 12
        %v753 = vpop.permute.xlu0 %752
        %754 = vrot.lane.b32.xlu0 %v656, 12
        %v755 = vpop.permute.xlu0 %754
        %756 = vrot.lane.b32.xlu0 %v657, 12
        %v757 = vpop.permute.xlu0 %756
        %758 = vrot.lane.b32.xlu0 %v658, 12
        %v759 = vpop.permute.xlu0 %758
        %760 = vrot.lane.b32.xlu0 %v659, 12
        %v761 = vpop.permute.xlu0 %760
        %762 = vrot.lane.b32.xlu0 %v660, 12
        %v763 = vpop.permute.xlu0 %762
        %764 = vrot.lane.b32.xlu0 %v661, 12
        %v765 = vpop.permute.xlu0 %764
        %766 = vrot.lane.b32.xlu0 %v662, 12
        %v767 = vpop.permute.xlu0 %766
        %768 = vrot.lane.b32.xlu0 %v663, 12
        %v769 = vpop.permute.xlu0 %768
        %770 = vrot.lane.b32.xlu0 %v664, 12
        %v771 = vpop.permute.xlu0 %770
        %772 = vrot.lane.b32.xlu0 %v665, 12
        %v773 = vpop.permute.xlu0 %772
        %774 = vrot.lane.b32.xlu0 %v666, 12
        %v775 = vpop.permute.xlu0 %774
        %776 = vrot.lane.b32.xlu0 %v667, 12
        %v777 = vpop.permute.xlu0 %776
        %778 = vrot.lane.b32.xlu0 %v668, 12
        %v779 = vpop.permute.xlu0 %778
        %780 = vrot.lane.b32.xlu0 %v669, 12
        %v781 = vpop.permute.xlu0 %780
        %782 = vrot.lane.b32.xlu0 %v670, 12
        %v783 = vpop.permute.xlu0 %782
        %784 = vrot.lane.b32.xlu0 %v671, 12
        %v785 = vpop.permute.xlu0 %784
        %786 = vrot.lane.b32.xlu0 %v672, 12
        %v787 = vpop.permute.xlu0 %786
        %788 = vrot.lane.b32.xlu0 %v673, 12
        %v789 = vpop.permute.xlu0 %788
        %790 = vrot.lane.b32.xlu0 %v674, 12
        %v791 = vpop.permute.xlu0 %790
        %792 = vrot.lane.b32.xlu0 %v675, 12
        %v793 = vpop.permute.xlu0 %792
        %794 = vrot.lane.b32.xlu0 %v676, 12
        %v795 = vpop.permute.xlu0 %794
        %796 = vrot.lane.b32.xlu0 %v677, 12
        %v797 = vpop.permute.xlu0 %796
        %vm798 = vcmask 97280
        %v799 = vsel %vm798, %v719, %v721
        %v800 = vsel %vm798, %v721, %v723
        %v801 = vsel %vm798, %v723, %v725
        %v802 = vsel %vm798, %v725, %v727
        %v803 = vsel %vm798, %v729, %v731
        %v804 = vsel %vm798, %v731, %v733
        %v805 = vsel %vm798, %v733, %v735
        %v806 = vsel %vm798, %v735, %v737
        %v807 = vsel %vm798, %v739, %v741
        %v808 = vsel %vm798, %v741, %v743
        %v809 = vsel %vm798, %v743, %v745
        %v810 = vsel %vm798, %v745, %v747
        %v811 = vsel %vm798, %v749, %v751
        %v812 = vsel %vm798, %v751, %v753
        %v813 = vsel %vm798, %v753, %v755
        %v814 = vsel %vm798, %v755, %v757
        %v815 = vsel %vm798, %v759, %v761
        %v816 = vsel %vm798, %v761, %v763
        %v817 = vsel %vm798, %v763, %v765
        %v818 = vsel %vm798, %v765, %v767
        %v819 = vsel %vm798, %v769, %v771
        %v820 = vsel %vm798, %v771, %v773
        %v821 = vsel %vm798, %v773, %v775
        %v822 = vsel %vm798, %v775, %v777
        %v823 = vsel %vm798, %v779, %v781
        %v824 = vsel %vm798, %v781, %v783
        %v825 = vsel %vm798, %v783, %v785
        %v826 = vsel %vm798, %v785, %v787
        %v827 = vsel %vm798, %v789, %v791
        %v828 = vsel %vm798, %v791, %v793
        %v829 = vsel %vm798, %v793, %v795
        %v830 = vsel %vm798, %v795, %v797
        %863 = vst [vmem:[#allocation3] sm:$0xff] %v799
        %864 = vst [vmem:[#allocation3 + $0x8] sm:$0xff] %v800
        %865 = vst [vmem:[#allocation3 + $0x10] sm:$0xff] %v801
        %866 = vst.msk [vmem:[#allocation3 + $0x18] sm:$0xff] %vm519, %v802
        %867 = vst [vmem:[#allocation3 + $0x20] sm:$0xff] %v803
        %868 = vst [vmem:[#allocation3 + $0x28] sm:$0xff] %v804
        %869 = vst [vmem:[#allocation3 + $0x30] sm:$0xff] %v805
        %870 = vst.msk [vmem:[#allocation3 + $0x38] sm:$0xff] %vm519, %v806
        %871 = vst [vmem:[#allocation3 + $0x40] sm:$0xff] %v807
        %872 = vst [vmem:[#allocation3 + $0x48] sm:$0xff] %v808
        %873 = vst [vmem:[#allocation3 + $0x50] sm:$0xff] %v809
        %874 = vst.msk [vmem:[#allocation3 + $0x58] sm:$0xff] %vm519, %v810
        %875 = vst [vmem:[#allocation3 + $0x60] sm:$0xff] %v811
        %876 = vst [vmem:[#allocation3 + $0x68] sm:$0xff] %v812
        %877 = vst [vmem:[#allocation3 + $0x70] sm:$0xff] %v813
        %878 = vst.msk [vmem:[#allocation3 + $0x78] sm:$0xff] %vm519, %v814
        %879 = vst [vmem:[#allocation3 + $0x80] sm:$0xff] %v815
        %880 = vst [vmem:[#allocation3 + $0x88] sm:$0xff] %v816
        %881 = vst [vmem:[#allocation3 + $0x90] sm:$0xff] %v817
        %882 = vst.msk [vmem:[#allocation3 + $0x98] sm:$0xff] %vm519, %v818
        %883 = vst [vmem:[#allocation3 + $0xa0] sm:$0xff] %v819
        %884 = vst [vmem:[#allocation3 + $0xa8] sm:$0xff] %v820
        %885 = vst [vmem:[#allocation3 + $0xb0] sm:$0xff] %v821
        %886 = vst.msk [vmem:[#allocation3 + $0xb8] sm:$0xff] %vm519, %v822
        %887 = vst [vmem:[#allocation3 + $0xc0] sm:$0xff] %v823
        %888 = vst [vmem:[#allocation3 + $0xc8] sm:$0xff] %v824
        %889 = vst [vmem:[#allocation3 + $0xd0] sm:$0xff] %v825
        %890 = vst.msk [vmem:[#allocation3 + $0xd8] sm:$0xff] %vm519, %v826
        %891 = vst [vmem:[#allocation3 + $0xe0] sm:$0xff] %v827
        %892 = vst [vmem:[#allocation3 + $0xe8] sm:$0xff] %v828
        %893 = vst [vmem:[#allocation3 + $0xf0] sm:$0xff] %v829
        %894 = vst.msk [vmem:[#allocation3 + $0xf8] sm:$0xff] %vm519, %v830
        %895 = vst.msk [vmem:[#allocation3 + $0x18] sm:$0xff] %vm549, 0
        %896 = vst.msk [vmem:[#allocation3 + $0x38] sm:$0xff] %vm549, 0
        %897 = vst.msk [vmem:[#allocation3 + $0x58] sm:$0xff] %vm549, 0
        %898 = vst.msk [vmem:[#allocation3 + $0x78] sm:$0xff] %vm549, 0
        %899 = vst.msk [vmem:[#allocation3 + $0x98] sm:$0xff] %vm549, 0
        %900 = vst.msk [vmem:[#allocation3 + $0xb8] sm:$0xff] %vm549, 0
        %901 = vst.msk [vmem:[#allocation3 + $0xd8] sm:$0xff] %vm549, 0
        %902 = vst.msk [vmem:[#allocation3 + $0xf8] sm:$0xff] %vm549, 0
        %v903 = vld [vmem:[%s355 + $0x38] sm:$0xff]
        %v904 = vld [vmem:[%s355 + $0x40] sm:$0xff]
        %v905 = vld [vmem:[%s355 + $0x48] sm:$0xff]
        %v906 = vld [vmem:[%s355 + $0x50] sm:$0xff]
        %v907 = vld [vmem:[%s355 + $0x58] sm:$0xff]
        %v908 = vld [vmem:[%s355 + $0x98] sm:$0xff]
        %v909 = vld [vmem:[%s355 + $0xa0] sm:$0xff]
        %v910 = vld [vmem:[%s355 + $0xa8] sm:$0xff]
        %v911 = vld [vmem:[%s355 + $0xb0] sm:$0xff]
        %v912 = vld [vmem:[%s355 + $0xb8] sm:$0xff]
        %v913 = vld [vmem:[%s355 + $0xf8] sm:$0xff]
        %v914 = vld [vmem:[%s355 + $0x100] sm:$0xff]
        %v915 = vld [vmem:[%s355 + $0x108] sm:$0xff]
        %v916 = vld [vmem:[%s355 + $0x110] sm:$0xff]
        %v917 = vld [vmem:[%s355 + $0x118] sm:$0xff]
        %v918 = vld [vmem:[%s355 + $0x158] sm:$0xff]
        %v919 = vld [vmem:[%s355 + $0x160] sm:$0xff]
        %v920 = vld [vmem:[%s355 + $0x168] sm:$0xff]
        %v921 = vld [vmem:[%s355 + $0x170] sm:$0xff]
        %v922 = vld [vmem:[%s355 + $0x178] sm:$0xff]
        %v923 = vld [vmem:[%s355 + $0x1b8] sm:$0xff]
        %v924 = vld [vmem:[%s355 + $0x1c0] sm:$0xff]
        %v925 = vld [vmem:[%s355 + $0x1c8] sm:$0xff]
        %v926 = vld [vmem:[%s355 + $0x1d0] sm:$0xff]
        %v927 = vld [vmem:[%s355 + $0x1d8] sm:$0xff]
        %v928 = vld [vmem:[%s355 + $0x218] sm:$0xff]
        %v929 = vld [vmem:[%s355 + $0x220] sm:$0xff]
        %v930 = vld [vmem:[%s355 + $0x228] sm:$0xff]
        %v931 = vld [vmem:[%s355 + $0x230] sm:$0xff]
        %v932 = vld [vmem:[%s355 + $0x238] sm:$0xff]
        %v933 = vld [vmem:[%s355 + $0x278] sm:$0xff]
        %v934 = vld [vmem:[%s355 + $0x280] sm:$0xff]
        %v935 = vld [vmem:[%s355 + $0x288] sm:$0xff]
        %v936 = vld [vmem:[%s355 + $0x290] sm:$0xff]
        %v937 = vld [vmem:[%s355 + $0x298] sm:$0xff]
        %v938 = vld [vmem:[%s355 + $0x2d8] sm:$0xff]
        %v939 = vld [vmem:[%s355 + $0x2e0] sm:$0xff]
        %v940 = vld [vmem:[%s355 + $0x2e8] sm:$0xff]
        %v941 = vld [vmem:[%s355 + $0x2f0] sm:$0xff]
        %v942 = vld [vmem:[%s355 + $0x2f8] sm:$0xff]
        %v943 = vld [vmem:[%s355 + $0x338] sm:$0xff]
        %v944 = vld [vmem:[%s355 + $0x340] sm:$0xff]
        %v945 = vld [vmem:[%s355 + $0x348] sm:$0xff]
        %v946 = vld [vmem:[%s355 + $0x350] sm:$0xff]
        %v947 = vld [vmem:[%s355 + $0x358] sm:$0xff]
        %v948 = vld [vmem:[%s355 + $0x398] sm:$0xff]
        %v949 = vld [vmem:[%s355 + $0x3a0] sm:$0xff]
        %v950 = vld [vmem:[%s355 + $0x3a8] sm:$0xff]
        %v951 = vld [vmem:[%s355 + $0x3b0] sm:$0xff]
        %v952 = vld [vmem:[%s355 + $0x3b8] sm:$0xff]
        %v953 = vld [vmem:[%s355 + $0x3f8] sm:$0xff]
        %v954 = vld [vmem:[%s355 + $0x400] sm:$0xff]
        %v955 = vld [vmem:[%s355 + $0x408] sm:$0xff]
        %v956 = vld [vmem:[%s355 + $0x410] sm:$0xff]
        %v957 = vld [vmem:[%s355 + $0x418] sm:$0xff]
        %v958 = vld [vmem:[%s355 + $0x458] sm:$0xff]
        %v959 = vld [vmem:[%s355 + $0x460] sm:$0xff]
        %v960 = vld [vmem:[%s355 + $0x468] sm:$0xff]
        %v961 = vld [vmem:[%s355 + $0x470] sm:$0xff]
        %v962 = vld [vmem:[%s355 + $0x478] sm:$0xff]
        %v963 = vld [vmem:[%s355 + $0x4b8] sm:$0xff]
        %v964 = vld [vmem:[%s355 + $0x4c0] sm:$0xff]
        %v965 = vld [vmem:[%s355 + $0x4c8] sm:$0xff]
        %v966 = vld [vmem:[%s355 + $0x4d0] sm:$0xff]
        %v967 = vld [vmem:[%s355 + $0x4d8] sm:$0xff]
        %v968 = vld [vmem:[%s355 + $0x518] sm:$0xff]
        %v969 = vld [vmem:[%s355 + $0x520] sm:$0xff]
        %v970 = vld [vmem:[%s355 + $0x528] sm:$0xff]
        %v971 = vld [vmem:[%s355 + $0x530] sm:$0xff]
        %v972 = vld [vmem:[%s355 + $0x538] sm:$0xff]
        %v973 = vld [vmem:[%s355 + $0x578] sm:$0xff]
        %v974 = vld [vmem:[%s355 + $0x580] sm:$0xff]
        %v975 = vld [vmem:[%s355 + $0x588] sm:$0xff]
        %v976 = vld [vmem:[%s355 + $0x590] sm:$0xff]
        %v977 = vld [vmem:[%s355 + $0x598] sm:$0xff]
        %v978 = vld [vmem:[%s355 + $0x5d8] sm:$0xff]
        %v979 = vld [vmem:[%s355 + $0x5e0] sm:$0xff]
        %v980 = vld [vmem:[%s355 + $0x5e8] sm:$0xff]
        %v981 = vld [vmem:[%s355 + $0x5f0] sm:$0xff]
        %v982 = vld [vmem:[%s355 + $0x5f8] sm:$0xff]
        %v983 = vpack.c.bf16 %v908, %v903
        %v984 = vpack.c.bf16 %v909, %v904
        %v985 = vpack.c.bf16 %v910, %v905
        %v986 = vpack.c.bf16 %v911, %v906
        %v987 = vpack.c.bf16 %v912, %v907
        %v988 = vpack.c.bf16 %v918, %v913
        %v989 = vpack.c.bf16 %v919, %v914
        %v990 = vpack.c.bf16 %v920, %v915
        %v991 = vpack.c.bf16 %v921, %v916
        %v992 = vpack.c.bf16 %v922, %v917
        %v993 = vpack.c.bf16 %v928, %v923
        %v994 = vpack.c.bf16 %v929, %v924
        %v995 = vpack.c.bf16 %v930, %v925
        %v996 = vpack.c.bf16 %v931, %v926
        %v997 = vpack.c.bf16 %v932, %v927
        %v998 = vpack.c.bf16 %v938, %v933
        %v999 = vpack.c.bf16 %v939, %v934
        %v1000 = vpack.c.bf16 %v940, %v935
        %v1001 = vpack.c.bf16 %v941, %v936
        %v1002 = vpack.c.bf16 %v942, %v937
        %v1003 = vpack.c.bf16 %v948, %v943
        %v1004 = vpack.c.bf16 %v949, %v944
        %v1005 = vpack.c.bf16 %v950, %v945
        %v1006 = vpack.c.bf16 %v951, %v946
        %v1007 = vpack.c.bf16 %v952, %v947
        %v1008 = vpack.c.bf16 %v958, %v953
        %v1009 = vpack.c.bf16 %v959, %v954
        %v1010 = vpack.c.bf16 %v960, %v955
        %v1011 = vpack.c.bf16 %v961, %v956
        %v1012 = vpack.c.bf16 %v962, %v957
        %v1013 = vpack.c.bf16 %v968, %v963
        %v1014 = vpack.c.bf16 %v969, %v964
        %v1015 = vpack.c.bf16 %v970, %v965
        %v1016 = vpack.c.bf16 %v971, %v966
        %v1017 = vpack.c.bf16 %v972, %v967
        %v1018 = vpack.c.bf16 %v978, %v973
        %v1019 = vpack.c.bf16 %v979, %v974
        %v1020 = vpack.c.bf16 %v980, %v975
        %v1021 = vpack.c.bf16 %v981, %v976
        %v1022 = vpack.c.bf16 %v982, %v977
        %1063 = vrot.lane.b32.xlu0 %v983, 24
        %v1064 = vpop.permute.xlu0 %1063
        %1065 = vrot.lane.b32.xlu0 %v984, 24
        %v1066 = vpop.permute.xlu0 %1065
        %1067 = vrot.lane.b32.xlu0 %v985, 24
        %v1068 = vpop.permute.xlu0 %1067
        %1069 = vrot.lane.b32.xlu0 %v986, 24
        %v1070 = vpop.permute.xlu0 %1069
        %1071 = vrot.lane.b32.xlu0 %v987, 24
        %v1072 = vpop.permute.xlu0 %1071
        %1073 = vrot.lane.b32.xlu0 %v988, 24
        %v1074 = vpop.permute.xlu0 %1073
        %1075 = vrot.lane.b32.xlu0 %v989, 24
        %v1076 = vpop.permute.xlu0 %1075
        %1077 = vrot.lane.b32.xlu0 %v990, 24
        %v1078 = vpop.permute.xlu0 %1077
        %1079 = vrot.lane.b32.xlu0 %v991, 24
        %v1080 = vpop.permute.xlu0 %1079
        %1081 = vrot.lane.b32.xlu0 %v992, 24
        %v1082 = vpop.permute.xlu0 %1081
        %1083 = vrot.lane.b32.xlu0 %v993, 24
        %v1084 = vpop.permute.xlu0 %1083
        %1085 = vrot.lane.b32.xlu0 %v994, 24
        %v1086 = vpop.permute.xlu0 %1085
        %1087 = vrot.lane.b32.xlu0 %v995, 24
        %v1088 = vpop.permute.xlu0 %1087
        %1089 = vrot.lane.b32.xlu0 %v996, 24
        %v1090 = vpop.permute.xlu0 %1089
        %1091 = vrot.lane.b32.xlu0 %v997, 24
        %v1092 = vpop.permute.xlu0 %1091
        %1093 = vrot.lane.b32.xlu0 %v998, 24
        %v1094 = vpop.permute.xlu0 %1093
        %1095 = vrot.lane.b32.xlu0 %v999, 24
        %v1096 = vpop.permute.xlu0 %1095
        %1097 = vrot.lane.b32.xlu0 %v1000, 24
        %v1098 = vpop.permute.xlu0 %1097
        %1099 = vrot.lane.b32.xlu0 %v1001, 24
        %v1100 = vpop.permute.xlu0 %1099
        %1101 = vrot.lane.b32.xlu0 %v1002, 24
        %v1102 = vpop.permute.xlu0 %1101
        %1103 = vrot.lane.b32.xlu0 %v1003, 24
        %v1104 = vpop.permute.xlu0 %1103
        %1105 = vrot.lane.b32.xlu0 %v1004, 24
        %v1106 = vpop.permute.xlu0 %1105
        %1107 = vrot.lane.b32.xlu0 %v1005, 24
        %v1108 = vpop.permute.xlu0 %1107
        %1109 = vrot.lane.b32.xlu0 %v1006, 24
        %v1110 = vpop.permute.xlu0 %1109
        %1111 = vrot.lane.b32.xlu0 %v1007, 24
        %v1112 = vpop.permute.xlu0 %1111
        %1113 = vrot.lane.b32.xlu0 %v1008, 24
        %v1114 = vpop.permute.xlu0 %1113
        %1115 = vrot.lane.b32.xlu0 %v1009, 24
        %v1116 = vpop.permute.xlu0 %1115
        %1117 = vrot.lane.b32.xlu0 %v1010, 24
        %v1118 = vpop.permute.xlu0 %1117
        %1119 = vrot.lane.b32.xlu0 %v1011, 24
        %v1120 = vpop.permute.xlu0 %1119
        %1121 = vrot.lane.b32.xlu0 %v1012, 24
        %v1122 = vpop.permute.xlu0 %1121
        %1123 = vrot.lane.b32.xlu0 %v1013, 24
        %v1124 = vpop.permute.xlu0 %1123
        %1125 = vrot.lane.b32.xlu0 %v1014, 24
        %v1126 = vpop.permute.xlu0 %1125
        %1127 = vrot.lane.b32.xlu0 %v1015, 24
        %v1128 = vpop.permute.xlu0 %1127
        %1129 = vrot.lane.b32.xlu0 %v1016, 24
        %v1130 = vpop.permute.xlu0 %1129
        %1131 = vrot.lane.b32.xlu0 %v1017, 24
        %v1132 = vpop.permute.xlu0 %1131
        %1133 = vrot.lane.b32.xlu0 %v1018, 24
        %v1134 = vpop.permute.xlu0 %1133
        %1135 = vrot.lane.b32.xlu0 %v1019, 24
        %v1136 = vpop.permute.xlu0 %1135
        %1137 = vrot.lane.b32.xlu0 %v1020, 24
        %v1138 = vpop.permute.xlu0 %1137
        %1139 = vrot.lane.b32.xlu0 %v1021, 24
        %v1140 = vpop.permute.xlu0 %1139
        %1141 = vrot.lane.b32.xlu0 %v1022, 24
        %v1142 = vpop.permute.xlu0 %1141
        %vm1143 = vcmask 195584
        %v1144 = vsel %vm1143, %v1064, %v1066
        %v1145 = vsel %vm1143, %v1066, %v1068
        %v1146 = vsel %vm1143, %v1068, %v1070
        %v1147 = vsel %vm1143, %v1070, %v1072
        %v1148 = vsel %vm1143, %v1074, %v1076
        %v1149 = vsel %vm1143, %v1076, %v1078
        %v1150 = vsel %vm1143, %v1078, %v1080
        %v1151 = vsel %vm1143, %v1080, %v1082
        %v1152 = vsel %vm1143, %v1084, %v1086
        %v1153 = vsel %vm1143, %v1086, %v1088
        %v1154 = vsel %vm1143, %v1088, %v1090
        %v1155 = vsel %vm1143, %v1090, %v1092
        %v1156 = vsel %vm1143, %v1094, %v1096
        %v1157 = vsel %vm1143, %v1096, %v1098
        %v1158 = vsel %vm1143, %v1098, %v1100
        %v1159 = vsel %vm1143, %v1100, %v1102
        %v1160 = vsel %vm1143, %v1104, %v1106
        %v1161 = vsel %vm1143, %v1106, %v1108
        %v1162 = vsel %vm1143, %v1108, %v1110
        %v1163 = vsel %vm1143, %v1110, %v1112
        %v1164 = vsel %vm1143, %v1114, %v1116
        %v1165 = vsel %vm1143, %v1116, %v1118
        %v1166 = vsel %vm1143, %v1118, %v1120
        %v1167 = vsel %vm1143, %v1120, %v1122
        %v1168 = vsel %vm1143, %v1124, %v1126
        %v1169 = vsel %vm1143, %v1126, %v1128
        %v1170 = vsel %vm1143, %v1128, %v1130
        %v1171 = vsel %vm1143, %v1130, %v1132
        %v1172 = vsel %vm1143, %v1134, %v1136
        %v1173 = vsel %vm1143, %v1136, %v1138
        %v1174 = vsel %vm1143, %v1138, %v1140
        %v1175 = vsel %vm1143, %v1140, %v1142
        %1208 = vst [vmem:[#allocation4] sm:$0xff] %v1144
        %1209 = vst [vmem:[#allocation4 + $0x8] sm:$0xff] %v1145
        %1210 = vst [vmem:[#allocation4 + $0x10] sm:$0xff] %v1146
        %1211 = vst.msk [vmem:[#allocation4 + $0x18] sm:$0xff] %vm519, %v1147
        %1212 = vst [vmem:[#allocation4 + $0x20] sm:$0xff] %v1148
        %1213 = vst [vmem:[#allocation4 + $0x28] sm:$0xff] %v1149
        %1214 = vst [vmem:[#allocation4 + $0x30] sm:$0xff] %v1150
        %1215 = vst.msk [vmem:[#allocation4 + $0x38] sm:$0xff] %vm519, %v1151
        %1216 = vst [vmem:[#allocation4 + $0x40] sm:$0xff] %v1152
        %1217 = vst [vmem:[#allocation4 + $0x48] sm:$0xff] %v1153
        %1218 = vst [vmem:[#allocation4 + $0x50] sm:$0xff] %v1154
        %1219 = vst.msk [vmem:[#allocation4 + $0x58] sm:$0xff] %vm519, %v1155
        %1220 = vst [vmem:[#allocation4 + $0x60] sm:$0xff] %v1156
        %1221 = vst [vmem:[#allocation4 + $0x68] sm:$0xff] %v1157
        %1222 = vst [vmem:[#allocation4 + $0x70] sm:$0xff] %v1158
        %1223 = vst.msk [vmem:[#allocation4 + $0x78] sm:$0xff] %vm519, %v1159
        %1224 = vst [vmem:[#allocation4 + $0x80] sm:$0xff] %v1160
        %1225 = vst [vmem:[#allocation4 + $0x88] sm:$0xff] %v1161
        %1226 = vst [vmem:[#allocation4 + $0x90] sm:$0xff] %v1162
        %1227 = vst.msk [vmem:[#allocation4 + $0x98] sm:$0xff] %vm519, %v1163
        %1228 = vst [vmem:[#allocation4 + $0xa0] sm:$0xff] %v1164
        %1229 = vst [vmem:[#allocation4 + $0xa8] sm:$0xff] %v1165
        %1230 = vst [vmem:[#allocation4 + $0xb0] sm:$0xff] %v1166
        %1231 = vst.msk [vmem:[#allocation4 + $0xb8] sm:$0xff] %vm519, %v1167
        %1232 = vst [vmem:[#allocation4 + $0xc0] sm:$0xff] %v1168
        %1233 = vst [vmem:[#allocation4 + $0xc8] sm:$0xff] %v1169
        %1234 = vst [vmem:[#allocation4 + $0xd0] sm:$0xff] %v1170
        %1235 = vst.msk [vmem:[#allocation4 + $0xd8] sm:$0xff] %vm519, %v1171
        %1236 = vst [vmem:[#allocation4 + $0xe0] sm:$0xff] %v1172
        %1237 = vst [vmem:[#allocation4 + $0xe8] sm:$0xff] %v1173
        %1238 = vst [vmem:[#allocation4 + $0xf0] sm:$0xff] %v1174
        %1239 = vst.msk [vmem:[#allocation4 + $0xf8] sm:$0xff] %vm519, %v1175
        %1240 = vst.msk [vmem:[#allocation4 + $0x18] sm:$0xff] %vm549, 0
        %1241 = vst.msk [vmem:[#allocation4 + $0x38] sm:$0xff] %vm549, 0
        %1242 = vst.msk [vmem:[#allocation4 + $0x58] sm:$0xff] %vm549, 0
        %1243 = vst.msk [vmem:[#allocation4 + $0x78] sm:$0xff] %vm549, 0
        %1244 = vst.msk [vmem:[#allocation4 + $0x98] sm:$0xff] %vm549, 0
        %1245 = vst.msk [vmem:[#allocation4 + $0xb8] sm:$0xff] %vm549, 0
        %1246 = vst.msk [vmem:[#allocation4 + $0xd8] sm:$0xff] %vm549, 0
        %1247 = vst.msk [vmem:[#allocation4 + $0xf8] sm:$0xff] %vm549, 0
        %v1248 = vld [vmem:[#allocation4] sm:$0xff]
        %v1249 = vld [vmem:[#allocation4 + $0x8] sm:$0xff]
        %v1250 = vld [vmem:[#allocation4 + $0x10] sm:$0xff]
        %v1251 = vld [vmem:[#allocation4 + $0x18] sm:$0xff]
        %v1252 = vld [vmem:[#allocation4 + $0x20] sm:$0xff]
        %v1253 = vld [vmem:[#allocation4 + $0x28] sm:$0xff]
        %v1254 = vld [vmem:[#allocation4 + $0x30] sm:$0xff]
        %v1255 = vld [vmem:[#allocation4 + $0x38] sm:$0xff]
        %v1256 = vld [vmem:[#allocation4 + $0x40] sm:$0xff]
        %v1257 = vld [vmem:[#allocation4 + $0x48] sm:$0xff]
        %v1258 = vld [vmem:[#allocation4 + $0x50] sm:$0xff]
        %v1259 = vld [vmem:[#allocation4 + $0x58] sm:$0xff]
        %v1260 = vld [vmem:[#allocation4 + $0x60] sm:$0xff]
        %v1261 = vld [vmem:[#allocation4 + $0x68] sm:$0xff]
        %v1262 = vld [vmem:[#allocation4 + $0x70] sm:$0xff]
        %v1263 = vld [vmem:[#allocation4 + $0x78] sm:$0xff]
        %v1264 = vld [vmem:[#allocation4 + $0x80] sm:$0xff]
        %v1265 = vld [vmem:[#allocation4 + $0x88] sm:$0xff]
        %v1266 = vld [vmem:[#allocation4 + $0x90] sm:$0xff]
        %v1267 = vld [vmem:[#allocation4 + $0x98] sm:$0xff]
        %v1268 = vld [vmem:[#allocation4 + $0xa0] sm:$0xff]
        %v1269 = vld [vmem:[#allocation4 + $0xa8] sm:$0xff]
        %v1270 = vld [vmem:[#allocation4 + $0xb0] sm:$0xff]
        %v1271 = vld [vmem:[#allocation4 + $0xb8] sm:$0xff]
        %v1272 = vld [vmem:[#allocation4 + $0xc0] sm:$0xff]
        %v1273 = vld [vmem:[#allocation4 + $0xc8] sm:$0xff]
        %v1274 = vld [vmem:[#allocation4 + $0xd0] sm:$0xff]
        %v1275 = vld [vmem:[#allocation4 + $0xd8] sm:$0xff]
        %v1276 = vld [vmem:[#allocation4 + $0xe0] sm:$0xff]
        %v1277 = vld [vmem:[#allocation4 + $0xe8] sm:$0xff]
        %v1278 = vld [vmem:[#allocation4 + $0xf0] sm:$0xff]
        %v1279 = vld [vmem:[#allocation4 + $0xf8] sm:$0xff]
        %v1280 = vld [vmem:[#allocation8] sm:$0xff]
        %v1281 = vld [vmem:[#allocation8 + $0x8] sm:$0xff]
        %v1282 = vld [vmem:[#allocation8 + $0x10] sm:$0xff]
        %v1283 = vld [vmem:[#allocation8 + $0x18] sm:$0xff]
        %v1284 = vld [vmem:[#allocation8 + $0x20] sm:$0xff]
        %v1285 = vld [vmem:[#allocation8 + $0x28] sm:$0xff]
        %v1286 = vld [vmem:[#allocation8 + $0x30] sm:$0xff]
        %v1287 = vld [vmem:[#allocation8 + $0x38] sm:$0xff]
        %v1288 = vld [vmem:[#allocation8 + $0x40] sm:$0xff]
        %v1289 = vld [vmem:[#allocation8 + $0x48] sm:$0xff]
        %v1290 = vld [vmem:[#allocation8 + $0x50] sm:$0xff]
        %v1291 = vld [vmem:[#allocation8 + $0x58] sm:$0xff]
        %v1292 = vld [vmem:[#allocation8 + $0x60] sm:$0xff]
        %v1293 = vld [vmem:[#allocation8 + $0x68] sm:$0xff]
        %v1294 = vld [vmem:[#allocation8 + $0x70] sm:$0xff]
        %v1295 = vld [vmem:[#allocation8 + $0x78] sm:$0xff]
        %v1296 = vld [vmem:[#allocation8 + $0x80] sm:$0xff]
        %v1297 = vld [vmem:[#allocation8 + $0x88] sm:$0xff]
        %v1298 = vld [vmem:[#allocation8 + $0x90] sm:$0xff]
        %v1299 = vld [vmem:[#allocation8 + $0x98] sm:$0xff]
        %v1300 = vld [vmem:[#allocation8 + $0xa0] sm:$0xff]
        %v1301 = vld [vmem:[#allocation8 + $0xa8] sm:$0xff]
        %v1302 = vld [vmem:[#allocation8 + $0xb0] sm:$0xff]
        %v1303 = vld [vmem:[#allocation8 + $0xb8] sm:$0xff]
        %v1304 = vld [vmem:[#allocation8 + $0xc0] sm:$0xff]
        %v1305 = vld [vmem:[#allocation8 + $0xc8] sm:$0xff]
        %v1306 = vld [vmem:[#allocation8 + $0xd0] sm:$0xff]
        %v1307 = vld [vmem:[#allocation8 + $0xd8] sm:$0xff]
        %v1308 = vld [vmem:[#allocation8 + $0xe0] sm:$0xff]
        %v1309 = vld [vmem:[#allocation8 + $0xe8] sm:$0xff]
        %v1310 = vld [vmem:[#allocation8 + $0xf0] sm:$0xff]
        %v1311 = vld [vmem:[#allocation8 + $0xf8] sm:$0xff]
        %v1312 = vld [vmem:[#allocation8 + $0x100] sm:$0xff]
        %v1313 = vld [vmem:[#allocation8 + $0x108] sm:$0xff]
        %v1314 = vld [vmem:[#allocation8 + $0x110] sm:$0xff]
        %v1315 = vld [vmem:[#allocation8 + $0x118] sm:$0xff]
        %v1316 = vld [vmem:[#allocation8 + $0x120] sm:$0xff]
        %v1317 = vld [vmem:[#allocation8 + $0x128] sm:$0xff]
        %v1318 = vld [vmem:[#allocation8 + $0x130] sm:$0xff]
        %v1319 = vld [vmem:[#allocation8 + $0x138] sm:$0xff]
        %v1320 = vld [vmem:[#allocation8 + $0x140] sm:$0xff]
        %v1321 = vld [vmem:[#allocation8 + $0x148] sm:$0xff]
        %v1322 = vld [vmem:[#allocation8 + $0x150] sm:$0xff]
        %v1323 = vld [vmem:[#allocation8 + $0x158] sm:$0xff]
        %v1324 = vld [vmem:[#allocation8 + $0x160] sm:$0xff]
        %v1325 = vld [vmem:[#allocation8 + $0x168] sm:$0xff]
        %v1326 = vld [vmem:[#allocation8 + $0x170] sm:$0xff]
        %v1327 = vld [vmem:[#allocation8 + $0x178] sm:$0xff]
        %v1328 = vld [vmem:[#allocation8 + $0x180] sm:$0xff]
        %v1329 = vld [vmem:[#allocation8 + $0x188] sm:$0xff]
        %v1330 = vld [vmem:[#allocation8 + $0x190] sm:$0xff]
        %v1331 = vld [vmem:[#allocation8 + $0x198] sm:$0xff]
        %v1332 = vld [vmem:[#allocation8 + $0x1a0] sm:$0xff]
        %v1333 = vld [vmem:[#allocation8 + $0x1a8] sm:$0xff]
        %v1334 = vld [vmem:[#allocation8 + $0x1b0] sm:$0xff]
        %v1335 = vld [vmem:[#allocation8 + $0x1b8] sm:$0xff]
        %v1336 = vld [vmem:[#allocation8 + $0x1c0] sm:$0xff]
        %v1337 = vld [vmem:[#allocation8 + $0x1c8] sm:$0xff]
        %v1338 = vld [vmem:[#allocation8 + $0x1d0] sm:$0xff]
        %v1339 = vld [vmem:[#allocation8 + $0x1d8] sm:$0xff]
        %v1340 = vld [vmem:[#allocation8 + $0x1e0] sm:$0xff]
        %v1341 = vld [vmem:[#allocation8 + $0x1e8] sm:$0xff]
        %v1342 = vld [vmem:[#allocation8 + $0x1f0] sm:$0xff]
        %v1343 = vld [vmem:[#allocation8 + $0x1f8] sm:$0xff]
        %v1344 = vld [vmem:[#allocation8 + $0x200] sm:$0xff]
        %v1345 = vld [vmem:[#allocation8 + $0x208] sm:$0xff]
        %v1346 = vld [vmem:[#allocation8 + $0x210] sm:$0xff]
        %v1347 = vld [vmem:[#allocation8 + $0x218] sm:$0xff]
        %v1348 = vld [vmem:[#allocation8 + $0x220] sm:$0xff]
        %v1349 = vld [vmem:[#allocation8 + $0x228] sm:$0xff]
        %v1350 = vld [vmem:[#allocation8 + $0x230] sm:$0xff]
        %v1351 = vld [vmem:[#allocation8 + $0x238] sm:$0xff]
        %v1352 = vld [vmem:[#allocation8 + $0x240] sm:$0xff]
        %v1353 = vld [vmem:[#allocation8 + $0x248] sm:$0xff]
        %v1354 = vld [vmem:[#allocation8 + $0x250] sm:$0xff]
        %v1355 = vld [vmem:[#allocation8 + $0x258] sm:$0xff]
        %v1356 = vld [vmem:[#allocation8 + $0x260] sm:$0xff]
        %v1357 = vld [vmem:[#allocation8 + $0x268] sm:$0xff]
        %v1358 = vld [vmem:[#allocation8 + $0x270] sm:$0xff]
        %v1359 = vld [vmem:[#allocation8 + $0x278] sm:$0xff]
        %v1360 = vld [vmem:[#allocation8 + $0x280] sm:$0xff]
        %v1361 = vld [vmem:[#allocation8 + $0x288] sm:$0xff]
        %v1362 = vld [vmem:[#allocation8 + $0x290] sm:$0xff]
        %v1363 = vld [vmem:[#allocation8 + $0x298] sm:$0xff]
        %v1364 = vld [vmem:[#allocation8 + $0x2a0] sm:$0xff]
        %v1365 = vld [vmem:[#allocation8 + $0x2a8] sm:$0xff]
        %v1366 = vld [vmem:[#allocation8 + $0x2b0] sm:$0xff]
        %v1367 = vld [vmem:[#allocation8 + $0x2b8] sm:$0xff]
        %v1368 = vld [vmem:[#allocation8 + $0x2c0] sm:$0xff]
        %v1369 = vld [vmem:[#allocation8 + $0x2c8] sm:$0xff]
        %v1370 = vld [vmem:[#allocation8 + $0x2d0] sm:$0xff]
        %v1371 = vld [vmem:[#allocation8 + $0x2d8] sm:$0xff]
        %v1372 = vld [vmem:[#allocation8 + $0x2e0] sm:$0xff]
        %v1373 = vld [vmem:[#allocation8 + $0x2e8] sm:$0xff]
        %v1374 = vld [vmem:[#allocation8 + $0x2f0] sm:$0xff]
        %v1375 = vld [vmem:[#allocation8 + $0x2f8] sm:$0xff]
        %v1376 = vld [vmem:[#allocation8 + $0x300] sm:$0xff]
        %v1377 = vld [vmem:[#allocation8 + $0x308] sm:$0xff]
        %v1378 = vld [vmem:[#allocation8 + $0x310] sm:$0xff]
        %v1379 = vld [vmem:[#allocation8 + $0x318] sm:$0xff]
        %v1380 = vld [vmem:[#allocation8 + $0x320] sm:$0xff]
        %v1381 = vld [vmem:[#allocation8 + $0x328] sm:$0xff]
        %v1382 = vld [vmem:[#allocation8 + $0x330] sm:$0xff]
        %v1383 = vld [vmem:[#allocation8 + $0x338] sm:$0xff]
        %v1384 = vld [vmem:[#allocation8 + $0x340] sm:$0xff]
        %v1385 = vld [vmem:[#allocation8 + $0x348] sm:$0xff]
        %v1386 = vld [vmem:[#allocation8 + $0x350] sm:$0xff]
        %v1387 = vld [vmem:[#allocation8 + $0x358] sm:$0xff]
        %v1388 = vld [vmem:[#allocation8 + $0x360] sm:$0xff]
        %v1389 = vld [vmem:[#allocation8 + $0x368] sm:$0xff]
        %v1390 = vld [vmem:[#allocation8 + $0x370] sm:$0xff]
        %v1391 = vld [vmem:[#allocation8 + $0x378] sm:$0xff]
        %v1392 = vld [vmem:[#allocation8 + $0x380] sm:$0xff]
        %v1393 = vld [vmem:[#allocation8 + $0x388] sm:$0xff]
        %v1394 = vld [vmem:[#allocation8 + $0x390] sm:$0xff]
        %v1395 = vld [vmem:[#allocation8 + $0x398] sm:$0xff]
        %v1396 = vld [vmem:[#allocation8 + $0x3a0] sm:$0xff]
        %v1397 = vld [vmem:[#allocation8 + $0x3a8] sm:$0xff]
        %v1398 = vld [vmem:[#allocation8 + $0x3b0] sm:$0xff]
        %v1399 = vld [vmem:[#allocation8 + $0x3b8] sm:$0xff]
        %v1400 = vld [vmem:[#allocation8 + $0x3c0] sm:$0xff]
        %v1401 = vld [vmem:[#allocation8 + $0x3c8] sm:$0xff]
        %v1402 = vld [vmem:[#allocation8 + $0x3d0] sm:$0xff]
        %v1403 = vld [vmem:[#allocation8 + $0x3d8] sm:$0xff]
        %v1404 = vld [vmem:[#allocation8 + $0x3e0] sm:$0xff]
        %v1405 = vld [vmem:[#allocation8 + $0x3e8] sm:$0xff]
        %v1406 = vld [vmem:[#allocation8 + $0x3f0] sm:$0xff]
        %v1407 = vld [vmem:[#allocation8 + $0x3f8] sm:$0xff]
        %v1408 = vld [vmem:[#allocation10] sm:$0xf]
        %v1410 = vlaneseq
        %v1411 = vshrl.u32 %v1410, 7
        %v1412 = vsub.s32 0, %v1411
        %v1413 = vrot.slane %v1408, %v1412
        %v1414 = vlaneseq
        %v1415 = vshrl.u32 %v1414, 7
        %v1416 = vsub.s32 1, %v1415
        %v1417 = vrot.slane %v1408, %v1416
        %v1418 = vlaneseq
        %v1419 = vshrl.u32 %v1418, 7
        %v1420 = vsub.s32 2, %v1419
        %v1421 = vrot.slane %v1408, %v1420
        %v1422 = vlaneseq
        %v1423 = vshrl.u32 %v1422, 7
        %v1424 = vsub.s32 3, %v1423
        %v1425 = vrot.slane %v1408, %v1424
        %v1558 = vunpack.c.l.b16 %v1280
        %v1559 = vunpack.c.h.b16 %v1280
        %v1560 = vunpack.c.l.b16 %v1281
        %v1561 = vunpack.c.h.b16 %v1281
        %v1562 = vunpack.c.l.b16 %v1282
        %v1563 = vunpack.c.h.b16 %v1282
        %v1564 = vunpack.c.l.b16 %v1283
        %v1565 = vunpack.c.h.b16 %v1283
        %v1566 = vunpack.c.l.b16 %v1284
        %v1567 = vunpack.c.h.b16 %v1284
        %v1568 = vunpack.c.l.b16 %v1285
        %v1569 = vunpack.c.h.b16 %v1285
        %v1570 = vunpack.c.l.b16 %v1286
        %v1571 = vunpack.c.h.b16 %v1286
        %v1572 = vunpack.c.l.b16 %v1287
        %v1573 = vunpack.c.h.b16 %v1287
        %v1574 = vunpack.c.l.b16 %v1288
        %v1575 = vunpack.c.h.b16 %v1288
        %v1576 = vunpack.c.l.b16 %v1289
        %v1577 = vunpack.c.h.b16 %v1289
        %v1578 = vunpack.c.l.b16 %v1290
        %v1579 = vunpack.c.h.b16 %v1290
        %v1580 = vunpack.c.l.b16 %v1291
        %v1581 = vunpack.c.h.b16 %v1291
        %v1582 = vunpack.c.l.b16 %v1292
        %v1583 = vunpack.c.h.b16 %v1292
        %v1584 = vunpack.c.l.b16 %v1293
        %v1585 = vunpack.c.h.b16 %v1293
        %v1586 = vunpack.c.l.b16 %v1294
        %v1587 = vunpack.c.h.b16 %v1294
        %v1588 = vunpack.c.l.b16 %v1295
        %v1589 = vunpack.c.h.b16 %v1295
        %v1590 = vunpack.c.l.b16 %v1296
        %v1591 = vunpack.c.h.b16 %v1296
        %v1592 = vunpack.c.l.b16 %v1297
        %v1593 = vunpack.c.h.b16 %v1297
        %v1594 = vunpack.c.l.b16 %v1298
        %v1595 = vunpack.c.h.b16 %v1298
        %v1596 = vunpack.c.l.b16 %v1299
        %v1597 = vunpack.c.h.b16 %v1299
        %v1598 = vunpack.c.l.b16 %v1300
        %v1599 = vunpack.c.h.b16 %v1300
        %v1600 = vunpack.c.l.b16 %v1301
        %v1601 = vunpack.c.h.b16 %v1301
        %v1602 = vunpack.c.l.b16 %v1302
        %v1603 = vunpack.c.h.b16 %v1302
        %v1604 = vunpack.c.l.b16 %v1303
        %v1605 = vunpack.c.h.b16 %v1303
        %v1606 = vunpack.c.l.b16 %v1304
        %v1607 = vunpack.c.h.b16 %v1304
        %v1608 = vunpack.c.l.b16 %v1305
        %v1609 = vunpack.c.h.b16 %v1305
        %v1610 = vunpack.c.l.b16 %v1306
        %v1611 = vunpack.c.h.b16 %v1306
        %v1612 = vunpack.c.l.b16 %v1307
        %v1613 = vunpack.c.h.b16 %v1307
        %v1614 = vunpack.c.l.b16 %v1308
        %v1615 = vunpack.c.h.b16 %v1308
        %v1616 = vunpack.c.l.b16 %v1309
        %v1617 = vunpack.c.h.b16 %v1309
        %v1618 = vunpack.c.l.b16 %v1310
        %v1619 = vunpack.c.h.b16 %v1310
        %v1620 = vunpack.c.l.b16 %v1311
        %v1621 = vunpack.c.h.b16 %v1311
        %v1622 = vunpack.c.l.b16 %v1312
        %v1623 = vunpack.c.h.b16 %v1312
        %v1624 = vunpack.c.l.b16 %v1313
        %v1625 = vunpack.c.h.b16 %v1313
        %v1626 = vunpack.c.l.b16 %v1314
        %v1627 = vunpack.c.h.b16 %v1314
        %v1628 = vunpack.c.l.b16 %v1315
        %v1629 = vunpack.c.h.b16 %v1315
        %v1630 = vunpack.c.l.b16 %v1316
        %v1631 = vunpack.c.h.b16 %v1316
        %v1632 = vunpack.c.l.b16 %v1317
        %v1633 = vunpack.c.h.b16 %v1317
        %v1634 = vunpack.c.l.b16 %v1318
        %v1635 = vunpack.c.h.b16 %v1318
        %v1636 = vunpack.c.l.b16 %v1319
        %v1637 = vunpack.c.h.b16 %v1319
        %v1638 = vunpack.c.l.b16 %v1320
        %v1639 = vunpack.c.h.b16 %v1320
        %v1640 = vunpack.c.l.b16 %v1321
        %v1641 = vunpack.c.h.b16 %v1321
        %v1642 = vunpack.c.l.b16 %v1322
        %v1643 = vunpack.c.h.b16 %v1322
        %v1644 = vunpack.c.l.b16 %v1323
        %v1645 = vunpack.c.h.b16 %v1323
        %v1646 = vunpack.c.l.b16 %v1324
        %v1647 = vunpack.c.h.b16 %v1324
        %v1648 = vunpack.c.l.b16 %v1325
        %v1649 = vunpack.c.h.b16 %v1325
        %v1650 = vunpack.c.l.b16 %v1326
        %v1651 = vunpack.c.h.b16 %v1326
        %v1652 = vunpack.c.l.b16 %v1327
        %v1653 = vunpack.c.h.b16 %v1327
        %v1654 = vunpack.c.l.b16 %v1328
        %v1655 = vunpack.c.h.b16 %v1328
        %v1656 = vunpack.c.l.b16 %v1329
        %v1657 = vunpack.c.h.b16 %v1329
        %v1658 = vunpack.c.l.b16 %v1330
        %v1659 = vunpack.c.h.b16 %v1330
        %v1660 = vunpack.c.l.b16 %v1331
        %v1661 = vunpack.c.h.b16 %v1331
        %v1662 = vunpack.c.l.b16 %v1332
        %v1663 = vunpack.c.h.b16 %v1332
        %v1664 = vunpack.c.l.b16 %v1333
        %v1665 = vunpack.c.h.b16 %v1333
        %v1666 = vunpack.c.l.b16 %v1334
        %v1667 = vunpack.c.h.b16 %v1334
        %v1668 = vunpack.c.l.b16 %v1335
        %v1669 = vunpack.c.h.b16 %v1335
        %v1670 = vunpack.c.l.b16 %v1336
        %v1671 = vunpack.c.h.b16 %v1336
        %v1672 = vunpack.c.l.b16 %v1337
        %v1673 = vunpack.c.h.b16 %v1337
        %v1674 = vunpack.c.l.b16 %v1338
        %v1675 = vunpack.c.h.b16 %v1338
        %v1676 = vunpack.c.l.b16 %v1339
        %v1677 = vunpack.c.h.b16 %v1339
        %v1678 = vunpack.c.l.b16 %v1340
        %v1679 = vunpack.c.h.b16 %v1340
        %v1680 = vunpack.c.l.b16 %v1341
        %v1681 = vunpack.c.h.b16 %v1341
        %v1682 = vunpack.c.l.b16 %v1342
        %v1683 = vunpack.c.h.b16 %v1342
        %v1684 = vunpack.c.l.b16 %v1343
        %v1685 = vunpack.c.h.b16 %v1343
        %v1686 = vunpack.c.l.b16 %v1344
        %v1687 = vunpack.c.h.b16 %v1344
        %v1688 = vunpack.c.l.b16 %v1345
        %v1689 = vunpack.c.h.b16 %v1345
        %v1690 = vunpack.c.l.b16 %v1346
        %v1691 = vunpack.c.h.b16 %v1346
        %v1692 = vunpack.c.l.b16 %v1347
        %v1693 = vunpack.c.h.b16 %v1347
        %v1694 = vunpack.c.l.b16 %v1348
        %v1695 = vunpack.c.h.b16 %v1348
        %v1696 = vunpack.c.l.b16 %v1349
        %v1697 = vunpack.c.h.b16 %v1349
        %v1698 = vunpack.c.l.b16 %v1350
        %v1699 = vunpack.c.h.b16 %v1350
        %v1700 = vunpack.c.l.b16 %v1351
        %v1701 = vunpack.c.h.b16 %v1351
        %v1702 = vunpack.c.l.b16 %v1352
        %v1703 = vunpack.c.h.b16 %v1352
        %v1704 = vunpack.c.l.b16 %v1353
        %v1705 = vunpack.c.h.b16 %v1353
        %v1706 = vunpack.c.l.b16 %v1354
        %v1707 = vunpack.c.h.b16 %v1354
        %v1708 = vunpack.c.l.b16 %v1355
        %v1709 = vunpack.c.h.b16 %v1355
        %v1710 = vunpack.c.l.b16 %v1356
        %v1711 = vunpack.c.h.b16 %v1356
        %v1712 = vunpack.c.l.b16 %v1357
        %v1713 = vunpack.c.h.b16 %v1357
        %v1714 = vunpack.c.l.b16 %v1358
        %v1715 = vunpack.c.h.b16 %v1358
        %v1716 = vunpack.c.l.b16 %v1359
        %v1717 = vunpack.c.h.b16 %v1359
        %v1718 = vunpack.c.l.b16 %v1360
        %v1719 = vunpack.c.h.b16 %v1360
        %v1720 = vunpack.c.l.b16 %v1361
        %v1721 = vunpack.c.h.b16 %v1361
        %v1722 = vunpack.c.l.b16 %v1362
        %v1723 = vunpack.c.h.b16 %v1362
        %v1724 = vunpack.c.l.b16 %v1363
        %v1725 = vunpack.c.h.b16 %v1363
        %v1726 = vunpack.c.l.b16 %v1364
        %v1727 = vunpack.c.h.b16 %v1364
        %v1728 = vunpack.c.l.b16 %v1365
        %v1729 = vunpack.c.h.b16 %v1365
        %v1730 = vunpack.c.l.b16 %v1366
        %v1731 = vunpack.c.h.b16 %v1366
        %v1732 = vunpack.c.l.b16 %v1367
        %v1733 = vunpack.c.h.b16 %v1367
        %v1734 = vunpack.c.l.b16 %v1368
        %v1735 = vunpack.c.h.b16 %v1368
        %v1736 = vunpack.c.l.b16 %v1369
        %v1737 = vunpack.c.h.b16 %v1369
        %v1738 = vunpack.c.l.b16 %v1370
        %v1739 = vunpack.c.h.b16 %v1370
        %v1740 = vunpack.c.l.b16 %v1371
        %v1741 = vunpack.c.h.b16 %v1371
        %v1742 = vunpack.c.l.b16 %v1372
        %v1743 = vunpack.c.h.b16 %v1372
        %v1744 = vunpack.c.l.b16 %v1373
        %v1745 = vunpack.c.h.b16 %v1373
        %v1746 = vunpack.c.l.b16 %v1374
        %v1747 = vunpack.c.h.b16 %v1374
        %v1748 = vunpack.c.l.b16 %v1375
        %v1749 = vunpack.c.h.b16 %v1375
        %v1750 = vunpack.c.l.b16 %v1376
        %v1751 = vunpack.c.h.b16 %v1376
        %v1752 = vunpack.c.l.b16 %v1377
        %v1753 = vunpack.c.h.b16 %v1377
        %v1754 = vunpack.c.l.b16 %v1378
        %v1755 = vunpack.c.h.b16 %v1378
        %v1756 = vunpack.c.l.b16 %v1379
        %v1757 = vunpack.c.h.b16 %v1379
        %v1758 = vunpack.c.l.b16 %v1380
        %v1759 = vunpack.c.h.b16 %v1380
        %v1760 = vunpack.c.l.b16 %v1381
        %v1761 = vunpack.c.h.b16 %v1381
        %v1762 = vunpack.c.l.b16 %v1382
        %v1763 = vunpack.c.h.b16 %v1382
        %v1764 = vunpack.c.l.b16 %v1383
        %v1765 = vunpack.c.h.b16 %v1383
        %v1766 = vunpack.c.l.b16 %v1384
        %v1767 = vunpack.c.h.b16 %v1384
        %v1768 = vunpack.c.l.b16 %v1385
        %v1769 = vunpack.c.h.b16 %v1385
        %v1770 = vunpack.c.l.b16 %v1386
        %v1771 = vunpack.c.h.b16 %v1386
        %v1772 = vunpack.c.l.b16 %v1387
        %v1773 = vunpack.c.h.b16 %v1387
        %v1774 = vunpack.c.l.b16 %v1388
        %v1775 = vunpack.c.h.b16 %v1388
        %v1776 = vunpack.c.l.b16 %v1389
        %v1777 = vunpack.c.h.b16 %v1389
        %v1778 = vunpack.c.l.b16 %v1390
        %v1779 = vunpack.c.h.b16 %v1390
        %v1780 = vunpack.c.l.b16 %v1391
        %v1781 = vunpack.c.h.b16 %v1391
        %v1782 = vunpack.c.l.b16 %v1392
        %v1783 = vunpack.c.h.b16 %v1392
        %v1784 = vunpack.c.l.b16 %v1393
        %v1785 = vunpack.c.h.b16 %v1393
        %v1786 = vunpack.c.l.b16 %v1394
        %v1787 = vunpack.c.h.b16 %v1394
        %v1788 = vunpack.c.l.b16 %v1395
        %v1789 = vunpack.c.h.b16 %v1395
        %v1790 = vunpack.c.l.b16 %v1396
        %v1791 = vunpack.c.h.b16 %v1396
        %v1792 = vunpack.c.l.b16 %v1397
        %v1793 = vunpack.c.h.b16 %v1397
        %v1794 = vunpack.c.l.b16 %v1398
        %v1795 = vunpack.c.h.b16 %v1398
        %v1796 = vunpack.c.l.b16 %v1399
        %v1797 = vunpack.c.h.b16 %v1399
        %v1798 = vunpack.c.l.b16 %v1400
        %v1799 = vunpack.c.h.b16 %v1400
        %v1800 = vunpack.c.l.b16 %v1401
        %v1801 = vunpack.c.h.b16 %v1401
        %v1802 = vunpack.c.l.b16 %v1402
        %v1803 = vunpack.c.h.b16 %v1402
        %v1804 = vunpack.c.l.b16 %v1403
        %v1805 = vunpack.c.h.b16 %v1403
        %v1806 = vunpack.c.l.b16 %v1404
        %v1807 = vunpack.c.h.b16 %v1404
        %v1808 = vunpack.c.l.b16 %v1405
        %v1809 = vunpack.c.h.b16 %v1405
        %v1810 = vunpack.c.l.b16 %v1406
        %v1811 = vunpack.c.h.b16 %v1406
        %v1812 = vunpack.c.l.b16 %v1407
        %v1813 = vunpack.c.h.b16 %v1407
        %v1814 = vpack.c.b16 %v1562, %v1558
        %v1815 = vpack.c.b16 %v1563, %v1559
        %v1816 = vpack.c.b16 %v1564, %v1560
        %v1817 = vpack.c.b16 %v1565, %v1561
        %v1818 = vpack.c.b16 %v1570, %v1566
        %v1819 = vpack.c.b16 %v1571, %v1567
        %v1820 = vpack.c.b16 %v1572, %v1568
        %v1821 = vpack.c.b16 %v1573, %v1569
        %v1822 = vpack.c.b16 %v1578, %v1574
        %v1823 = vpack.c.b16 %v1579, %v1575
        %v1824 = vpack.c.b16 %v1580, %v1576
        %v1825 = vpack.c.b16 %v1581, %v1577
        %v1826 = vpack.c.b16 %v1586, %v1582
        %v1827 = vpack.c.b16 %v1587, %v1583
        %v1828 = vpack.c.b16 %v1588, %v1584
        %v1829 = vpack.c.b16 %v1589, %v1585
        %v1830 = vpack.c.b16 %v1594, %v1590
        %v1831 = vpack.c.b16 %v1595, %v1591
        %v1832 = vpack.c.b16 %v1596, %v1592
        %v1833 = vpack.c.b16 %v1597, %v1593
        %v1834 = vpack.c.b16 %v1602, %v1598
        %v1835 = vpack.c.b16 %v1603, %v1599
        %v1836 = vpack.c.b16 %v1604, %v1600
        %v1837 = vpack.c.b16 %v1605, %v1601
        %v1838 = vpack.c.b16 %v1610, %v1606
        %v1839 = vpack.c.b16 %v1611, %v1607
        %v1840 = vpack.c.b16 %v1612, %v1608
        %v1841 = vpack.c.b16 %v1613, %v1609
        %v1842 = vpack.c.b16 %v1618, %v1614
        %v1843 = vpack.c.b16 %v1619, %v1615
        %v1844 = vpack.c.b16 %v1620, %v1616
        %v1845 = vpack.c.b16 %v1621, %v1617
        %v1846 = vpack.c.b16 %v1626, %v1622
        %v1847 = vpack.c.b16 %v1627, %v1623
        %v1848 = vpack.c.b16 %v1628, %v1624
        %v1849 = vpack.c.b16 %v1629, %v1625
        %v1850 = vpack.c.b16 %v1634, %v1630
        %v1851 = vpack.c.b16 %v1635, %v1631
        %v1852 = vpack.c.b16 %v1636, %v1632
        %v1853 = vpack.c.b16 %v1637, %v1633
        %v1854 = vpack.c.b16 %v1642, %v1638
        %v1855 = vpack.c.b16 %v1643, %v1639
        %v1856 = vpack.c.b16 %v1644, %v1640
        %v1857 = vpack.c.b16 %v1645, %v1641
        %v1858 = vpack.c.b16 %v1650, %v1646
        %v1859 = vpack.c.b16 %v1651, %v1647
        %v1860 = vpack.c.b16 %v1652, %v1648
        %v1861 = vpack.c.b16 %v1653, %v1649
        %v1862 = vpack.c.b16 %v1658, %v1654
        %v1863 = vpack.c.b16 %v1659, %v1655
        %v1864 = vpack.c.b16 %v1660, %v1656
        %v1865 = vpack.c.b16 %v1661, %v1657
        %v1866 = vpack.c.b16 %v1666, %v1662
        %v1867 = vpack.c.b16 %v1667, %v1663
        %v1868 = vpack.c.b16 %v1668, %v1664
        %v1869 = vpack.c.b16 %v1669, %v1665
        %v1870 = vpack.c.b16 %v1674, %v1670
        %v1871 = vpack.c.b16 %v1675, %v1671
        %v1872 = vpack.c.b16 %v1676, %v1672
        %v1873 = vpack.c.b16 %v1677, %v1673
        %v1874 = vpack.c.b16 %v1682, %v1678
        %v1875 = vpack.c.b16 %v1683, %v1679
        %v1876 = vpack.c.b16 %v1684, %v1680
        %v1877 = vpack.c.b16 %v1685, %v1681
        %v1878 = vpack.c.b16 %v1690, %v1686
        %v1879 = vpack.c.b16 %v1691, %v1687
        %v1880 = vpack.c.b16 %v1692, %v1688
        %v1881 = vpack.c.b16 %v1693, %v1689
        %v1882 = vpack.c.b16 %v1698, %v1694
        %v1883 = vpack.c.b16 %v1699, %v1695
        %v1884 = vpack.c.b16 %v1700, %v1696
        %v1885 = vpack.c.b16 %v1701, %v1697
        %v1886 = vpack.c.b16 %v1706, %v1702
        %v1887 = vpack.c.b16 %v1707, %v1703
        %v1888 = vpack.c.b16 %v1708, %v1704
        %v1889 = vpack.c.b16 %v1709, %v1705
        %v1890 = vpack.c.b16 %v1714, %v1710
        %v1891 = vpack.c.b16 %v1715, %v1711
        %v1892 = vpack.c.b16 %v1716, %v1712
        %v1893 = vpack.c.b16 %v1717, %v1713
        %v1894 = vpack.c.b16 %v1722, %v1718
        %v1895 = vpack.c.b16 %v1723, %v1719
        %v1896 = vpack.c.b16 %v1724, %v1720
        %v1897 = vpack.c.b16 %v1725, %v1721
        %v1898 = vpack.c.b16 %v1730, %v1726
        %v1899 = vpack.c.b16 %v1731, %v1727
        %v1900 = vpack.c.b16 %v1732, %v1728
        %v1901 = vpack.c.b16 %v1733, %v1729
        %v1902 = vpack.c.b16 %v1738, %v1734
        %v1903 = vpack.c.b16 %v1739, %v1735
        %v1904 = vpack.c.b16 %v1740, %v1736
        %v1905 = vpack.c.b16 %v1741, %v1737
        %v1906 = vpack.c.b16 %v1746, %v1742
        %v1907 = vpack.c.b16 %v1747, %v1743
        %v1908 = vpack.c.b16 %v1748, %v1744
        %v1909 = vpack.c.b16 %v1749, %v1745
        %v1910 = vpack.c.b16 %v1754, %v1750
        %v1911 = vpack.c.b16 %v1755, %v1751
        %v1912 = vpack.c.b16 %v1756, %v1752
        %v1913 = vpack.c.b16 %v1757, %v1753
        %v1914 = vpack.c.b16 %v1762, %v1758
        %v1915 = vpack.c.b16 %v1763, %v1759
        %v1916 = vpack.c.b16 %v1764, %v1760
        %v1917 = vpack.c.b16 %v1765, %v1761
        %v1918 = vpack.c.b16 %v1770, %v1766
        %v1919 = vpack.c.b16 %v1771, %v1767
        %v1920 = vpack.c.b16 %v1772, %v1768
        %v1921 = vpack.c.b16 %v1773, %v1769
        %v1922 = vpack.c.b16 %v1778, %v1774
        %v1923 = vpack.c.b16 %v1779, %v1775
        %v1924 = vpack.c.b16 %v1780, %v1776
        %v1925 = vpack.c.b16 %v1781, %v1777
        %v1926 = vpack.c.b16 %v1786, %v1782
        %v1927 = vpack.c.b16 %v1787, %v1783
        %v1928 = vpack.c.b16 %v1788, %v1784
        %v1929 = vpack.c.b16 %v1789, %v1785
        %v1930 = vpack.c.b16 %v1794, %v1790
        %v1931 = vpack.c.b16 %v1795, %v1791
        %v1932 = vpack.c.b16 %v1796, %v1792
        %v1933 = vpack.c.b16 %v1797, %v1793
        %v1934 = vpack.c.b16 %v1802, %v1798
        %v1935 = vpack.c.b16 %v1803, %v1799
        %v1936 = vpack.c.b16 %v1804, %v1800
        %v1937 = vpack.c.b16 %v1805, %v1801
        %v1938 = vpack.c.b16 %v1810, %v1806
        %v1939 = vpack.c.b16 %v1811, %v1807
        %v1940 = vpack.c.b16 %v1812, %v1808
        %v1941 = vpack.c.b16 %v1813, %v1809
        %2070 = vmatprep.subr.bf16.mxu0 %v1815
        %2071 = vmatpush1.bf16.msra.mxu0 %v1814
        %2072 = vmatprep.subr.bf16.mxu0 %v1819
        %2073 = vmatpush1.bf16.msra.mxu0 %v1818
        %2074 = vmatprep.subr.bf16.mxu0 %v1823
        %2075 = vmatpush1.bf16.msra.mxu0 %v1822
        %2076 = vmatprep.subr.bf16.mxu0 %v1827
        %2077 = vmatpush1.bf16.msra.mxu0 %v1826
        %2078 = vmatprep.subr.bf16.mxu0 %v1831
        %2079 = vmatpush1.bf16.msra.mxu0 %v1830
        %2080 = vmatprep.subr.bf16.mxu0 %v1835
        %2081 = vmatpush1.bf16.msra.mxu0 %v1834
        %2082 = vmatprep.subr.bf16.mxu0 %v1839
        %2083 = vmatpush1.bf16.msra.mxu0 %v1838
        %2084 = vmatprep.subr.bf16.mxu0 %v1843
        %2085 = vmatpush1.bf16.msra.mxu0 %v1842
        %2086 = vmatprep.subr.bf16.mxu0 %v1847
        %2087 = vmatpush1.bf16.msra.mxu0 %v1846
        %2088 = vmatprep.subr.bf16.mxu0 %v1851
        %2089 = vmatpush1.bf16.msra.mxu0 %v1850
        %2090 = vmatprep.subr.bf16.mxu0 %v1855
        %2091 = vmatpush1.bf16.msra.mxu0 %v1854
        %2092 = vmatprep.subr.bf16.mxu0 %v1859
        %2093 = vmatpush1.bf16.msra.mxu0 %v1858
        %2094 = vmatprep.subr.bf16.mxu0 %v1863
        %2095 = vmatpush1.bf16.msra.mxu0 %v1862
        %2096 = vmatprep.subr.bf16.mxu0 %v1867
        %2097 = vmatpush1.bf16.msra.mxu0 %v1866
        %2098 = vmatprep.subr.bf16.mxu0 %v1871
        %2099 = vmatpush1.bf16.msra.mxu0 %v1870
        %2100 = vmatprep.subr.bf16.mxu0 %v1875
        %2101 = vmatpush1.bf16.msra.mxu0 %v1874
        %2102 = vmatprep.mubr.bf16.mxu0 %v1249
        %2103 = vmatmul.mubr.bf16.gmra.mrb[0].mxu0 %v1248
        %v2104 = vpop.f32.mrb[0].mxu0
        %v2105 = vadd.f32 %v1413, %v2104
        %v2106 = vpop.f32.mrb[0].mxu0
        %v2107 = vadd.f32 %v1417, %v2106
        %v2108 = vpop.f32.mrb[0].mxu0
        %v2109 = vadd.f32 %v1413, %v2108
        %v2110 = vpop.f32.mrb[0].mxu0
        %v2111 = vadd.f32 %v1417, %v2110
        %2112 = vmatprep.mubr.bf16.mxu0 %v1253
        %2113 = vmatmul.mubr.bf16.gmra.mrb[0].mxu0 %v1252
        %v2114 = vpop.f32.mrb[0].mxu0
        %v2115 = vadd.f32 %v1413, %v2114
        %v2116 = vpop.f32.mrb[0].mxu0
        %v2117 = vadd.f32 %v1417, %v2116
        %v2118 = vpop.f32.mrb[0].mxu0
        %v2119 = vadd.f32 %v1413, %v2118
        %v2120 = vpop.f32.mrb[0].mxu0
        %v2121 = vadd.f32 %v1417, %v2120
        %2122 = vmatprep.mubr.bf16.mxu0 %v1257
        %2123 = vmatmul.mubr.bf16.gmra.mrb[0].mxu0 %v1256
        %v2124 = vpop.f32.mrb[0].mxu0
        %v2125 = vadd.f32 %v1413, %v2124
        %v2126 = vpop.f32.mrb[0].mxu0
        %v2127 = vadd.f32 %v1417, %v2126
        %v2128 = vpop.f32.mrb[0].mxu0
        %v2129 = vadd.f32 %v1413, %v2128
        %v2130 = vpop.f32.mrb[0].mxu0
        %v2131 = vadd.f32 %v1417, %v2130
        %2132 = vmatprep.mubr.bf16.mxu0 %v1261
        %2133 = vmatmul.mubr.bf16.gmra.mrb[0].mxu0 %v1260
        %v2134 = vpop.f32.mrb[0].mxu0
        %v2135 = vadd.f32 %v1413, %v2134
        %v2136 = vpop.f32.mrb[0].mxu0
        %v2137 = vadd.f32 %v1417, %v2136
        %v2138 = vpop.f32.mrb[0].mxu0
        %v2139 = vadd.f32 %v1413, %v2138
        %v2140 = vpop.f32.mrb[0].mxu0
        %v2141 = vadd.f32 %v1417, %v2140
        %2142 = vmatprep.mubr.bf16.mxu0 %v1265
        %2143 = vmatmul.mubr.bf16.gmra.mrb[0].mxu0 %v1264
        %v2144 = vpop.f32.mrb[0].mxu0
        %v2145 = vadd.f32 %v1413, %v2144
        %v2146 = vpop.f32.mrb[0].mxu0
        %v2147 = vadd.f32 %v1417, %v2146
        %v2148 = vpop.f32.mrb[0].mxu0
        %v2149 = vadd.f32 %v1413, %v2148
        %v2150 = vpop.f32.mrb[0].mxu0
        %v2151 = vadd.f32 %v1417, %v2150
        %2152 = vmatprep.mubr.bf16.mxu0 %v1269
        %2153 = vmatmul.mubr.bf16.gmra.mrb[0].mxu0 %v1268
        %v2154 = vpop.f32.mrb[0].mxu0
        %v2155 = vadd.f32 %v1413, %v2154
        %v2156 = vpop.f32.mrb[0].mxu0
        %v2157 = vadd.f32 %v1417, %v2156
        %v2158 = vpop.f32.mrb[0].mxu0
        %v2159 = vadd.f32 %v1413, %v2158
        %v2160 = vpop.f32.mrb[0].mxu0
        %v2161 = vadd.f32 %v1417, %v2160
        %2162 = vmatprep.mubr.bf16.mxu0 %v1273
        %2163 = vmatmul.mubr.bf16.gmra.mrb[0].mxu0 %v1272
        %v2164 = vpop.f32.mrb[0].mxu0
        %v2165 = vadd.f32 %v1413, %v2164
        %v2166 = vpop.f32.mrb[0].mxu0
        %v2167 = vadd.f32 %v1417, %v2166
        %v2168 = vpop.f32.mrb[0].mxu0
        %v2169 = vadd.f32 %v1413, %v2168
        %v2170 = vpop.f32.mrb[0].mxu0
        %v2171 = vadd.f32 %v1417, %v2170
        %2172 = vmatprep.mubr.bf16.mxu0 %v1277
        %2173 = vmatmul.mubr.bf16.gmra.mrb[0].mxu0 %v1276
        %v2174 = vpop.f32.mrb[0].mxu0
        %v2175 = vadd.f32 %v1413, %v2174
        %v2176 = vpop.f32.mrb[0].mxu0
        %v2177 = vadd.f32 %v1417, %v2176
        %v2178 = vpop.f32.mrb[0].mxu0
        %v2179 = vadd.f32 %v1413, %v2178
        %v2180 = vpop.f32.mrb[0].mxu0
        %v2181 = vadd.f32 %v1417, %v2180
        %2182 = vdwg.mxu0
        %2183 = vmatprep.subr.bf16.mxu0 %v1879
        %2184 = vmatpush1.bf16.msra.mxu0 %v1878
        %2185 = vmatprep.subr.bf16.mxu0 %v1883
        %2186 = vmatpush1.bf16.msra.mxu0 %v1882
        %2187 = vmatprep.subr.bf16.mxu0 %v1887
        %2188 = vmatpush1.bf16.msra.mxu0 %v1886
        %2189 = vmatprep.subr.bf16.mxu0 %v1891
        %2190 = vmatpush1.bf16.msra.mxu0 %v1890
        %2191 = vmatprep.subr.bf16.mxu0 %v1895
        %2192 = vmatpush1.bf16.msra.mxu0 %v1894
        %2193 = vmatprep.subr.bf16.mxu0 %v1899
        %2194 = vmatpush1.bf16.msra.mxu0 %v1898
        %2195 = vmatprep.subr.bf16.mxu0 %v1903
        %2196 = vmatpush1.bf16.msra.mxu0 %v1902
        %2197 = vmatprep.subr.bf16.mxu0 %v1907
        %2198 = vmatpush1.bf16.msra.mxu0 %v1906
        %2199 = vmatprep.subr.bf16.mxu0 %v1911
        %2200 = vmatpush1.bf16.msra.mxu0 %v1910
        %2201 = vmatprep.subr.bf16.mxu0 %v1915
        %2202 = vmatpush1.bf16.msra.mxu0 %v1914
        %2203 = vmatprep.subr.bf16.mxu0 %v1919
        %2204 = vmatpush1.bf16.msra.mxu0 %v1918
        %2205 = vmatprep.subr.bf16.mxu0 %v1923
        %2206 = vmatpush1.bf16.msra.mxu0 %v1922
        %2207 = vmatprep.subr.bf16.mxu0 %v1927
        %2208 = vmatpush1.bf16.msra.mxu0 %v1926
        %2209 = vmatprep.subr.bf16.mxu0 %v1931
        %2210 = vmatpush1.bf16.msra.mxu0 %v1930
        %2211 = vmatprep.subr.bf16.mxu0 %v1935
        %2212 = vmatpush1.bf16.msra.mxu0 %v1934
        %2213 = vmatprep.subr.bf16.mxu0 %v1939
        %2214 = vmatpush1.bf16.msra.mxu0 %v1938
        %2215 = vmatprep.mubr.bf16.mxu0 %v1251
        %2216 = vmatmul.mubr.bf16.gmra.mrb[0].mxu0 %v1250
        %v2217 = vpop.f32.mrb[0].mxu0
        %v2218 = vadd.f32 %v2105, %v2217
        %v2219 = vpop.f32.mrb[0].mxu0
        %v2220 = vadd.f32 %v2107, %v2219
        %v2221 = vpop.f32.mrb[0].mxu0
        %v2222 = vadd.f32 %v2109, %v2221
        %v2223 = vpop.f32.mrb[0].mxu0
        %v2224 = vadd.f32 %v2111, %v2223
        %2225 = vmatprep.mubr.bf16.mxu0 %v1255
        %2226 = vmatmul.mubr.bf16.gmra.mrb[0].mxu0 %v1254
        %v2227 = vpop.f32.mrb[0].mxu0
        %v2228 = vadd.f32 %v2115, %v2227
        %v2229 = vpop.f32.mrb[0].mxu0
        %v2230 = vadd.f32 %v2117, %v2229
        %v2231 = vpop.f32.mrb[0].mxu0
        %v2232 = vadd.f32 %v2119, %v2231
        %v2233 = vpop.f32.mrb[0].mxu0
        %v2234 = vadd.f32 %v2121, %v2233
        %2235 = vmatprep.mubr.bf16.mxu0 %v1259
        %2236 = vmatmul.mubr.bf16.gmra.mrb[0].mxu0 %v1258
        %v2237 = vpop.f32.mrb[0].mxu0
        %v2238 = vadd.f32 %v2125, %v2237
        %v2239 = vpop.f32.mrb[0].mxu0
        %v2240 = vadd.f32 %v2127, %v2239
        %v2241 = vpop.f32.mrb[0].mxu0
        %v2242 = vadd.f32 %v2129, %v2241
        %v2243 = vpop.f32.mrb[0].mxu0
        %v2244 = vadd.f32 %v2131, %v2243
        %2245 = vmatprep.mubr.bf16.mxu0 %v1263
        %2246 = vmatmul.mubr.bf16.gmra.mrb[0].mxu0 %v1262
        %v2247 = vpop.f32.mrb[0].mxu0
        %v2248 = vadd.f32 %v2135, %v2247
        %v2249 = vpop.f32.mrb[0].mxu0
        %v2250 = vadd.f32 %v2137, %v2249
        %v2251 = vpop.f32.mrb[0].mxu0
        %v2252 = vadd.f32 %v2139, %v2251
        %v2253 = vpop.f32.mrb[0].mxu0
        %v2254 = vadd.f32 %v2141, %v2253
        %2255 = vmatprep.mubr.bf16.mxu0 %v1267
        %2256 = vmatmul.mubr.bf16.gmra.mrb[0].mxu0 %v1266
        %v2257 = vpop.f32.mrb[0].mxu0
        %v2258 = vadd.f32 %v2145, %v2257
        %v2259 = vpop.f32.mrb[0].mxu0
        %v2260 = vadd.f32 %v2147, %v2259
        %v2261 = vpop.f32.mrb[0].mxu0
        %v2262 = vadd.f32 %v2149, %v2261
        %v2263 = vpop.f32.mrb[0].mxu0
        %v2264 = vadd.f32 %v2151, %v2263
        %2265 = vmatprep.mubr.bf16.mxu0 %v1271
        %2266 = vmatmul.mubr.bf16.gmra.mrb[0].mxu0 %v1270
        %v2267 = vpop.f32.mrb[0].mxu0
        %v2268 = vadd.f32 %v2155, %v2267
        %v2269 = vpop.f32.mrb[0].mxu0
        %v2270 = vadd.f32 %v2157, %v2269
        %v2271 = vpop.f32.mrb[0].mxu0
        %v2272 = vadd.f32 %v2159, %v2271
        %v2273 = vpop.f32.mrb[0].mxu0
        %v2274 = vadd.f32 %v2161, %v2273
        %2275 = vmatprep.mubr.bf16.mxu0 %v1275
        %2276 = vmatmul.mubr.bf16.gmra.mrb[0].mxu0 %v1274
        %v2277 = vpop.f32.mrb[0].mxu0
        %v2278 = vadd.f32 %v2165, %v2277
        %v2279 = vpop.f32.mrb[0].mxu0
        %v2280 = vadd.f32 %v2167, %v2279
        %v2281 = vpop.f32.mrb[0].mxu0
        %v2282 = vadd.f32 %v2169, %v2281
        %v2283 = vpop.f32.mrb[0].mxu0
        %v2284 = vadd.f32 %v2171, %v2283
        %2285 = vmatprep.mubr.bf16.mxu0 %v1279
        %2286 = vmatmul.mubr.bf16.gmra.mrb[0].mxu0 %v1278
        %v2287 = vpop.f32.mrb[0].mxu0
        %v2288 = vadd.f32 %v2175, %v2287
        %v2289 = vpop.f32.mrb[0].mxu0
        %v2290 = vadd.f32 %v2177, %v2289
        %v2291 = vpop.f32.mrb[0].mxu0
        %v2292 = vadd.f32 %v2179, %v2291
        %v2293 = vpop.f32.mrb[0].mxu0
        %v2294 = vadd.f32 %v2181, %v2293
        %2295 = vdwg.mxu0
        %2296 = vmatprep.subr.bf16.mxu0 %v1817
        %2297 = vmatpush1.bf16.msra.mxu0 %v1816
        %2298 = vmatprep.subr.bf16.mxu0 %v1821
        %2299 = vmatpush1.bf16.msra.mxu0 %v1820
        %2300 = vmatprep.subr.bf16.mxu0 %v1825
        %2301 = vmatpush1.bf16.msra.mxu0 %v1824
        %2302 = vmatprep.subr.bf16.mxu0 %v1829
        %2303 = vmatpush1.bf16.msra.mxu0 %v1828
        %2304 = vmatprep.subr.bf16.mxu0 %v1833
        %2305 = vmatpush1.bf16.msra.mxu0 %v1832
        %2306 = vmatprep.subr.bf16.mxu0 %v1837
        %2307 = vmatpush1.bf16.msra.mxu0 %v1836
        %2308 = vmatprep.subr.bf16.mxu0 %v1841
        %2309 = vmatpush1.bf16.msra.mxu0 %v1840
        %2310 = vmatprep.subr.bf16.mxu0 %v1845
        %2311 = vmatpush1.bf16.msra.mxu0 %v1844
        %2312 = vmatprep.subr.bf16.mxu0 %v1849
        %2313 = vmatpush1.bf16.msra.mxu0 %v1848
        %2314 = vmatprep.subr.bf16.mxu0 %v1853
        %2315 = vmatpush1.bf16.msra.mxu0 %v1852
        %2316 = vmatprep.subr.bf16.mxu0 %v1857
        %2317 = vmatpush1.bf16.msra.mxu0 %v1856
        %2318 = vmatprep.subr.bf16.mxu0 %v1861
        %2319 = vmatpush1.bf16.msra.mxu0 %v1860
        %2320 = vmatprep.subr.bf16.mxu0 %v1865
        %2321 = vmatpush1.bf16.msra.mxu0 %v1864
        %2322 = vmatprep.subr.bf16.mxu0 %v1869
        %2323 = vmatpush1.bf16.msra.mxu0 %v1868
        %2324 = vmatprep.subr.bf16.mxu0 %v1873
        %2325 = vmatpush1.bf16.msra.mxu0 %v1872
        %2326 = vmatprep.subr.bf16.mxu0 %v1877
        %2327 = vmatpush1.bf16.msra.mxu0 %v1876
        %2328 = vmatprep.mubr.bf16.mxu0 %v1249
        %2329 = vmatmul.mubr.bf16.gmra.mrb[0].mxu0 %v1248
        %v2330 = vpop.f32.mrb[0].mxu0
        %v2331 = vadd.f32 %v1421, %v2330
        %v2332 = vpop.f32.mrb[0].mxu0
        %v2333 = vadd.f32 %v1425, %v2332
        %v2334 = vpop.f32.mrb[0].mxu0
        %v2335 = vadd.f32 %v1421, %v2334
        %v2336 = vpop.f32.mrb[0].mxu0
        %v2337 = vadd.f32 %v1425, %v2336
        %2338 = vmatprep.mubr.bf16.mxu0 %v1253
        %2339 = vmatmul.mubr.bf16.gmra.mrb[0].mxu0 %v1252
        %v2340 = vpop.f32.mrb[0].mxu0
        %v2341 = vadd.f32 %v1421, %v2340
        %v2342 = vpop.f32.mrb[0].mxu0
        %v2343 = vadd.f32 %v1425, %v2342
        %v2344 = vpop.f32.mrb[0].mxu0
        %v2345 = vadd.f32 %v1421, %v2344
        %v2346 = vpop.f32.mrb[0].mxu0
        %v2347 = vadd.f32 %v1425, %v2346
        %2348 = vmatprep.mubr.bf16.mxu0 %v1257
        %2349 = vmatmul.mubr.bf16.gmra.mrb[0].mxu0 %v1256
        %v2350 = vpop.f32.mrb[0].mxu0
        %v2351 = vadd.f32 %v1421, %v2350
        %v2352 = vpop.f32.mrb[0].mxu0
        %v2353 = vadd.f32 %v1425, %v2352
        %v2354 = vpop.f32.mrb[0].mxu0
        %v2355 = vadd.f32 %v1421, %v2354
        %v2356 = vpop.f32.mrb[0].mxu0
        %v2357 = vadd.f32 %v1425, %v2356
        %2358 = vmatprep.mubr.bf16.mxu0 %v1261
        %2359 = vmatmul.mubr.bf16.gmra.mrb[0].mxu0 %v1260
        %v2360 = vpop.f32.mrb[0].mxu0
        %v2361 = vadd.f32 %v1421, %v2360
        %v2362 = vpop.f32.mrb[0].mxu0
        %v2363 = vadd.f32 %v1425, %v2362
        %v2364 = vpop.f32.mrb[0].mxu0
        %v2365 = vadd.f32 %v1421, %v2364
        %v2366 = vpop.f32.mrb[0].mxu0
        %v2367 = vadd.f32 %v1425, %v2366
        %2368 = vmatprep.mubr.bf16.mxu0 %v1265
        %2369 = vmatmul.mubr.bf16.gmra.mrb[0].mxu0 %v1264
        %v2370 = vpop.f32.mrb[0].mxu0
        %v2371 = vadd.f32 %v1421, %v2370
        %v2372 = vpop.f32.mrb[0].mxu0
        %v2373 = vadd.f32 %v1425, %v2372
        %v2374 = vpop.f32.mrb[0].mxu0
        %v2375 = vadd.f32 %v1421, %v2374
        %v2376 = vpop.f32.mrb[0].mxu0
        %v2377 = vadd.f32 %v1425, %v2376
        %2378 = vmatprep.mubr.bf16.mxu0 %v1269
        %2379 = vmatmul.mubr.bf16.gmra.mrb[0].mxu0 %v1268
        %v2380 = vpop.f32.mrb[0].mxu0
        %v2381 = vadd.f32 %v1421, %v2380
        %v2382 = vpop.f32.mrb[0].mxu0
        %v2383 = vadd.f32 %v1425, %v2382
        %v2384 = vpop.f32.mrb[0].mxu0
        %v2385 = vadd.f32 %v1421, %v2384
        %v2386 = vpop.f32.mrb[0].mxu0
        %v2387 = vadd.f32 %v1425, %v2386
        %2388 = vmatprep.mubr.bf16.mxu0 %v1273
        %2389 = vmatmul.mubr.bf16.gmra.mrb[0].mxu0 %v1272
        %v2390 = vpop.f32.mrb[0].mxu0
        %v2391 = vadd.f32 %v1421, %v2390
        %v2392 = vpop.f32.mrb[0].mxu0
        %v2393 = vadd.f32 %v1425, %v2392
        %v2394 = vpop.f32.mrb[0].mxu0
        %v2395 = vadd.f32 %v1421, %v2394
        %v2396 = vpop.f32.mrb[0].mxu0
        %v2397 = vadd.f32 %v1425, %v2396
        %2398 = vmatprep.mubr.bf16.mxu0 %v1277
        %2399 = vmatmul.mubr.bf16.gmra.mrb[0].mxu0 %v1276
        %v2400 = vpop.f32.mrb[0].mxu0
        %v2401 = vadd.f32 %v1421, %v2400
        %v2402 = vpop.f32.mrb[0].mxu0
        %v2403 = vadd.f32 %v1425, %v2402
        %v2404 = vpop.f32.mrb[0].mxu0
        %v2405 = vadd.f32 %v1421, %v2404
        %v2406 = vpop.f32.mrb[0].mxu0
        %v2407 = vadd.f32 %v1425, %v2406
        %2408 = vdwg.mxu0
        %2409 = vmatprep.subr.bf16.mxu0 %v1881
        %2410 = vmatpush1.bf16.msra.mxu0 %v1880
        %2411 = vmatprep.subr.bf16.mxu0 %v1885
        %2412 = vmatpush1.bf16.msra.mxu0 %v1884
        %2413 = vmatprep.subr.bf16.mxu0 %v1889
        %2414 = vmatpush1.bf16.msra.mxu0 %v1888
        %2415 = vmatprep.subr.bf16.mxu0 %v1893
        %2416 = vmatpush1.bf16.msra.mxu0 %v1892
        %2417 = vmatprep.subr.bf16.mxu0 %v1897
        %2418 = vmatpush1.bf16.msra.mxu0 %v1896
        %2419 = vmatprep.subr.bf16.mxu0 %v1901
        %2420 = vmatpush1.bf16.msra.mxu0 %v1900
        %2421 = vmatprep.subr.bf16.mxu0 %v1905
        %2422 = vmatpush1.bf16.msra.mxu0 %v1904
        %2423 = vmatprep.subr.bf16.mxu0 %v1909
        %2424 = vmatpush1.bf16.msra.mxu0 %v1908
        %2425 = vmatprep.subr.bf16.mxu0 %v1913
        %2426 = vmatpush1.bf16.msra.mxu0 %v1912
        %2427 = vmatprep.subr.bf16.mxu0 %v1917
        %2428 = vmatpush1.bf16.msra.mxu0 %v1916
        %2429 = vmatprep.subr.bf16.mxu0 %v1921
        %2430 = vmatpush1.bf16.msra.mxu0 %v1920
        %2431 = vmatprep.subr.bf16.mxu0 %v1925
        %2432 = vmatpush1.bf16.msra.mxu0 %v1924
        %2433 = vmatprep.subr.bf16.mxu0 %v1929
        %2434 = vmatpush1.bf16.msra.mxu0 %v1928
        %2435 = vmatprep.subr.bf16.mxu0 %v1933
        %2436 = vmatpush1.bf16.msra.mxu0 %v1932
        %2437 = vmatprep.subr.bf16.mxu0 %v1937
        %2438 = vmatpush1.bf16.msra.mxu0 %v1936
        %2439 = vmatprep.subr.bf16.mxu0 %v1941
        %2440 = vmatpush1.bf16.msra.mxu0 %v1940
        %2441 = vmatprep.mubr.bf16.mxu0 %v1251
        %2442 = vmatmul.mubr.bf16.gmra.mrb[0].mxu0 %v1250
        %v2443 = vpop.f32.mrb[0].mxu0
        %v2444 = vadd.f32 %v2331, %v2443
        %v2445 = vpop.f32.mrb[0].mxu0
        %v2446 = vadd.f32 %v2333, %v2445
        %v2447 = vpop.f32.mrb[0].mxu0
        %v2448 = vadd.f32 %v2335, %v2447
        %v2449 = vpop.f32.mrb[0].mxu0
        %v2450 = vadd.f32 %v2337, %v2449
        %2451 = vmatprep.mubr.bf16.mxu0 %v1255
        %2452 = vmatmul.mubr.bf16.gmra.mrb[0].mxu0 %v1254
        %v2453 = vpop.f32.mrb[0].mxu0
        %v2454 = vadd.f32 %v2341, %v2453
        %v2455 = vpop.f32.mrb[0].mxu0
        %v2456 = vadd.f32 %v2343, %v2455
        %v2457 = vpop.f32.mrb[0].mxu0
        %v2458 = vadd.f32 %v2345, %v2457
        %v2459 = vpop.f32.mrb[0].mxu0
        %v2460 = vadd.f32 %v2347, %v2459
        %2461 = vmatprep.mubr.bf16.mxu0 %v1259
        %2462 = vmatmul.mubr.bf16.gmra.mrb[0].mxu0 %v1258
        %v2463 = vpop.f32.mrb[0].mxu0
        %v2464 = vadd.f32 %v2351, %v2463
        %v2465 = vpop.f32.mrb[0].mxu0
        %v2466 = vadd.f32 %v2353, %v2465
        %v2467 = vpop.f32.mrb[0].mxu0
        %v2468 = vadd.f32 %v2355, %v2467
        %v2469 = vpop.f32.mrb[0].mxu0
        %v2470 = vadd.f32 %v2357, %v2469
        %2471 = vmatprep.mubr.bf16.mxu0 %v1263
        %2472 = vmatmul.mubr.bf16.gmra.mrb[0].mxu0 %v1262
        %v2473 = vpop.f32.mrb[0].mxu0
        %v2474 = vadd.f32 %v2361, %v2473
        %v2475 = vpop.f32.mrb[0].mxu0
        %v2476 = vadd.f32 %v2363, %v2475
        %v2477 = vpop.f32.mrb[0].mxu0
        %v2478 = vadd.f32 %v2365, %v2477
        %v2479 = vpop.f32.mrb[0].mxu0
        %v2480 = vadd.f32 %v2367, %v2479
        %2481 = vmatprep.mubr.bf16.mxu0 %v1267
        %2482 = vmatmul.mubr.bf16.gmra.mrb[0].mxu0 %v1266
        %v2483 = vpop.f32.mrb[0].mxu0
        %v2484 = vadd.f32 %v2371, %v2483
        %v2485 = vpop.f32.mrb[0].mxu0
        %v2486 = vadd.f32 %v2373, %v2485
        %v2487 = vpop.f32.mrb[0].mxu0
        %v2488 = vadd.f32 %v2375, %v2487
        %v2489 = vpop.f32.mrb[0].mxu0
        %v2490 = vadd.f32 %v2377, %v2489
        %2491 = vmatprep.mubr.bf16.mxu0 %v1271
        %2492 = vmatmul.mubr.bf16.gmra.mrb[0].mxu0 %v1270
        %v2493 = vpop.f32.mrb[0].mxu0
        %v2494 = vadd.f32 %v2381, %v2493
        %v2495 = vpop.f32.mrb[0].mxu0
        %v2496 = vadd.f32 %v2383, %v2495
        %v2497 = vpop.f32.mrb[0].mxu0
        %v2498 = vadd.f32 %v2385, %v2497
        %v2499 = vpop.f32.mrb[0].mxu0
        %v2500 = vadd.f32 %v2387, %v2499
        %2501 = vmatprep.mubr.bf16.mxu0 %v1275
        %2502 = vmatmul.mubr.bf16.gmra.mrb[0].mxu0 %v1274
        %v2503 = vpop.f32.mrb[0].mxu0
        %v2504 = vadd.f32 %v2391, %v2503
        %v2505 = vpop.f32.mrb[0].mxu0
        %v2506 = vadd.f32 %v2393, %v2505
        %v2507 = vpop.f32.mrb[0].mxu0
        %v2508 = vadd.f32 %v2395, %v2507
        %v2509 = vpop.f32.mrb[0].mxu0
        %v2510 = vadd.f32 %v2397, %v2509
        %2511 = vmatprep.mubr.bf16.mxu0 %v1279
        %2512 = vmatmul.mubr.bf16.gmra.mrb[0].mxu0 %v1278
        %v2513 = vpop.f32.mrb[0].mxu0
        %v2514 = vadd.f32 %v2401, %v2513
        %v2515 = vpop.f32.mrb[0].mxu0
        %v2516 = vadd.f32 %v2403, %v2515
        %v2517 = vpop.f32.mrb[0].mxu0
        %v2518 = vadd.f32 %v2405, %v2517
        %v2519 = vpop.f32.mrb[0].mxu0
        %v2520 = vadd.f32 %v2407, %v2519
        %2521 = vdwg.mxu0
        %v2522 = vmax.f32 %v2218, %v2220
        %v2523 = vmax.f32 %v2522, %v2444
        %v2524 = vmax.f32 %v2523, %v2446
        %2525 = vmax.xlane.f32.xlu0 %v2524
        %v2526 = vpop.xlane.xlu0 %2525
        %v2527 = vmax.f32 %v2222, %v2224
        %v2528 = vmax.f32 %v2527, %v2448
        %v2529 = vmax.f32 %v2528, %v2450
        %2530 = vmax.xlane.f32.xlu0 %v2529
        %v2531 = vpop.xlane.xlu0 %2530
        %v2532 = vmax.f32 %v2228, %v2230
        %v2533 = vmax.f32 %v2532, %v2454
        %v2534 = vmax.f32 %v2533, %v2456
        %2535 = vmax.xlane.f32.xlu0 %v2534
        %v2536 = vpop.xlane.xlu0 %2535
        %v2537 = vmax.f32 %v2232, %v2234
        %v2538 = vmax.f32 %v2537, %v2458
        %v2539 = vmax.f32 %v2538, %v2460
        %2540 = vmax.xlane.f32.xlu0 %v2539
        %v2541 = vpop.xlane.xlu0 %2540
        %v2542 = vmax.f32 %v2238, %v2240
        %v2543 = vmax.f32 %v2542, %v2464
        %v2544 = vmax.f32 %v2543, %v2466
        %2545 = vmax.xlane.f32.xlu0 %v2544
        %v2546 = vpop.xlane.xlu0 %2545
        %v2547 = vmax.f32 %v2242, %v2244
        %v2548 = vmax.f32 %v2547, %v2468
        %v2549 = vmax.f32 %v2548, %v2470
        %2550 = vmax.xlane.f32.xlu0 %v2549
        %v2551 = vpop.xlane.xlu0 %2550
        %v2552 = vmax.f32 %v2248, %v2250
        %v2553 = vmax.f32 %v2552, %v2474
        %v2554 = vmax.f32 %v2553, %v2476
        %2555 = vmax.xlane.f32.xlu0 %v2554
        %v2556 = vpop.xlane.xlu0 %2555
        %v2557 = vmax.f32 %v2252, %v2254
        %v2558 = vmax.f32 %v2557, %v2478
        %v2559 = vmax.f32 %v2558, %v2480
        %2560 = vmax.xlane.f32.xlu0 %v2559
        %v2561 = vpop.xlane.xlu0 %2560
        %v2562 = vmax.f32 %v2258, %v2260
        %v2563 = vmax.f32 %v2562, %v2484
        %v2564 = vmax.f32 %v2563, %v2486
        %2565 = vmax.xlane.f32.xlu0 %v2564
        %v2566 = vpop.xlane.xlu0 %2565
        %v2567 = vmax.f32 %v2262, %v2264
        %v2568 = vmax.f32 %v2567, %v2488
        %v2569 = vmax.f32 %v2568, %v2490
        %2570 = vmax.xlane.f32.xlu0 %v2569
        %v2571 = vpop.xlane.xlu0 %2570
        %v2572 = vmax.f32 %v2268, %v2270
        %v2573 = vmax.f32 %v2572, %v2494
        %v2574 = vmax.f32 %v2573, %v2496
        %2575 = vmax.xlane.f32.xlu0 %v2574
        %v2576 = vpop.xlane.xlu0 %2575
        %v2577 = vmax.f32 %v2272, %v2274
        %v2578 = vmax.f32 %v2577, %v2498
        %v2579 = vmax.f32 %v2578, %v2500
        %2580 = vmax.xlane.f32.xlu0 %v2579
        %v2581 = vpop.xlane.xlu0 %2580
        %v2582 = vmax.f32 %v2278, %v2280
        %v2583 = vmax.f32 %v2582, %v2504
        %v2584 = vmax.f32 %v2583, %v2506
        %2585 = vmax.xlane.f32.xlu0 %v2584
        %v2586 = vpop.xlane.xlu0 %2585
        %v2587 = vmax.f32 %v2282, %v2284
        %v2588 = vmax.f32 %v2587, %v2508
        %v2589 = vmax.f32 %v2588, %v2510
        %2590 = vmax.xlane.f32.xlu0 %v2589
        %v2591 = vpop.xlane.xlu0 %2590
        %v2592 = vmax.f32 %v2288, %v2290
        %v2593 = vmax.f32 %v2592, %v2514
        %v2594 = vmax.f32 %v2593, %v2516
        %2595 = vmax.xlane.f32.xlu0 %v2594
        %v2596 = vpop.xlane.xlu0 %2595
        %v2597 = vmax.f32 %v2292, %v2294
        %v2598 = vmax.f32 %v2597, %v2518
        %v2599 = vmax.f32 %v2598, %v2520
        %2600 = vmax.xlane.f32.xlu0 %v2599
        %v2601 = vpop.xlane.xlu0 %2600
        %v2602 = vsub.f32 %v2218, %v2526
        %v2603 = vsub.f32 %v2220, %v2526
        %v2604 = vsub.f32 %v2444, %v2526
        %v2605 = vsub.f32 %v2446, %v2526
        %v2606 = vsub.f32 %v2222, %v2531
        %v2607 = vsub.f32 %v2224, %v2531
        %v2608 = vsub.f32 %v2448, %v2531
        %v2609 = vsub.f32 %v2450, %v2531
        %v2610 = vsub.f32 %v2228, %v2536
        %v2611 = vsub.f32 %v2230, %v2536
        %v2612 = vsub.f32 %v2454, %v2536
        %v2613 = vsub.f32 %v2456, %v2536
        %v2614 = vsub.f32 %v2232, %v2541
        %v2615 = vsub.f32 %v2234, %v2541
        %v2616 = vsub.f32 %v2458, %v2541
        %v2617 = vsub.f32 %v2460, %v2541
        %v2618 = vsub.f32 %v2238, %v2546
        %v2619 = vsub.f32 %v2240, %v2546
        %v2620 = vsub.f32 %v2464, %v2546
        %v2621 = vsub.f32 %v2466, %v2546
        %v2622 = vsub.f32 %v2242, %v2551
        %v2623 = vsub.f32 %v2244, %v2551
        %v2624 = vsub.f32 %v2468, %v2551
        %v2625 = vsub.f32 %v2470, %v2551
        %v2626 = vsub.f32 %v2248, %v2556
        %v2627 = vsub.f32 %v2250, %v2556
        %v2628 = vsub.f32 %v2474, %v2556
        %v2629 = vsub.f32 %v2476, %v2556
        %v2630 = vsub.f32 %v2252, %v2561
        %v2631 = vsub.f32 %v2254, %v2561
        %v2632 = vsub.f32 %v2478, %v2561
        %v2633 = vsub.f32 %v2480, %v2561
        %v2634 = vsub.f32 %v2258, %v2566
        %v2635 = vsub.f32 %v2260, %v2566
        %v2636 = vsub.f32 %v2484, %v2566
        %v2637 = vsub.f32 %v2486, %v2566
        %v2638 = vsub.f32 %v2262, %v2571
        %v2639 = vsub.f32 %v2264, %v2571
        %v2640 = vsub.f32 %v2488, %v2571
        %v2641 = vsub.f32 %v2490, %v2571
        %v2642 = vsub.f32 %v2268, %v2576
        %v2643 = vsub.f32 %v2270, %v2576
        %v2644 = vsub.f32 %v2494, %v2576
        %v2645 = vsub.f32 %v2496, %v2576
        %v2646 = vsub.f32 %v2272, %v2581
        %v2647 = vsub.f32 %v2274, %v2581
        %v2648 = vsub.f32 %v2498, %v2581
        %v2649 = vsub.f32 %v2500, %v2581
        %v2650 = vsub.f32 %v2278, %v2586
        %v2651 = vsub.f32 %v2280, %v2586
        %v2652 = vsub.f32 %v2504, %v2586
        %v2653 = vsub.f32 %v2506, %v2586
        %v2654 = vsub.f32 %v2282, %v2591
        %v2655 = vsub.f32 %v2284, %v2591
        %v2656 = vsub.f32 %v2508, %v2591
        %v2657 = vsub.f32 %v2510, %v2591
        %v2658 = vsub.f32 %v2288, %v2596
        %v2659 = vsub.f32 %v2290, %v2596
        %v2660 = vsub.f32 %v2514, %v2596
        %v2661 = vsub.f32 %v2516, %v2596
        %v2662 = vsub.f32 %v2292, %v2601
        %v2663 = vsub.f32 %v2294, %v2601
        %v2664 = vsub.f32 %v2518, %v2601
        %v2665 = vsub.f32 %v2520, %v2601
        %v2666 = vmul.f32 %v2602, 1.442695
        %v2667 = vpow.pop %v2666
        %v2668 = vmul.f32 %v2603, 1.442695
        %v2669 = vpow.pop %v2668
        %v2670 = vmul.f32 %v2604, 1.442695
        %v2671 = vpow.pop %v2670
        %v2672 = vmul.f32 %v2605, 1.442695
        %v2673 = vpow.pop %v2672
        %v2674 = vmul.f32 %v2606, 1.442695
        %v2675 = vpow.pop %v2674
        %v2676 = vmul.f32 %v2607, 1.442695
        %v2677 = vpow.pop %v2676
        %v2678 = vmul.f32 %v2608, 1.442695
        %v2679 = vpow.pop %v2678
        %v2680 = vmul.f32 %v2609, 1.442695
        %v2681 = vpow.pop %v2680
        %v2682 = vmul.f32 %v2610, 1.442695
        %v2683 = vpow.pop %v2682
        %v2684 = vmul.f32 %v2611, 1.442695
        %v2685 = vpow.pop %v2684
        %v2686 = vmul.f32 %v2612, 1.442695
        %v2687 = vpow.pop %v2686
        %v2688 = vmul.f32 %v2613, 1.442695
        %v2689 = vpow.pop %v2688
        %v2690 = vmul.f32 %v2614, 1.442695
        %v2691 = vpow.pop %v2690
        %v2692 = vmul.f32 %v2615, 1.442695
        %v2693 = vpow.pop %v2692
        %v2694 = vmul.f32 %v2616, 1.442695
        %v2695 = vpow.pop %v2694
        %v2696 = vmul.f32 %v2617, 1.442695
        %v2697 = vpow.pop %v2696
        %v2698 = vmul.f32 %v2618, 1.442695
        %v2699 = vpow.pop %v2698
        %v2700 = vmul.f32 %v2619, 1.442695
        %v2701 = vpow.pop %v2700
        %v2702 = vmul.f32 %v2620, 1.442695
        %v2703 = vpow.pop %v2702
        %v2704 = vmul.f32 %v2621, 1.442695
        %v2705 = vpow.pop %v2704
        %v2706 = vmul.f32 %v2622, 1.442695
        %v2707 = vpow.pop %v2706
        %v2708 = vmul.f32 %v2623, 1.442695
        %v2709 = vpow.pop %v2708
        %v2710 = vmul.f32 %v2624, 1.442695
        %v2711 = vpow.pop %v2710
        %v2712 = vmul.f32 %v2625, 1.442695
        %v2713 = vpow.pop %v2712
        %v2714 = vmul.f32 %v2626, 1.442695
        %v2715 = vpow.pop %v2714
        %v2716 = vmul.f32 %v2627, 1.442695
        %v2717 = vpow.pop %v2716
        %v2718 = vmul.f32 %v2628, 1.442695
        %v2719 = vpow.pop %v2718
        %v2720 = vmul.f32 %v2629, 1.442695
        %v2721 = vpow.pop %v2720
        %v2722 = vmul.f32 %v2630, 1.442695
        %v2723 = vpow.pop %v2722
        %v2724 = vmul.f32 %v2631, 1.442695
        %v2725 = vpow.pop %v2724
        %v2726 = vmul.f32 %v2632, 1.442695
        %v2727 = vpow.pop %v2726
        %v2728 = vmul.f32 %v2633, 1.442695
        %v2729 = vpow.pop %v2728
        %v2730 = vmul.f32 %v2634, 1.442695
        %v2731 = vpow.pop %v2730
        %v2732 = vmul.f32 %v2635, 1.442695
        %v2733 = vpow.pop %v2732
        %v2734 = vmul.f32 %v2636, 1.442695
        %v2735 = vpow.pop %v2734
        %v2736 = vmul.f32 %v2637, 1.442695
        %v2737 = vpow.pop %v2736
        %v2738 = vmul.f32 %v2638, 1.442695
        %v2739 = vpow.pop %v2738
        %v2740 = vmul.f32 %v2639, 1.442695
        %v2741 = vpow.pop %v2740
        %v2742 = vmul.f32 %v2640, 1.442695
        %v2743 = vpow.pop %v2742
        %v2744 = vmul.f32 %v2641, 1.442695
        %v2745 = vpow.pop %v2744
        %v2746 = vmul.f32 %v2642, 1.442695
        %v2747 = vpow.pop %v2746
        %v2748 = vmul.f32 %v2643, 1.442695
        %v2749 = vpow.pop %v2748
        %v2750 = vmul.f32 %v2644, 1.442695
        %v2751 = vpow.pop %v2750
        %v2752 = vmul.f32 %v2645, 1.442695
        %v2753 = vpow.pop %v2752
        %v2754 = vmul.f32 %v2646, 1.442695
        %v2755 = vpow.pop %v2754
        %v2756 = vmul.f32 %v2647, 1.442695
        %v2757 = vpow.pop %v2756
        %v2758 = vmul.f32 %v2648, 1.442695
        %v2759 = vpow.pop %v2758
        %v2760 = vmul.f32 %v2649, 1.442695
        %v2761 = vpow.pop %v2760
        %v2762 = vmul.f32 %v2650, 1.442695
        %v2763 = vpow.pop %v2762
        %v2764 = vmul.f32 %v2651, 1.442695
        %v2765 = vpow.pop %v2764
        %v2766 = vmul.f32 %v2652, 1.442695
        %v2767 = vpow.pop %v2766
        %v2768 = vmul.f32 %v2653, 1.442695
        %v2769 = vpow.pop %v2768
        %v2770 = vmul.f32 %v2654, 1.442695
        %v2771 = vpow.pop %v2770
        %v2772 = vmul.f32 %v2655, 1.442695
        %v2773 = vpow.pop %v2772
        %v2774 = vmul.f32 %v2656, 1.442695
        %v2775 = vpow.pop %v2774
        %v2776 = vmul.f32 %v2657, 1.442695
        %v2777 = vpow.pop %v2776
        %v2778 = vmul.f32 %v2658, 1.442695
        %v2779 = vpow.pop %v2778
        %v2780 = vmul.f32 %v2659, 1.442695
        %v2781 = vpow.pop %v2780
        %v2782 = vmul.f32 %v2660, 1.442695
        %v2783 = vpow.pop %v2782
        %v2784 = vmul.f32 %v2661, 1.442695
        %v2785 = vpow.pop %v2784
        %v2786 = vmul.f32 %v2662, 1.442695
        %v2787 = vpow.pop %v2786
        %v2788 = vmul.f32 %v2663, 1.442695
        %v2789 = vpow.pop %v2788
        %v2790 = vmul.f32 %v2664, 1.442695
        %v2791 = vpow.pop %v2790
        %v2792 = vmul.f32 %v2665, 1.442695
        %v2793 = vpow.pop %v2792
        %v2794 = vadd.f32 %v2667, %v2669
        %v2795 = vadd.f32 %v2794, %v2671
        %v2796 = vadd.f32 %v2795, %v2673
        %2797 = vadd.xlane.f32.xlu0 %v2796
        %v2798 = vpop.xlane.xlu0 %2797
        %v2799 = vadd.f32 %v2675, %v2677
        %v2800 = vadd.f32 %v2799, %v2679
        %v2801 = vadd.f32 %v2800, %v2681
        %2802 = vadd.xlane.f32.xlu0 %v2801
        %v2803 = vpop.xlane.xlu0 %2802
        %v2804 = vadd.f32 %v2683, %v2685
        %v2805 = vadd.f32 %v2804, %v2687
        %v2806 = vadd.f32 %v2805, %v2689
        %2807 = vadd.xlane.f32.xlu0 %v2806
        %v2808 = vpop.xlane.xlu0 %2807
        %v2809 = vadd.f32 %v2691, %v2693
        %v2810 = vadd.f32 %v2809, %v2695
        %v2811 = vadd.f32 %v2810, %v2697
        %2812 = vadd.xlane.f32.xlu0 %v2811
        %v2813 = vpop.xlane.xlu0 %2812
        %v2814 = vadd.f32 %v2699, %v2701
        %v2815 = vadd.f32 %v2814, %v2703
        %v2816 = vadd.f32 %v2815, %v2705
        %2817 = vadd.xlane.f32.xlu0 %v2816
        %v2818 = vpop.xlane.xlu0 %2817
        %v2819 = vadd.f32 %v2707, %v2709
        %v2820 = vadd.f32 %v2819, %v2711
        %v2821 = vadd.f32 %v2820, %v2713
        %2822 = vadd.xlane.f32.xlu0 %v2821
        %v2823 = vpop.xlane.xlu0 %2822
        %v2824 = vadd.f32 %v2715, %v2717
        %v2825 = vadd.f32 %v2824, %v2719
        %v2826 = vadd.f32 %v2825, %v2721
        %2827 = vadd.xlane.f32.xlu0 %v2826
        %v2828 = vpop.xlane.xlu0 %2827
        %v2829 = vadd.f32 %v2723, %v2725
        %v2830 = vadd.f32 %v2829, %v2727
        %v2831 = vadd.f32 %v2830, %v2729
        %2832 = vadd.xlane.f32.xlu0 %v2831
        %v2833 = vpop.xlane.xlu0 %2832
        %v2834 = vadd.f32 %v2731, %v2733
        %v2835 = vadd.f32 %v2834, %v2735
        %v2836 = vadd.f32 %v2835, %v2737
        %2837 = vadd.xlane.f32.xlu0 %v2836
        %v2838 = vpop.xlane.xlu0 %2837
        %v2839 = vadd.f32 %v2739, %v2741
        %v2840 = vadd.f32 %v2839, %v2743
        %v2841 = vadd.f32 %v2840, %v2745
        %2842 = vadd.xlane.f32.xlu0 %v2841
        %v2843 = vpop.xlane.xlu0 %2842
        %v2844 = vadd.f32 %v2747, %v2749
        %v2845 = vadd.f32 %v2844, %v2751
        %v2846 = vadd.f32 %v2845, %v2753
        %2847 = vadd.xlane.f32.xlu0 %v2846
        %v2848 = vpop.xlane.xlu0 %2847
        %v2849 = vadd.f32 %v2755, %v2757
        %v2850 = vadd.f32 %v2849, %v2759
        %v2851 = vadd.f32 %v2850, %v2761
        %2852 = vadd.xlane.f32.xlu0 %v2851
        %v2853 = vpop.xlane.xlu0 %2852
        %v2854 = vadd.f32 %v2763, %v2765
        %v2855 = vadd.f32 %v2854, %v2767
        %v2856 = vadd.f32 %v2855, %v2769
        %2857 = vadd.xlane.f32.xlu0 %v2856
        %v2858 = vpop.xlane.xlu0 %2857
        %v2859 = vadd.f32 %v2771, %v2773
        %v2860 = vadd.f32 %v2859, %v2775
        %v2861 = vadd.f32 %v2860, %v2777
        %2862 = vadd.xlane.f32.xlu0 %v2861
        %v2863 = vpop.xlane.xlu0 %2862
        %v2864 = vadd.f32 %v2779, %v2781
        %v2865 = vadd.f32 %v2864, %v2783
        %v2866 = vadd.f32 %v2865, %v2785
        %2867 = vadd.xlane.f32.xlu0 %v2866
        %v2868 = vpop.xlane.xlu0 %2867
        %v2869 = vadd.f32 %v2787, %v2789
        %v2870 = vadd.f32 %v2869, %v2791
        %v2871 = vadd.f32 %v2870, %v2793
        %2872 = vadd.xlane.f32.xlu0 %v2871
        %v2873 = vpop.xlane.xlu0 %2872
        %v2874 = vrcp.pop %v2798
        %v2875 = vrcp.pop %v2803
        %v2876 = vrcp.pop %v2808
        %v2877 = vrcp.pop %v2813
        %v2878 = vrcp.pop %v2818
        %v2879 = vrcp.pop %v2823
        %v2880 = vrcp.pop %v2828
        %v2881 = vrcp.pop %v2833
        %v2882 = vrcp.pop %v2838
        %v2883 = vrcp.pop %v2843
        %v2884 = vrcp.pop %v2848
        %v2885 = vrcp.pop %v2853
        %v2886 = vrcp.pop %v2858
        %v2887 = vrcp.pop %v2863
        %v2888 = vrcp.pop %v2868
        %v2889 = vrcp.pop %v2873
        %v2890 = vmul.f32 %v2667, %v2874
        %v2891 = vmul.f32 %v2669, %v2874
        %v2892 = vmul.f32 %v2671, %v2874
        %v2893 = vmul.f32 %v2673, %v2874
        %v2894 = vmul.f32 %v2675, %v2875
        %v2895 = vmul.f32 %v2677, %v2875
        %v2896 = vmul.f32 %v2679, %v2875
        %v2897 = vmul.f32 %v2681, %v2875
        %v2898 = vmul.f32 %v2683, %v2876
        %v2899 = vmul.f32 %v2685, %v2876
        %v2900 = vmul.f32 %v2687, %v2876
        %v2901 = vmul.f32 %v2689, %v2876
        %v2902 = vmul.f32 %v2691, %v2877
        %v2903 = vmul.f32 %v2693, %v2877
        %v2904 = vmul.f32 %v2695, %v2877
        %v2905 = vmul.f32 %v2697, %v2877
        %v2906 = vmul.f32 %v2699, %v2878
        %v2907 = vmul.f32 %v2701, %v2878
        %v2908 = vmul.f32 %v2703, %v2878
        %v2909 = vmul.f32 %v2705, %v2878
        %v2910 = vmul.f32 %v2707, %v2879
        %v2911 = vmul.f32 %v2709, %v2879
        %v2912 = vmul.f32 %v2711, %v2879
        %v2913 = vmul.f32 %v2713, %v2879
        %v2914 = vmul.f32 %v2715, %v2880
        %v2915 = vmul.f32 %v2717, %v2880
        %v2916 = vmul.f32 %v2719, %v2880
        %v2917 = vmul.f32 %v2721, %v2880
        %v2918 = vmul.f32 %v2723, %v2881
        %v2919 = vmul.f32 %v2725, %v2881
        %v2920 = vmul.f32 %v2727, %v2881
        %v2921 = vmul.f32 %v2729, %v2881
        %v2922 = vmul.f32 %v2731, %v2882
        %v2923 = vmul.f32 %v2733, %v2882
        %v2924 = vmul.f32 %v2735, %v2882
        %v2925 = vmul.f32 %v2737, %v2882
        %v2926 = vmul.f32 %v2739, %v2883
        %v2927 = vmul.f32 %v2741, %v2883
        %v2928 = vmul.f32 %v2743, %v2883
        %v2929 = vmul.f32 %v2745, %v2883
        %v2930 = vmul.f32 %v2747, %v2884
        %v2931 = vmul.f32 %v2749, %v2884
        %v2932 = vmul.f32 %v2751, %v2884
        %v2933 = vmul.f32 %v2753, %v2884
        %v2934 = vmul.f32 %v2755, %v2885
        %v2935 = vmul.f32 %v2757, %v2885
        %v2936 = vmul.f32 %v2759, %v2885
        %v2937 = vmul.f32 %v2761, %v2885
        %v2938 = vmul.f32 %v2763, %v2886
        %v2939 = vmul.f32 %v2765, %v2886
        %v2940 = vmul.f32 %v2767, %v2886
        %v2941 = vmul.f32 %v2769, %v2886
        %v2942 = vmul.f32 %v2771, %v2887
        %v2943 = vmul.f32 %v2773, %v2887
        %v2944 = vmul.f32 %v2775, %v2887
        %v2945 = vmul.f32 %v2777, %v2887
        %v2946 = vmul.f32 %v2779, %v2888
        %v2947 = vmul.f32 %v2781, %v2888
        %v2948 = vmul.f32 %v2783, %v2888
        %v2949 = vmul.f32 %v2785, %v2888
        %v2950 = vmul.f32 %v2787, %v2889
        %v2951 = vmul.f32 %v2789, %v2889
        %v2952 = vmul.f32 %v2791, %v2889
        %v2953 = vmul.f32 %v2793, %v2889
        %v2954 = vpack.c.bf16 %v2894, %v2890
        %v2955 = vpack.c.bf16 %v2895, %v2891
        %v2956 = vpack.c.bf16 %v2896, %v2892
        %v2957 = vpack.c.bf16 %v2897, %v2893
        %v2958 = vpack.c.bf16 %v2902, %v2898
        %v2959 = vpack.c.bf16 %v2903, %v2899
        %v2960 = vpack.c.bf16 %v2904, %v2900
        %v2961 = vpack.c.bf16 %v2905, %v2901
        %v2962 = vpack.c.bf16 %v2910, %v2906
        %v2963 = vpack.c.bf16 %v2911, %v2907
        %v2964 = vpack.c.bf16 %v2912, %v2908
        %v2965 = vpack.c.bf16 %v2913, %v2909
        %v2966 = vpack.c.bf16 %v2918, %v2914
        %v2967 = vpack.c.bf16 %v2919, %v2915
        %v2968 = vpack.c.bf16 %v2920, %v2916
        %v2969 = vpack.c.bf16 %v2921, %v2917
        %v2970 = vpack.c.bf16 %v2926, %v2922
        %v2971 = vpack.c.bf16 %v2927, %v2923
        %v2972 = vpack.c.bf16 %v2928, %v2924
        %v2973 = vpack.c.bf16 %v2929, %v2925
        %v2974 = vpack.c.bf16 %v2934, %v2930
        %v2975 = vpack.c.bf16 %v2935, %v2931
        %v2976 = vpack.c.bf16 %v2936, %v2932
        %v2977 = vpack.c.bf16 %v2937, %v2933
        %v2978 = vpack.c.bf16 %v2942, %v2938
        %v2979 = vpack.c.bf16 %v2943, %v2939
        %v2980 = vpack.c.bf16 %v2944, %v2940
        %v2981 = vpack.c.bf16 %v2945, %v2941
        %v2982 = vpack.c.bf16 %v2950, %v2946
        %v2983 = vpack.c.bf16 %v2951, %v2947
        %v2984 = vpack.c.bf16 %v2952, %v2948
        %v2985 = vpack.c.bf16 %v2953, %v2949
        %v2986 = vld [vmem:[#allocation2] sm:$0xff]
        %v2987 = vld [vmem:[#allocation2 + $0x8] sm:$0xff]
        %v2988 = vld [vmem:[#allocation2 + $0x10] sm:$0xff]
        %v2989 = vld [vmem:[#allocation2 + $0x18] sm:$0xff]
        %v2990 = vld [vmem:[#allocation2 + $0x20] sm:$0xff]
        %v2991 = vld [vmem:[#allocation2 + $0x28] sm:$0xff]
        %v2992 = vld [vmem:[#allocation2 + $0x30] sm:$0xff]
        %v2993 = vld [vmem:[#allocation2 + $0x38] sm:$0xff]
        %v2994 = vld [vmem:[#allocation2 + $0x40] sm:$0xff]
        %v2995 = vld [vmem:[#allocation2 + $0x48] sm:$0xff]
        %v2996 = vld [vmem:[#allocation2 + $0x50] sm:$0xff]
        %v2997 = vld [vmem:[#allocation2 + $0x58] sm:$0xff]
        %v2998 = vld [vmem:[#allocation2 + $0x60] sm:$0xff]
        %v2999 = vld [vmem:[#allocation2 + $0x68] sm:$0xff]
        %v3000 = vld [vmem:[#allocation2 + $0x70] sm:$0xff]
        %v3001 = vld [vmem:[#allocation2 + $0x78] sm:$0xff]
        %v3002 = vld [vmem:[#allocation2 + $0x80] sm:$0xff]
        %v3003 = vld [vmem:[#allocation2 + $0x88] sm:$0xff]
        %v3004 = vld [vmem:[#allocation2 + $0x90] sm:$0xff]
        %v3005 = vld [vmem:[#allocation2 + $0x98] sm:$0xff]
        %v3006 = vld [vmem:[#allocation2 + $0xa0] sm:$0xff]
        %v3007 = vld [vmem:[#allocation2 + $0xa8] sm:$0xff]
        %v3008 = vld [vmem:[#allocation2 + $0xb0] sm:$0xff]
        %v3009 = vld [vmem:[#allocation2 + $0xb8] sm:$0xff]
        %v3010 = vld [vmem:[#allocation2 + $0xc0] sm:$0xff]
        %v3011 = vld [vmem:[#allocation2 + $0xc8] sm:$0xff]
        %v3012 = vld [vmem:[#allocation2 + $0xd0] sm:$0xff]
        %v3013 = vld [vmem:[#allocation2 + $0xd8] sm:$0xff]
        %v3014 = vld [vmem:[#allocation2 + $0xe0] sm:$0xff]
        %v3015 = vld [vmem:[#allocation2 + $0xe8] sm:$0xff]
        %v3016 = vld [vmem:[#allocation2 + $0xf0] sm:$0xff]
        %v3017 = vld [vmem:[#allocation2 + $0xf8] sm:$0xff]
        %v3018 = vmul.bf16 %v2954, %v2986
        %v3019 = vmul.bf16 %v2955, %v2987
        %v3020 = vmul.bf16 %v2956, %v2988
        %v3021 = vmul.bf16 %v2957, %v2989
        %v3022 = vmul.bf16 %v2958, %v2990
        %v3023 = vmul.bf16 %v2959, %v2991
        %v3024 = vmul.bf16 %v2960, %v2992
        %v3025 = vmul.bf16 %v2961, %v2993
        %v3026 = vmul.bf16 %v2962, %v2994
        %v3027 = vmul.bf16 %v2963, %v2995
        %v3028 = vmul.bf16 %v2964, %v2996
        %v3029 = vmul.bf16 %v2965, %v2997
        %v3030 = vmul.bf16 %v2966, %v2998
        %v3031 = vmul.bf16 %v2967, %v2999
        %v3032 = vmul.bf16 %v2968, %v3000
        %v3033 = vmul.bf16 %v2969, %v3001
        %v3034 = vmul.bf16 %v2970, %v3002
        %v3035 = vmul.bf16 %v2971, %v3003
        %v3036 = vmul.bf16 %v2972, %v3004
        %v3037 = vmul.bf16 %v2973, %v3005
        %v3038 = vmul.bf16 %v2974, %v3006
        %v3039 = vmul.bf16 %v2975, %v3007
        %v3040 = vmul.bf16 %v2976, %v3008
        %v3041 = vmul.bf16 %v2977, %v3009
        %v3042 = vmul.bf16 %v2978, %v3010
        %v3043 = vmul.bf16 %v2979, %v3011
        %v3044 = vmul.bf16 %v2980, %v3012
        %v3045 = vmul.bf16 %v2981, %v3013
        %v3046 = vmul.bf16 %v2982, %v3014
        %v3047 = vmul.bf16 %v2983, %v3015
        %v3048 = vmul.bf16 %v2984, %v3016
        %v3049 = vmul.bf16 %v2985, %v3017
        %v3050 = vld [vmem:[#allocation3] sm:$0xff]
        %v3051 = vld [vmem:[#allocation3 + $0x8] sm:$0xff]
        %v3052 = vld [vmem:[#allocation3 + $0x10] sm:$0xff]
        %v3053 = vld [vmem:[#allocation3 + $0x18] sm:$0xff]
        %v3054 = vld [vmem:[#allocation3 + $0x20] sm:$0xff]
        %v3055 = vld [vmem:[#allocation3 + $0x28] sm:$0xff]
        %v3056 = vld [vmem:[#allocation3 + $0x30] sm:$0xff]
        %v3057 = vld [vmem:[#allocation3 + $0x38] sm:$0xff]
        %v3058 = vld [vmem:[#allocation3 + $0x40] sm:$0xff]
        %v3059 = vld [vmem:[#allocation3 + $0x48] sm:$0xff]
        %v3060 = vld [vmem:[#allocation3 + $0x50] sm:$0xff]
        %v3061 = vld [vmem:[#allocation3 + $0x58] sm:$0xff]
        %v3062 = vld [vmem:[#allocation3 + $0x60] sm:$0xff]
        %v3063 = vld [vmem:[#allocation3 + $0x68] sm:$0xff]
        %v3064 = vld [vmem:[#allocation3 + $0x70] sm:$0xff]
        %v3065 = vld [vmem:[#allocation3 + $0x78] sm:$0xff]
        %v3066 = vld [vmem:[#allocation3 + $0x80] sm:$0xff]
        %v3067 = vld [vmem:[#allocation3 + $0x88] sm:$0xff]
        %v3068 = vld [vmem:[#allocation3 + $0x90] sm:$0xff]
        %v3069 = vld [vmem:[#allocation3 + $0x98] sm:$0xff]
        %v3070 = vld [vmem:[#allocation3 + $0xa0] sm:$0xff]
        %v3071 = vld [vmem:[#allocation3 + $0xa8] sm:$0xff]
        %v3072 = vld [vmem:[#allocation3 + $0xb0] sm:$0xff]
        %v3073 = vld [vmem:[#allocation3 + $0xb8] sm:$0xff]
        %v3074 = vld [vmem:[#allocation3 + $0xc0] sm:$0xff]
        %v3075 = vld [vmem:[#allocation3 + $0xc8] sm:$0xff]
        %v3076 = vld [vmem:[#allocation3 + $0xd0] sm:$0xff]
        %v3077 = vld [vmem:[#allocation3 + $0xd8] sm:$0xff]
        %v3078 = vld [vmem:[#allocation3 + $0xe0] sm:$0xff]
        %v3079 = vld [vmem:[#allocation3 + $0xe8] sm:$0xff]
        %v3080 = vld [vmem:[#allocation3 + $0xf0] sm:$0xff]
        %v3081 = vld [vmem:[#allocation3 + $0xf8] sm:$0xff]
        %v3082 = vmul.bf16 %v2954, %v3050
        %v3083 = vmul.bf16 %v2955, %v3051
        %v3084 = vmul.bf16 %v2956, %v3052
        %v3085 = vmul.bf16 %v2957, %v3053
        %v3086 = vmul.bf16 %v2958, %v3054
        %v3087 = vmul.bf16 %v2959, %v3055
        %v3088 = vmul.bf16 %v2960, %v3056
        %v3089 = vmul.bf16 %v2961, %v3057
        %v3090 = vmul.bf16 %v2962, %v3058
        %v3091 = vmul.bf16 %v2963, %v3059
        %v3092 = vmul.bf16 %v2964, %v3060
        %v3093 = vmul.bf16 %v2965, %v3061
        %v3094 = vmul.bf16 %v2966, %v3062
        %v3095 = vmul.bf16 %v2967, %v3063
        %v3096 = vmul.bf16 %v2968, %v3064
        %v3097 = vmul.bf16 %v2969, %v3065
        %v3098 = vmul.bf16 %v2970, %v3066
        %v3099 = vmul.bf16 %v2971, %v3067
        %v3100 = vmul.bf16 %v2972, %v3068
        %v3101 = vmul.bf16 %v2973, %v3069
        %v3102 = vmul.bf16 %v2974, %v3070
        %v3103 = vmul.bf16 %v2975, %v3071
        %v3104 = vmul.bf16 %v2976, %v3072
        %v3105 = vmul.bf16 %v2977, %v3073
        %v3106 = vmul.bf16 %v2978, %v3074
        %v3107 = vmul.bf16 %v2979, %v3075
        %v3108 = vmul.bf16 %v2980, %v3076
        %v3109 = vmul.bf16 %v2981, %v3077
        %v3110 = vmul.bf16 %v2982, %v3078
        %v3111 = vmul.bf16 %v2983, %v3079
        %v3112 = vmul.bf16 %v2984, %v3080
        %v3113 = vmul.bf16 %v2985, %v3081
        %v3114 = vld [vmem:[#allocation11] sm:$0xf]
        %v3115 = vld [vmem:[#allocation11 + $0x4] sm:$0xf]
        %v3116 = vld [vmem:[#allocation11 + $0x8] sm:$0xf]
        %v3117 = vld [vmem:[#allocation11 + $0xc] sm:$0xf]
        %v3118 = vld [vmem:[#allocation11 + $0x10] sm:$0xf]
        %v3119 = vld [vmem:[#allocation11 + $0x14] sm:$0xf]
        %v3120 = vld [vmem:[#allocation11 + $0x18] sm:$0xf]
        %v3121 = vld [vmem:[#allocation11 + $0x1c] sm:$0xf]
        %v3122 = vld [vmem:[#allocation11 + $0x20] sm:$0xf]
        %v3123 = vld [vmem:[#allocation11 + $0x24] sm:$0xf]
        %v3124 = vld [vmem:[#allocation11 + $0x28] sm:$0xf]
        %v3125 = vld [vmem:[#allocation11 + $0x2c] sm:$0xf]
        %v3126 = vld [vmem:[#allocation11 + $0x30] sm:$0xf]
        %v3127 = vld [vmem:[#allocation11 + $0x34] sm:$0xf]
        %v3128 = vld [vmem:[#allocation11 + $0x38] sm:$0xf]
        %v3129 = vld [vmem:[#allocation11 + $0x3c] sm:$0xf]
        %v3130 = vld [vmem:[#allocation11 + $0x40] sm:$0xf]
        %v3131 = vld [vmem:[#allocation11 + $0x44] sm:$0xf]
        %v3132 = vld [vmem:[#allocation11 + $0x48] sm:$0xf]
        %v3133 = vld [vmem:[#allocation11 + $0x4c] sm:$0xf]
        %v3134 = vld [vmem:[#allocation11 + $0x50] sm:$0xf]
        %v3135 = vld [vmem:[#allocation11 + $0x54] sm:$0xf]
        %v3136 = vld [vmem:[#allocation11 + $0x58] sm:$0xf]
        %v3137 = vld [vmem:[#allocation11 + $0x5c] sm:$0xf]
        %v3138 = vld [vmem:[#allocation11 + $0x60] sm:$0xf]
        %v3139 = vld [vmem:[#allocation11 + $0x64] sm:$0xf]
        %v3140 = vld [vmem:[#allocation11 + $0x68] sm:$0xf]
        %v3141 = vld [vmem:[#allocation11 + $0x6c] sm:$0xf]
        %v3142 = vld [vmem:[#allocation11 + $0x70] sm:$0xf]
        %v3143 = vld [vmem:[#allocation11 + $0x74] sm:$0xf]
        %v3144 = vld [vmem:[#allocation11 + $0x78] sm:$0xf]
        %v3145 = vld [vmem:[#allocation11 + $0x7c] sm:$0xf]
        %v3146 = vld [vmem:[#allocation11 + $0x80] sm:$0xf]
        %v3147 = vld [vmem:[#allocation11 + $0x84] sm:$0xf]
        %v3148 = vld [vmem:[#allocation11 + $0x88] sm:$0xf]
        %v3149 = vld [vmem:[#allocation11 + $0x8c] sm:$0xf]
        %v3150 = vld [vmem:[#allocation11 + $0x90] sm:$0xf]
        %v3151 = vld [vmem:[#allocation11 + $0x94] sm:$0xf]
        %v3152 = vld [vmem:[#allocation11 + $0x98] sm:$0xf]
        %v3153 = vld [vmem:[#allocation11 + $0x9c] sm:$0xf]
        %v3154 = vld [vmem:[#allocation11 + $0xa0] sm:$0xf]
        %v3155 = vld [vmem:[#allocation11 + $0xa4] sm:$0xf]
        %v3156 = vld [vmem:[#allocation11 + $0xa8] sm:$0xf]
        %v3157 = vld [vmem:[#allocation11 + $0xac] sm:$0xf]
        %v3158 = vld [vmem:[#allocation11 + $0xb0] sm:$0xf]
        %v3159 = vld [vmem:[#allocation11 + $0xb4] sm:$0xf]
        %v3160 = vld [vmem:[#allocation11 + $0xb8] sm:$0xf]
        %v3161 = vld [vmem:[#allocation11 + $0xbc] sm:$0xf]
        %v3162 = vld [vmem:[#allocation11 + $0xc0] sm:$0xf]
        %v3163 = vld [vmem:[#allocation11 + $0xc4] sm:$0xf]
        %v3164 = vld [vmem:[#allocation11 + $0xc8] sm:$0xf]
        %v3165 = vld [vmem:[#allocation11 + $0xcc] sm:$0xf]
        %v3166 = vld [vmem:[#allocation11 + $0xd0] sm:$0xf]
        %v3167 = vld [vmem:[#allocation11 + $0xd4] sm:$0xf]
        %v3168 = vld [vmem:[#allocation11 + $0xd8] sm:$0xf]
        %v3169 = vld [vmem:[#allocation11 + $0xdc] sm:$0xf]
        %v3170 = vld [vmem:[#allocation11 + $0xe0] sm:$0xf]
        %v3171 = vld [vmem:[#allocation11 + $0xe4] sm:$0xf]
        %v3172 = vld [vmem:[#allocation11 + $0xe8] sm:$0xf]
        %v3173 = vld [vmem:[#allocation11 + $0xec] sm:$0xf]
        %v3174 = vld [vmem:[#allocation11 + $0xf0] sm:$0xf]
        %v3175 = vld [vmem:[#allocation11 + $0xf4] sm:$0xf]
        %v3176 = vld [vmem:[#allocation11 + $0xf8] sm:$0xf]
        %v3177 = vld [vmem:[#allocation11 + $0xfc] sm:$0xf]
        %v3178 = vld [vmem:[#allocation13] sm:$0xf]
        %v3179 = vld [vmem:[#allocation13 + $0x4] sm:$0xf]
        %v3180 = vld [vmem:[#allocation13 + $0x8] sm:$0xf]
        %v3181 = vld [vmem:[#allocation13 + $0xc] sm:$0xf]
        %v3182 = vld [vmem:[#allocation13 + $0x10] sm:$0xf]
        %v3183 = vld [vmem:[#allocation13 + $0x14] sm:$0xf]
        %v3184 = vld [vmem:[#allocation13 + $0x18] sm:$0xf]
        %v3185 = vld [vmem:[#allocation13 + $0x1c] sm:$0xf]
        %v3186 = vld [vmem:[#allocation13 + $0x20] sm:$0xf]
        %v3187 = vld [vmem:[#allocation13 + $0x24] sm:$0xf]
        %v3188 = vld [vmem:[#allocation13 + $0x28] sm:$0xf]
        %v3189 = vld [vmem:[#allocation13 + $0x2c] sm:$0xf]
        %v3190 = vld [vmem:[#allocation13 + $0x30] sm:$0xf]
        %v3191 = vld [vmem:[#allocation13 + $0x34] sm:$0xf]
        %v3192 = vld [vmem:[#allocation13 + $0x38] sm:$0xf]
        %v3193 = vld [vmem:[#allocation13 + $0x3c] sm:$0xf]
        %v3194 = vld [vmem:[#allocation13 + $0x40] sm:$0xf]
        %v3195 = vld [vmem:[#allocation13 + $0x44] sm:$0xf]
        %v3196 = vld [vmem:[#allocation13 + $0x48] sm:$0xf]
        %v3197 = vld [vmem:[#allocation13 + $0x4c] sm:$0xf]
        %v3198 = vld [vmem:[#allocation13 + $0x50] sm:$0xf]
        %v3199 = vld [vmem:[#allocation13 + $0x54] sm:$0xf]
        %v3200 = vld [vmem:[#allocation13 + $0x58] sm:$0xf]
        %v3201 = vld [vmem:[#allocation13 + $0x5c] sm:$0xf]
        %v3202 = vld [vmem:[#allocation13 + $0x60] sm:$0xf]
        %v3203 = vld [vmem:[#allocation13 + $0x64] sm:$0xf]
        %v3204 = vld [vmem:[#allocation13 + $0x68] sm:$0xf]
        %v3205 = vld [vmem:[#allocation13 + $0x6c] sm:$0xf]
        %v3206 = vld [vmem:[#allocation13 + $0x70] sm:$0xf]
        %v3207 = vld [vmem:[#allocation13 + $0x74] sm:$0xf]
        %v3208 = vld [vmem:[#allocation13 + $0x78] sm:$0xf]
        %v3209 = vld [vmem:[#allocation13 + $0x7c] sm:$0xf]
        %v3210 = vld [vmem:[#allocation13 + $0x80] sm:$0xf]
        %v3211 = vld [vmem:[#allocation13 + $0x84] sm:$0xf]
        %v3212 = vld [vmem:[#allocation13 + $0x88] sm:$0xf]
        %v3213 = vld [vmem:[#allocation13 + $0x8c] sm:$0xf]
        %v3214 = vld [vmem:[#allocation13 + $0x90] sm:$0xf]
        %v3215 = vld [vmem:[#allocation13 + $0x94] sm:$0xf]
        %v3216 = vld [vmem:[#allocation13 + $0x98] sm:$0xf]
        %v3217 = vld [vmem:[#allocation13 + $0x9c] sm:$0xf]
        %v3218 = vld [vmem:[#allocation13 + $0xa0] sm:$0xf]
        %v3219 = vld [vmem:[#allocation13 + $0xa4] sm:$0xf]
        %v3220 = vld [vmem:[#allocation13 + $0xa8] sm:$0xf]
        %v3221 = vld [vmem:[#allocation13 + $0xac] sm:$0xf]
        %v3222 = vld [vmem:[#allocation13 + $0xb0] sm:$0xf]
        %v3223 = vld [vmem:[#allocation13 + $0xb4] sm:$0xf]
        %v3224 = vld [vmem:[#allocation13 + $0xb8] sm:$0xf]
        %v3225 = vld [vmem:[#allocation13 + $0xbc] sm:$0xf]
        %v3226 = vld [vmem:[#allocation13 + $0xc0] sm:$0xf]
        %v3227 = vld [vmem:[#allocation13 + $0xc4] sm:$0xf]
        %v3228 = vld [vmem:[#allocation13 + $0xc8] sm:$0xf]
        %v3229 = vld [vmem:[#allocation13 + $0xcc] sm:$0xf]
        %v3230 = vld [vmem:[#allocation13 + $0xd0] sm:$0xf]
        %v3231 = vld [vmem:[#allocation13 + $0xd4] sm:$0xf]
        %v3232 = vld [vmem:[#allocation13 + $0xd8] sm:$0xf]
        %v3233 = vld [vmem:[#allocation13 + $0xdc] sm:$0xf]
        %v3234 = vld [vmem:[#allocation13 + $0xe0] sm:$0xf]
        %v3235 = vld [vmem:[#allocation13 + $0xe4] sm:$0xf]
        %v3236 = vld [vmem:[#allocation13 + $0xe8] sm:$0xf]
        %v3237 = vld [vmem:[#allocation13 + $0xec] sm:$0xf]
        %v3238 = vld [vmem:[#allocation13 + $0xf0] sm:$0xf]
        %v3239 = vld [vmem:[#allocation13 + $0xf4] sm:$0xf]
        %v3240 = vld [vmem:[#allocation13 + $0xf8] sm:$0xf]
        %v3241 = vld [vmem:[#allocation13 + $0xfc] sm:$0xf]
        %v3306 = vunpack.c.l.b16 %v3178
        %v3307 = vunpack.c.l.b16 %v3179
        %v3308 = vunpack.c.l.b16 %v3180
        %v3309 = vunpack.c.l.b16 %v3181
        %v3310 = vunpack.c.l.b16 %v3182
        %v3311 = vunpack.c.l.b16 %v3183
        %v3312 = vunpack.c.l.b16 %v3184
        %v3313 = vunpack.c.l.b16 %v3185
        %v3314 = vunpack.c.l.b16 %v3186
        %v3315 = vunpack.c.l.b16 %v3187
        %v3316 = vunpack.c.l.b16 %v3188
        %v3317 = vunpack.c.l.b16 %v3189
        %v3318 = vunpack.c.l.b16 %v3190
        %v3319 = vunpack.c.l.b16 %v3191
        %v3320 = vunpack.c.l.b16 %v3192
        %v3321 = vunpack.c.l.b16 %v3193
        %v3322 = vunpack.c.l.b16 %v3194
        %v3323 = vunpack.c.l.b16 %v3195
        %v3324 = vunpack.c.l.b16 %v3196
        %v3325 = vunpack.c.l.b16 %v3197
        %v3326 = vunpack.c.l.b16 %v3198
        %v3327 = vunpack.c.l.b16 %v3199
        %v3328 = vunpack.c.l.b16 %v3200
        %v3329 = vunpack.c.l.b16 %v3201
        %v3330 = vunpack.c.l.b16 %v3202
        %v3331 = vunpack.c.l.b16 %v3203
        %v3332 = vunpack.c.l.b16 %v3204
        %v3333 = vunpack.c.l.b16 %v3205
        %v3334 = vunpack.c.l.b16 %v3206
        %v3335 = vunpack.c.l.b16 %v3207
        %v3336 = vunpack.c.l.b16 %v3208
        %v3337 = vunpack.c.l.b16 %v3209
        %v3338 = vunpack.c.l.b16 %v3210
        %v3339 = vunpack.c.l.b16 %v3211
        %v3340 = vunpack.c.l.b16 %v3212
        %v3341 = vunpack.c.l.b16 %v3213
        %v3342 = vunpack.c.l.b16 %v3214
        %v3343 = vunpack.c.l.b16 %v3215
        %v3344 = vunpack.c.l.b16 %v3216
        %v3345 = vunpack.c.l.b16 %v3217
        %v3346 = vunpack.c.l.b16 %v3218
        %v3347 = vunpack.c.l.b16 %v3219
        %v3348 = vunpack.c.l.b16 %v3220
        %v3349 = vunpack.c.l.b16 %v3221
        %v3350 = vunpack.c.l.b16 %v3222
        %v3351 = vunpack.c.l.b16 %v3223
        %v3352 = vunpack.c.l.b16 %v3224
        %v3353 = vunpack.c.l.b16 %v3225
        %v3354 = vunpack.c.l.b16 %v3226
        %v3355 = vunpack.c.l.b16 %v3227
        %v3356 = vunpack.c.l.b16 %v3228
        %v3357 = vunpack.c.l.b16 %v3229
        %v3358 = vunpack.c.l.b16 %v3230
        %v3359 = vunpack.c.l.b16 %v3231
        %v3360 = vunpack.c.l.b16 %v3232
        %v3361 = vunpack.c.l.b16 %v3233
        %v3362 = vunpack.c.l.b16 %v3234
        %v3363 = vunpack.c.l.b16 %v3235
        %v3364 = vunpack.c.l.b16 %v3236
        %v3365 = vunpack.c.l.b16 %v3237
        %v3366 = vunpack.c.l.b16 %v3238
        %v3367 = vunpack.c.l.b16 %v3239
        %v3368 = vunpack.c.l.b16 %v3240
        %v3369 = vunpack.c.l.b16 %v3241
        %v3370 = vpack.c.b16 %v3307, %v3306
        %v3371 = vpack.c.b16 %v3309, %v3308
        %v3372 = vpack.c.b16 %v3311, %v3310
        %v3373 = vpack.c.b16 %v3313, %v3312
        %v3374 = vpack.c.b16 %v3315, %v3314
        %v3375 = vpack.c.b16 %v3317, %v3316
        %v3376 = vpack.c.b16 %v3319, %v3318
        %v3377 = vpack.c.b16 %v3321, %v3320
        %v3378 = vpack.c.b16 %v3323, %v3322
        %v3379 = vpack.c.b16 %v3325, %v3324
        %v3380 = vpack.c.b16 %v3327, %v3326
        %v3381 = vpack.c.b16 %v3329, %v3328
        %v3382 = vpack.c.b16 %v3331, %v3330
        %v3383 = vpack.c.b16 %v3333, %v3332
        %v3384 = vpack.c.b16 %v3335, %v3334
        %v3385 = vpack.c.b16 %v3337, %v3336
        %v3386 = vpack.c.b16 %v3339, %v3338
        %v3387 = vpack.c.b16 %v3341, %v3340
        %v3388 = vpack.c.b16 %v3343, %v3342
        %v3389 = vpack.c.b16 %v3345, %v3344
        %v3390 = vpack.c.b16 %v3347, %v3346
        %v3391 = vpack.c.b16 %v3349, %v3348
        %v3392 = vpack.c.b16 %v3351, %v3350
        %v3393 = vpack.c.b16 %v3353, %v3352
        %v3394 = vpack.c.b16 %v3355, %v3354
        %v3395 = vpack.c.b16 %v3357, %v3356
        %v3396 = vpack.c.b16 %v3359, %v3358
        %v3397 = vpack.c.b16 %v3361, %v3360
        %v3398 = vpack.c.b16 %v3363, %v3362
        %v3399 = vpack.c.b16 %v3365, %v3364
        %v3400 = vpack.c.b16 %v3367, %v3366
        %v3401 = vpack.c.b16 %v3369, %v3368
        %3434 = vmatprep.subr.bf16.mxu0 0
        %3435 = vmatpush1.bf16.msra.mxu0 %v3370
        %3436 = vmatprep.subr.bf16.mxu0 0
        %3437 = vmatpush1.bf16.msra.mxu0 %v3371
        %3438 = vmatprep.subr.bf16.mxu0 0
        %3439 = vmatpush1.bf16.msra.mxu0 %v3372
        %3440 = vmatprep.subr.bf16.mxu0 0
        %3441 = vmatpush1.bf16.msra.mxu0 %v3373
        %3442 = vmatprep.subr.bf16.mxu0 0
        %3443 = vmatpush1.bf16.msra.mxu0 %v3374
        %3444 = vmatprep.subr.bf16.mxu0 0
        %3445 = vmatpush1.bf16.msra.mxu0 %v3375
        %3446 = vmatprep.subr.bf16.mxu0 0
        %3447 = vmatpush1.bf16.msra.mxu0 %v3376
        %3448 = vmatprep.subr.bf16.mxu0 0
        %3449 = vmatpush1.bf16.msra.mxu0 %v3377
        %3450 = vmatprep.subr.bf16.mxu0 0
        %3451 = vmatpush1.bf16.msra.mxu0 %v3378
        %3452 = vmatprep.subr.bf16.mxu0 0
        %3453 = vmatpush1.bf16.msra.mxu0 %v3379
        %3454 = vmatprep.subr.bf16.mxu0 0
        %3455 = vmatpush1.bf16.msra.mxu0 %v3380
        %3456 = vmatprep.subr.bf16.mxu0 0
        %3457 = vmatpush1.bf16.msra.mxu0 %v3381
        %3458 = vmatprep.subr.bf16.mxu0 0
        %3459 = vmatpush1.bf16.msra.mxu0 %v3382
        %3460 = vmatprep.subr.bf16.mxu0 0
        %3461 = vmatpush1.bf16.msra.mxu0 %v3383
        %3462 = vmatprep.subr.bf16.mxu0 0
        %3463 = vmatpush1.bf16.msra.mxu0 %v3384
        %3464 = vmatprep.subr.bf16.mxu0 0
        %3465 = vmatpush1.bf16.msra.mxu0 %v3385
        %3466 = vmatprep.mubr.bf16.mxu0 %v3083
        %3467 = vmatmul.mubr.bf16.gmra.mrb[0].mxu0 %v3082
        %v3468 = vpop.f32.mrb[0].mxu0
        %v3469 = vadd.f32 0.0, %v3468
        %v3470 = vpop.f32.mrb[0].mxu0
        %v3471 = vpop.f32.mrb[0].mxu0
        %v3472 = vadd.f32 0.0, %v3471
        %v3473 = vpop.f32.mrb[0].mxu0
        %3474 = vmatprep.mubr.bf16.mxu0 %v3087
        %3475 = vmatmul.mubr.bf16.gmra.mrb[0].mxu0 %v3086
        %v3476 = vpop.f32.mrb[0].mxu0
        %v3477 = vadd.f32 0.0, %v3476
        %v3478 = vpop.f32.mrb[0].mxu0
        %v3479 = vpop.f32.mrb[0].mxu0
        %v3480 = vadd.f32 0.0, %v3479
        %v3481 = vpop.f32.mrb[0].mxu0
        %3482 = vmatprep.mubr.bf16.mxu0 %v3091
        %3483 = vmatmul.mubr.bf16.gmra.mrb[0].mxu0 %v3090
        %v3484 = vpop.f32.mrb[0].mxu0
        %v3485 = vadd.f32 0.0, %v3484
        %v3486 = vpop.f32.mrb[0].mxu0
        %v3487 = vpop.f32.mrb[0].mxu0
        %v3488 = vadd.f32 0.0, %v3487
        %v3489 = vpop.f32.mrb[0].mxu0
        %3490 = vmatprep.mubr.bf16.mxu0 %v3095
        %3491 = vmatmul.mubr.bf16.gmra.mrb[0].mxu0 %v3094
        %v3492 = vpop.f32.mrb[0].mxu0
        %v3493 = vadd.f32 0.0, %v3492
        %v3494 = vpop.f32.mrb[0].mxu0
        %v3495 = vpop.f32.mrb[0].mxu0
        %v3496 = vadd.f32 0.0, %v3495
        %v3497 = vpop.f32.mrb[0].mxu0
        %3498 = vmatprep.mubr.bf16.mxu0 %v3099
        %3499 = vmatmul.mubr.bf16.gmra.mrb[0].mxu0 %v3098
        %v3500 = vpop.f32.mrb[0].mxu0
        %v3501 = vadd.f32 0.0, %v3500
        %v3502 = vpop.f32.mrb[0].mxu0
        %v3503 = vpop.f32.mrb[0].mxu0
        %v3504 = vadd.f32 0.0, %v3503
        %v3505 = vpop.f32.mrb[0].mxu0
        %3506 = vmatprep.mubr.bf16.mxu0 %v3103
        %3507 = vmatmul.mubr.bf16.gmra.mrb[0].mxu0 %v3102
        %v3508 = vpop.f32.mrb[0].mxu0
        %v3509 = vadd.f32 0.0, %v3508
        %v3510 = vpop.f32.mrb[0].mxu0
        %v3511 = vpop.f32.mrb[0].mxu0
        %v3512 = vadd.f32 0.0, %v3511
        %v3513 = vpop.f32.mrb[0].mxu0
        %3514 = vmatprep.mubr.bf16.mxu0 %v3107
        %3515 = vmatmul.mubr.bf16.gmra.mrb[0].mxu0 %v3106
        %v3516 = vpop.f32.mrb[0].mxu0
        %v3517 = vadd.f32 0.0, %v3516
        %v3518 = vpop.f32.mrb[0].mxu0
        %v3519 = vpop.f32.mrb[0].mxu0
        %v3520 = vadd.f32 0.0, %v3519
        %v3521 = vpop.f32.mrb[0].mxu0
        %3522 = vmatprep.mubr.bf16.mxu0 %v3111
        %3523 = vmatmul.mubr.bf16.gmra.mrb[0].mxu0 %v3110
        %v3524 = vpop.f32.mrb[0].mxu0
        %v3525 = vadd.f32 0.0, %v3524
        %v3526 = vpop.f32.mrb[0].mxu0
        %v3527 = vpop.f32.mrb[0].mxu0
        %v3528 = vadd.f32 0.0, %v3527
        %v3529 = vpop.f32.mrb[0].mxu0
        %3530 = vdwg.mxu0
        %3531 = vmatprep.subr.bf16.mxu0 0
        %3532 = vmatpush1.bf16.msra.mxu0 %v3386
        %3533 = vmatprep.subr.bf16.mxu0 0
        %3534 = vmatpush1.bf16.msra.mxu0 %v3387
        %3535 = vmatprep.subr.bf16.mxu0 0
        %3536 = vmatpush1.bf16.msra.mxu0 %v3388
        %3537 = vmatprep.subr.bf16.mxu0 0
        %3538 = vmatpush1.bf16.msra.mxu0 %v3389
        %3539 = vmatprep.subr.bf16.mxu0 0
        %3540 = vmatpush1.bf16.msra.mxu0 %v3390
        %3541 = vmatprep.subr.bf16.mxu0 0
        %3542 = vmatpush1.bf16.msra.mxu0 %v3391
        %3543 = vmatprep.subr.bf16.mxu0 0
        %3544 = vmatpush1.bf16.msra.mxu0 %v3392
        %3545 = vmatprep.subr.bf16.mxu0 0
        %3546 = vmatpush1.bf16.msra.mxu0 %v3393
        %3547 = vmatprep.subr.bf16.mxu0 0
        %3548 = vmatpush1.bf16.msra.mxu0 %v3394
        %3549 = vmatprep.subr.bf16.mxu0 0
        %3550 = vmatpush1.bf16.msra.mxu0 %v3395
        %3551 = vmatprep.subr.bf16.mxu0 0
        %3552 = vmatpush1.bf16.msra.mxu0 %v3396
        %3553 = vmatprep.subr.bf16.mxu0 0
        %3554 = vmatpush1.bf16.msra.mxu0 %v3397
        %3555 = vmatprep.subr.bf16.mxu0 0
        %3556 = vmatpush1.bf16.msra.mxu0 %v3398
        %3557 = vmatprep.subr.bf16.mxu0 0
        %3558 = vmatpush1.bf16.msra.mxu0 %v3399
        %3559 = vmatprep.subr.bf16.mxu0 0
        %3560 = vmatpush1.bf16.msra.mxu0 %v3400
        %3561 = vmatprep.subr.bf16.mxu0 0
        %3562 = vmatpush1.bf16.msra.mxu0 %v3401
        %3563 = vmatprep.mubr.bf16.mxu0 %v3085
        %3564 = vmatmul.mubr.bf16.gmra.mrb[0].mxu0 %v3084
        %v3565 = vpop.f32.mrb[0].mxu0
        %v3566 = vadd.f32 %v3469, %v3565
        %v3567 = vpop.f32.mrb[0].mxu0
        %v3568 = vpop.f32.mrb[0].mxu0
        %v3569 = vadd.f32 %v3472, %v3568
        %v3570 = vpop.f32.mrb[0].mxu0
        %3571 = vmatprep.mubr.bf16.mxu0 %v3089
        %3572 = vmatmul.mubr.bf16.gmra.mrb[0].mxu0 %v3088
        %v3573 = vpop.f32.mrb[0].mxu0
        %v3574 = vadd.f32 %v3477, %v3573
        %v3575 = vpop.f32.mrb[0].mxu0
        %v3576 = vpop.f32.mrb[0].mxu0
        %v3577 = vadd.f32 %v3480, %v3576
        %v3578 = vpop.f32.mrb[0].mxu0
        %3579 = vmatprep.mubr.bf16.mxu0 %v3093
        %3580 = vmatmul.mubr.bf16.gmra.mrb[0].mxu0 %v3092
        %v3581 = vpop.f32.mrb[0].mxu0
        %v3582 = vadd.f32 %v3485, %v3581
        %v3583 = vpop.f32.mrb[0].mxu0
        %v3584 = vpop.f32.mrb[0].mxu0
        %v3585 = vadd.f32 %v3488, %v3584
        %v3586 = vpop.f32.mrb[0].mxu0
        %3587 = vmatprep.mubr.bf16.mxu0 %v3097
        %3588 = vmatmul.mubr.bf16.gmra.mrb[0].mxu0 %v3096
        %v3589 = vpop.f32.mrb[0].mxu0
        %v3590 = vadd.f32 %v3493, %v3589
        %v3591 = vpop.f32.mrb[0].mxu0
        %v3592 = vpop.f32.mrb[0].mxu0
        %v3593 = vadd.f32 %v3496, %v3592
        %v3594 = vpop.f32.mrb[0].mxu0
        %3595 = vmatprep.mubr.bf16.mxu0 %v3101
        %3596 = vmatmul.mubr.bf16.gmra.mrb[0].mxu0 %v3100
        %v3597 = vpop.f32.mrb[0].mxu0
        %v3598 = vadd.f32 %v3501, %v3597
        %v3599 = vpop.f32.mrb[0].mxu0
        %v3600 = vpop.f32.mrb[0].mxu0
        %v3601 = vadd.f32 %v3504, %v3600
        %v3602 = vpop.f32.mrb[0].mxu0
        %3603 = vmatprep.mubr.bf16.mxu0 %v3105
        %3604 = vmatmul.mubr.bf16.gmra.mrb[0].mxu0 %v3104
        %v3605 = vpop.f32.mrb[0].mxu0
        %v3606 = vadd.f32 %v3509, %v3605
        %v3607 = vpop.f32.mrb[0].mxu0
        %v3608 = vpop.f32.mrb[0].mxu0
        %v3609 = vadd.f32 %v3512, %v3608
        %v3610 = vpop.f32.mrb[0].mxu0
        %3611 = vmatprep.mubr.bf16.mxu0 %v3109
        %3612 = vmatmul.mubr.bf16.gmra.mrb[0].mxu0 %v3108
        %v3613 = vpop.f32.mrb[0].mxu0
        %v3614 = vadd.f32 %v3517, %v3613
        %v3615 = vpop.f32.mrb[0].mxu0
        %v3616 = vpop.f32.mrb[0].mxu0
        %v3617 = vadd.f32 %v3520, %v3616
        %v3618 = vpop.f32.mrb[0].mxu0
        %3619 = vmatprep.mubr.bf16.mxu0 %v3113
        %3620 = vmatmul.mubr.bf16.gmra.mrb[0].mxu0 %v3112
        %v3621 = vpop.f32.mrb[0].mxu0
        %v3622 = vadd.f32 %v3525, %v3621
        %v3623 = vpop.f32.mrb[0].mxu0
        %v3624 = vpop.f32.mrb[0].mxu0
        %v3625 = vadd.f32 %v3528, %v3624
        %v3626 = vpop.f32.mrb[0].mxu0
        %3627 = vdwg.mxu0
        %v3692 = vunpack.c.l.b16 %v3114
        %v3693 = vunpack.c.l.b16 %v3115
        %v3694 = vunpack.c.l.b16 %v3116
        %v3695 = vunpack.c.l.b16 %v3117
        %v3696 = vunpack.c.l.b16 %v3118
        %v3697 = vunpack.c.l.b16 %v3119
        %v3698 = vunpack.c.l.b16 %v3120
        %v3699 = vunpack.c.l.b16 %v3121
        %v3700 = vunpack.c.l.b16 %v3122
        %v3701 = vunpack.c.l.b16 %v3123
        %v3702 = vunpack.c.l.b16 %v3124
        %v3703 = vunpack.c.l.b16 %v3125
        %v3704 = vunpack.c.l.b16 %v3126
        %v3705 = vunpack.c.l.b16 %v3127
        %v3706 = vunpack.c.l.b16 %v3128
        %v3707 = vunpack.c.l.b16 %v3129
        %v3708 = vunpack.c.l.b16 %v3130
        %v3709 = vunpack.c.l.b16 %v3131
        %v3710 = vunpack.c.l.b16 %v3132
        %v3711 = vunpack.c.l.b16 %v3133
        %v3712 = vunpack.c.l.b16 %v3134
        %v3713 = vunpack.c.l.b16 %v3135
        %v3714 = vunpack.c.l.b16 %v3136
        %v3715 = vunpack.c.l.b16 %v3137
        %v3716 = vunpack.c.l.b16 %v3138
        %v3717 = vunpack.c.l.b16 %v3139
        %v3718 = vunpack.c.l.b16 %v3140
        %v3719 = vunpack.c.l.b16 %v3141
        %v3720 = vunpack.c.l.b16 %v3142
        %v3721 = vunpack.c.l.b16 %v3143
        %v3722 = vunpack.c.l.b16 %v3144
        %v3723 = vunpack.c.l.b16 %v3145
        %v3724 = vunpack.c.l.b16 %v3146
        %v3725 = vunpack.c.l.b16 %v3147
        %v3726 = vunpack.c.l.b16 %v3148
        %v3727 = vunpack.c.l.b16 %v3149
        %v3728 = vunpack.c.l.b16 %v3150
        %v3729 = vunpack.c.l.b16 %v3151
        %v3730 = vunpack.c.l.b16 %v3152
        %v3731 = vunpack.c.l.b16 %v3153
        %v3732 = vunpack.c.l.b16 %v3154
        %v3733 = vunpack.c.l.b16 %v3155
        %v3734 = vunpack.c.l.b16 %v3156
        %v3735 = vunpack.c.l.b16 %v3157
        %v3736 = vunpack.c.l.b16 %v3158
        %v3737 = vunpack.c.l.b16 %v3159
        %v3738 = vunpack.c.l.b16 %v3160
        %v3739 = vunpack.c.l.b16 %v3161
        %v3740 = vunpack.c.l.b16 %v3162
        %v3741 = vunpack.c.l.b16 %v3163
        %v3742 = vunpack.c.l.b16 %v3164
        %v3743 = vunpack.c.l.b16 %v3165
        %v3744 = vunpack.c.l.b16 %v3166
        %v3745 = vunpack.c.l.b16 %v3167
        %v3746 = vunpack.c.l.b16 %v3168
        %v3747 = vunpack.c.l.b16 %v3169
        %v3748 = vunpack.c.l.b16 %v3170
        %v3749 = vunpack.c.l.b16 %v3171
        %v3750 = vunpack.c.l.b16 %v3172
        %v3751 = vunpack.c.l.b16 %v3173
        %v3752 = vunpack.c.l.b16 %v3174
        %v3753 = vunpack.c.l.b16 %v3175
        %v3754 = vunpack.c.l.b16 %v3176
        %v3755 = vunpack.c.l.b16 %v3177
        %v3756 = vpack.c.b16 %v3693, %v3692
        %v3757 = vpack.c.b16 %v3695, %v3694
        %v3758 = vpack.c.b16 %v3697, %v3696
        %v3759 = vpack.c.b16 %v3699, %v3698
        %v3760 = vpack.c.b16 %v3701, %v3700
        %v3761 = vpack.c.b16 %v3703, %v3702
        %v3762 = vpack.c.b16 %v3705, %v3704
        %v3763 = vpack.c.b16 %v3707, %v3706
        %v3764 = vpack.c.b16 %v3709, %v3708
        %v3765 = vpack.c.b16 %v3711, %v3710
        %v3766 = vpack.c.b16 %v3713, %v3712
        %v3767 = vpack.c.b16 %v3715, %v3714
        %v3768 = vpack.c.b16 %v3717, %v3716
        %v3769 = vpack.c.b16 %v3719, %v3718
        %v3770 = vpack.c.b16 %v3721, %v3720
        %v3771 = vpack.c.b16 %v3723, %v3722
        %v3772 = vpack.c.b16 %v3725, %v3724
        %v3773 = vpack.c.b16 %v3727, %v3726
        %v3774 = vpack.c.b16 %v3729, %v3728
        %v3775 = vpack.c.b16 %v3731, %v3730
        %v3776 = vpack.c.b16 %v3733, %v3732
        %v3777 = vpack.c.b16 %v3735, %v3734
        %v3778 = vpack.c.b16 %v3737, %v3736
        %v3779 = vpack.c.b16 %v3739, %v3738
        %v3780 = vpack.c.b16 %v3741, %v3740
        %v3781 = vpack.c.b16 %v3743, %v3742
        %v3782 = vpack.c.b16 %v3745, %v3744
        %v3783 = vpack.c.b16 %v3747, %v3746
        %v3784 = vpack.c.b16 %v3749, %v3748
        %v3785 = vpack.c.b16 %v3751, %v3750
        %v3786 = vpack.c.b16 %v3753, %v3752
        %v3787 = vpack.c.b16 %v3755, %v3754
        %3820 = vmatprep.subr.bf16.mxu0 0
        %3821 = vmatpush1.bf16.msra.mxu0 %v3756
        %3822 = vmatprep.subr.bf16.mxu0 0
        %3823 = vmatpush1.bf16.msra.mxu0 %v3757
        %3824 = vmatprep.subr.bf16.mxu0 0
        %3825 = vmatpush1.bf16.msra.mxu0 %v3758
        %3826 = vmatprep.subr.bf16.mxu0 0
        %3827 = vmatpush1.bf16.msra.mxu0 %v3759
        %3828 = vmatprep.subr.bf16.mxu0 0
        %3829 = vmatpush1.bf16.msra.mxu0 %v3760
        %3830 = vmatprep.subr.bf16.mxu0 0
        %3831 = vmatpush1.bf16.msra.mxu0 %v3761
        %3832 = vmatprep.subr.bf16.mxu0 0
        %3833 = vmatpush1.bf16.msra.mxu0 %v3762
        %3834 = vmatprep.subr.bf16.mxu0 0
        %3835 = vmatpush1.bf16.msra.mxu0 %v3763
        %3836 = vmatprep.subr.bf16.mxu0 0
        %3837 = vmatpush1.bf16.msra.mxu0 %v3764
        %3838 = vmatprep.subr.bf16.mxu0 0
        %3839 = vmatpush1.bf16.msra.mxu0 %v3765
        %3840 = vmatprep.subr.bf16.mxu0 0
        %3841 = vmatpush1.bf16.msra.mxu0 %v3766
        %3842 = vmatprep.subr.bf16.mxu0 0
        %3843 = vmatpush1.bf16.msra.mxu0 %v3767
        %3844 = vmatprep.subr.bf16.mxu0 0
        %3845 = vmatpush1.bf16.msra.mxu0 %v3768
        %3846 = vmatprep.subr.bf16.mxu0 0
        %3847 = vmatpush1.bf16.msra.mxu0 %v3769
        %3848 = vmatprep.subr.bf16.mxu0 0
        %3849 = vmatpush1.bf16.msra.mxu0 %v3770
        %3850 = vmatprep.subr.bf16.mxu0 0
        %3851 = vmatpush1.bf16.msra.mxu0 %v3771
        %3852 = vmatprep.mubr.bf16.mxu0 %v3019
        %3853 = vmatmul.mubr.bf16.gmra.mrb[0].mxu0 %v3018
        %v3854 = vpop.f32.mrb[0].mxu0
        %v3855 = vadd.f32 %v3566, %v3854
        %v3856 = vpop.f32.mrb[0].mxu0
        %v3857 = vpop.f32.mrb[0].mxu0
        %v3858 = vadd.f32 %v3569, %v3857
        %v3859 = vpop.f32.mrb[0].mxu0
        %3860 = vmatprep.mubr.bf16.mxu0 %v3023
        %3861 = vmatmul.mubr.bf16.gmra.mrb[0].mxu0 %v3022
        %v3862 = vpop.f32.mrb[0].mxu0
        %v3863 = vadd.f32 %v3574, %v3862
        %v3864 = vpop.f32.mrb[0].mxu0
        %v3865 = vpop.f32.mrb[0].mxu0
        %v3866 = vadd.f32 %v3577, %v3865
        %v3867 = vpop.f32.mrb[0].mxu0
        %3868 = vmatprep.mubr.bf16.mxu0 %v3027
        %3869 = vmatmul.mubr.bf16.gmra.mrb[0].mxu0 %v3026
        %v3870 = vpop.f32.mrb[0].mxu0
        %v3871 = vadd.f32 %v3582, %v3870
        %v3872 = vpop.f32.mrb[0].mxu0
        %v3873 = vpop.f32.mrb[0].mxu0
        %v3874 = vadd.f32 %v3585, %v3873
        %v3875 = vpop.f32.mrb[0].mxu0
        %3876 = vmatprep.mubr.bf16.mxu0 %v3031
        %3877 = vmatmul.mubr.bf16.gmra.mrb[0].mxu0 %v3030
        %v3878 = vpop.f32.mrb[0].mxu0
        %v3879 = vadd.f32 %v3590, %v3878
        %v3880 = vpop.f32.mrb[0].mxu0
        %v3881 = vpop.f32.mrb[0].mxu0
        %v3882 = vadd.f32 %v3593, %v3881
        %v3883 = vpop.f32.mrb[0].mxu0
        %3884 = vmatprep.mubr.bf16.mxu0 %v3035
        %3885 = vmatmul.mubr.bf16.gmra.mrb[0].mxu0 %v3034
        %v3886 = vpop.f32.mrb[0].mxu0
        %v3887 = vadd.f32 %v3598, %v3886
        %v3888 = vpop.f32.mrb[0].mxu0
        %v3889 = vpop.f32.mrb[0].mxu0
        %v3890 = vadd.f32 %v3601, %v3889
        %v3891 = vpop.f32.mrb[0].mxu0
        %3892 = vmatprep.mubr.bf16.mxu0 %v3039
        %3893 = vmatmul.mubr.bf16.gmra.mrb[0].mxu0 %v3038
        %v3894 = vpop.f32.mrb[0].mxu0
        %v3895 = vadd.f32 %v3606, %v3894
        %v3896 = vpop.f32.mrb[0].mxu0
        %v3897 = vpop.f32.mrb[0].mxu0
        %v3898 = vadd.f32 %v3609, %v3897
        %v3899 = vpop.f32.mrb[0].mxu0
        %3900 = vmatprep.mubr.bf16.mxu0 %v3043
        %3901 = vmatmul.mubr.bf16.gmra.mrb[0].mxu0 %v3042
        %v3902 = vpop.f32.mrb[0].mxu0
        %v3903 = vadd.f32 %v3614, %v3902
        %v3904 = vpop.f32.mrb[0].mxu0
        %v3905 = vpop.f32.mrb[0].mxu0
        %v3906 = vadd.f32 %v3617, %v3905
        %v3907 = vpop.f32.mrb[0].mxu0
        %3908 = vmatprep.mubr.bf16.mxu0 %v3047
        %3909 = vmatmul.mubr.bf16.gmra.mrb[0].mxu0 %v3046
        %v3910 = vpop.f32.mrb[0].mxu0
        %v3911 = vadd.f32 %v3622, %v3910
        %v3912 = vpop.f32.mrb[0].mxu0
        %v3913 = vpop.f32.mrb[0].mxu0
        %v3914 = vadd.f32 %v3625, %v3913
        %v3915 = vpop.f32.mrb[0].mxu0
        %3916 = vdwg.mxu0
        %3917 = vmatprep.subr.bf16.mxu0 0
        %3918 = vmatpush1.bf16.msra.mxu0 %v3772
        %3919 = vmatprep.subr.bf16.mxu0 0
        %3920 = vmatpush1.bf16.msra.mxu0 %v3773
        %3921 = vmatprep.subr.bf16.mxu0 0
        %3922 = vmatpush1.bf16.msra.mxu0 %v3774
        %3923 = vmatprep.subr.bf16.mxu0 0
        %3924 = vmatpush1.bf16.msra.mxu0 %v3775
        %3925 = vmatprep.subr.bf16.mxu0 0
        %3926 = vmatpush1.bf16.msra.mxu0 %v3776
        %3927 = vmatprep.subr.bf16.mxu0 0
        %3928 = vmatpush1.bf16.msra.mxu0 %v3777
        %3929 = vmatprep.subr.bf16.mxu0 0
        %3930 = vmatpush1.bf16.msra.mxu0 %v3778
        %3931 = vmatprep.subr.bf16.mxu0 0
        %3932 = vmatpush1.bf16.msra.mxu0 %v3779
        %3933 = vmatprep.subr.bf16.mxu0 0
        %3934 = vmatpush1.bf16.msra.mxu0 %v3780
        %3935 = vmatprep.subr.bf16.mxu0 0
        %3936 = vmatpush1.bf16.msra.mxu0 %v3781
        %3937 = vmatprep.subr.bf16.mxu0 0
        %3938 = vmatpush1.bf16.msra.mxu0 %v3782
        %3939 = vmatprep.subr.bf16.mxu0 0
        %3940 = vmatpush1.bf16.msra.mxu0 %v3783
        %3941 = vmatprep.subr.bf16.mxu0 0
        %3942 = vmatpush1.bf16.msra.mxu0 %v3784
        %3943 = vmatprep.subr.bf16.mxu0 0
        %3944 = vmatpush1.bf16.msra.mxu0 %v3785
        %3945 = vmatprep.subr.bf16.mxu0 0
        %3946 = vmatpush1.bf16.msra.mxu0 %v3786
        %3947 = vmatprep.subr.bf16.mxu0 0
        %3948 = vmatpush1.bf16.msra.mxu0 %v3787
        %3949 = vmatprep.mubr.bf16.mxu0 %v3021
        %3950 = vmatmul.mubr.bf16.gmra.mrb[0].mxu0 %v3020
        %v3951 = vpop.f32.mrb[0].mxu0
        %v3952 = vadd.f32 %v3855, %v3951
        %v3953 = vpop.f32.mrb[0].mxu0
        %v3954 = vpop.f32.mrb[0].mxu0
        %v3955 = vadd.f32 %v3858, %v3954
        %v3956 = vpop.f32.mrb[0].mxu0
        %3957 = vmatprep.mubr.bf16.mxu0 %v3025
        %3958 = vmatmul.mubr.bf16.gmra.mrb[0].mxu0 %v3024
        %v3959 = vpop.f32.mrb[0].mxu0
        %v3960 = vadd.f32 %v3863, %v3959
        %v3961 = vpop.f32.mrb[0].mxu0
        %v3962 = vpop.f32.mrb[0].mxu0
        %v3963 = vadd.f32 %v3866, %v3962
        %v3964 = vpop.f32.mrb[0].mxu0
        %3965 = vmatprep.mubr.bf16.mxu0 %v3029
        %3966 = vmatmul.mubr.bf16.gmra.mrb[0].mxu0 %v3028
        %v3967 = vpop.f32.mrb[0].mxu0
        %v3968 = vadd.f32 %v3871, %v3967
        %v3969 = vpop.f32.mrb[0].mxu0
        %v3970 = vpop.f32.mrb[0].mxu0
        %v3971 = vadd.f32 %v3874, %v3970
        %v3972 = vpop.f32.mrb[0].mxu0
        %3973 = vmatprep.mubr.bf16.mxu0 %v3033
        %3974 = vmatmul.mubr.bf16.gmra.mrb[0].mxu0 %v3032
        %v3975 = vpop.f32.mrb[0].mxu0
        %v3976 = vadd.f32 %v3879, %v3975
        %v3977 = vpop.f32.mrb[0].mxu0
        %v3978 = vpop.f32.mrb[0].mxu0
        %v3979 = vadd.f32 %v3882, %v3978
        %v3980 = vpop.f32.mrb[0].mxu0
        %3981 = vmatprep.mubr.bf16.mxu0 %v3037
        %3982 = vmatmul.mubr.bf16.gmra.mrb[0].mxu0 %v3036
        %v3983 = vpop.f32.mrb[0].mxu0
        %v3984 = vadd.f32 %v3887, %v3983
        %v3985 = vpop.f32.mrb[0].mxu0
        %v3986 = vpop.f32.mrb[0].mxu0
        %v3987 = vadd.f32 %v3890, %v3986
        %v3988 = vpop.f32.mrb[0].mxu0
        %3989 = vmatprep.mubr.bf16.mxu0 %v3041
        %3990 = vmatmul.mubr.bf16.gmra.mrb[0].mxu0 %v3040
        %v3991 = vpop.f32.mrb[0].mxu0
        %v3992 = vadd.f32 %v3895, %v3991
        %v3993 = vpop.f32.mrb[0].mxu0
        %v3994 = vpop.f32.mrb[0].mxu0
        %v3995 = vadd.f32 %v3898, %v3994
        %v3996 = vpop.f32.mrb[0].mxu0
        %3997 = vmatprep.mubr.bf16.mxu0 %v3045
        %3998 = vmatmul.mubr.bf16.gmra.mrb[0].mxu0 %v3044
        %v3999 = vpop.f32.mrb[0].mxu0
        %v4000 = vadd.f32 %v3903, %v3999
        %v4001 = vpop.f32.mrb[0].mxu0
        %v4002 = vpop.f32.mrb[0].mxu0
        %v4003 = vadd.f32 %v3906, %v4002
        %v4004 = vpop.f32.mrb[0].mxu0
        %4005 = vmatprep.mubr.bf16.mxu0 %v3049
        %4006 = vmatmul.mubr.bf16.gmra.mrb[0].mxu0 %v3048
        %v4007 = vpop.f32.mrb[0].mxu0
        %v4008 = vadd.f32 %v3911, %v4007
        %v4009 = vpop.f32.mrb[0].mxu0
        %v4010 = vpop.f32.mrb[0].mxu0
        %v4011 = vadd.f32 %v3914, %v4010
        %v4012 = vpop.f32.mrb[0].mxu0
        %4013 = vdwg.mxu0
        %v4014 = vld [vmem:[#allocation14] sm:$0x1]
        %v4016 = vlaneseq
        %v4017 = vshrl.u32 %v4016, 7
        %v4018 = vsub.s32 0, %v4017
        %v4019 = vrot.slane %v4014, %v4018
        %v4021 = vadd.f32 %v3952, %v4019
        %v4022 = vadd.f32 %v3955, %v4019
        %v4023 = vadd.f32 %v3960, %v4019
        %v4024 = vadd.f32 %v3963, %v4019
        %v4025 = vadd.f32 %v3968, %v4019
        %v4026 = vadd.f32 %v3971, %v4019
        %v4027 = vadd.f32 %v3976, %v4019
        %v4028 = vadd.f32 %v3979, %v4019
        %v4029 = vadd.f32 %v3984, %v4019
        %v4030 = vadd.f32 %v3987, %v4019
        %v4031 = vadd.f32 %v3992, %v4019
        %v4032 = vadd.f32 %v3995, %v4019
        %v4033 = vadd.f32 %v4000, %v4019
        %v4034 = vadd.f32 %v4003, %v4019
        %v4035 = vadd.f32 %v4008, %v4019
        %v4036 = vadd.f32 %v4011, %v4019
        %v4037 = vtanh.pop %v4021
        %v4038 = vtanh.pop %v4022
        %v4039 = vtanh.pop %v4023
        %v4040 = vtanh.pop %v4024
        %v4041 = vtanh.pop %v4025
        %v4042 = vtanh.pop %v4026
        %v4043 = vtanh.pop %v4027
        %v4044 = vtanh.pop %v4028
        %v4045 = vtanh.pop %v4029
        %v4046 = vtanh.pop %v4030
        %v4047 = vtanh.pop %v4031
        %v4048 = vtanh.pop %v4032
        %v4049 = vtanh.pop %v4033
        %v4050 = vtanh.pop %v4034
        %v4051 = vtanh.pop %v4035
        %v4052 = vtanh.pop %v4036
        %v4053 = vld [vmem:[#allocation16] sm:$0x1]
        %v4054 = vld [vmem:[#allocation5] sm:$0x1]
        %4056 = vset.pattern.permute.xlu0 0
        %4057 = vperm.xlu0 %4056, %v4054
        %v4058 = vpop.permute.xlu0 %4057
        %v4060 = vlaneseq
        %v4061 = vshrl.u32 %v4060, 7
        %v4062 = vsub.s32 0, %v4061
        %v4063 = vrot.slane %v4058, %v4062
        %4064 = vmatprep.subr.mxu0 0.0
        %4065 = vmatpush1.xpose.msra.mxu0 %v4037
        %4066 = vmatprep.subr.mxu0 0.0
        %4067 = vmatpush1.xpose.msra.mxu0 %v4038
        %4068 = vmatprep.subr.mxu0 0.0
        %4069 = vmatpush1.xpose.msra.mxu0 %v4039
        %4070 = vmatprep.subr.mxu0 0.0
        %4071 = vmatpush1.xpose.msra.mxu0 %v4040
        %4072 = vmatprep.subr.mxu0 0.0
        %4073 = vmatpush1.xpose.msra.mxu0 %v4041
        %4074 = vmatprep.subr.mxu0 0.0
        %4075 = vmatpush1.xpose.msra.mxu0 %v4042
        %4076 = vmatprep.subr.mxu0 0.0
        %4077 = vmatpush1.xpose.msra.mxu0 %v4043
        %4078 = vmatprep.subr.mxu0 0.0
        %4079 = vmatpush1.xpose.msra.mxu0 %v4044
        %4080 = vmatprep.subr.mxu0 0.0
        %4081 = vmatpush1.xpose.msra.mxu0 %v4045
        %4082 = vmatprep.subr.mxu0 0.0
        %4083 = vmatpush1.xpose.msra.mxu0 %v4046
        %4084 = vmatprep.subr.mxu0 0.0
        %4085 = vmatpush1.xpose.msra.mxu0 %v4047
        %4086 = vmatprep.subr.mxu0 0.0
        %4087 = vmatpush1.xpose.msra.mxu0 %v4048
        %4088 = vmatprep.subr.mxu0 0.0
        %4089 = vmatpush1.xpose.msra.mxu0 %v4049
        %4090 = vmatprep.subr.mxu0 0.0
        %4091 = vmatpush1.xpose.msra.mxu0 %v4050
        %4092 = vmatprep.subr.mxu0 0.0
        %4093 = vmatpush1.xpose.msra.mxu0 %v4051
        %4094 = vmatprep.subr.mxu0 0.0
        %4095 = vmatpush1.xpose.msra.mxu0 %v4052
        %4096 = vmatprep.subr.mxu0 0.0
        %4097 = vmatpush1.xpose.msra.mxu0 0.0
        %4098 = vmatprep.subr.mxu0 0.0
        %4099 = vmatpush1.xpose.msra.mxu0 0.0
        %4100 = vmatprep.subr.mxu0 0.0
        %4101 = vmatpush1.xpose.msra.mxu0 0.0
        %4102 = vmatprep.subr.mxu0 0.0
        %4103 = vmatpush1.xpose.msra.mxu0 0.0
        %4104 = vmatprep.subr.mxu0 0.0
        %4105 = vmatpush1.xpose.msra.mxu0 0.0
        %4106 = vmatprep.subr.mxu0 0.0
        %4107 = vmatpush1.xpose.msra.mxu0 0.0
        %4108 = vmatprep.subr.mxu0 0.0
        %4109 = vmatpush1.xpose.msra.mxu0 0.0
        %4110 = vmatprep.subr.mxu0 0.0
        %4111 = vmatpush1.xpose.msra.mxu0 0.0
        %4112 = vmatprep.subr.mxu0 0.0
        %4113 = vmatpush1.xpose.msra.mxu0 0.0
        %4114 = vmatprep.subr.mxu0 0.0
        %4115 = vmatpush1.xpose.msra.mxu0 0.0
        %4116 = vmatprep.subr.mxu0 0.0
        %4117 = vmatpush1.xpose.msra.mxu0 0.0
        %4118 = vmatprep.subr.mxu0 0.0
        %4119 = vmatpush1.xpose.msra.mxu0 0.0
        %4120 = vmatprep.subr.mxu0 0.0
        %4121 = vmatpush1.xpose.msra.mxu0 0.0
        %4122 = vmatprep.subr.mxu0 0.0
        %4123 = vmatpush1.xpose.msra.mxu0 0.0
        %4124 = vmatprep.subr.mxu0 0.0
        %4125 = vmatpush1.xpose.msra.mxu0 0.0
        %4126 = vmatprep.subr.mxu0 0.0
        %4127 = vmatpush1.xpose.msra.mxu0 0.0
        %4128 = vmatprep.mubr.f32.mxu0 0.0
        %4129 = vmatmul.mubr.f32.gmra.mrb[0].mxu0 %v4053
        %v4130 = vpop.f32.mrb[0].mxu0
        %v4131 = vadd.f32 %v4063, %v4130
        %v4132 = vpop.f32.mrb[0].mxu0
        %4133 = vdwg.mxu0
        %4134 = vst [vmem:[%s418] sm:$0x1] %v4131
        %p4135 = scmp.lt.s32.totalorder %s27, 1
        %s4136 = scalar_select %p4135, %s27, 1
        %s4137 = scalar_lea.vmem %s8, %s4136
        // Predicated region
        $region81: #{masked_model_rank1.1} parent=51 // pred_check
          %p4138 = pneg %p218
        $region82: #{masked_model_rank1.1} parent=51 // pred_check_branch
          %4140 = sbr.rel (%p4138) target = $region84
        $region83: #{masked_model_rank1.1} parent=51 // pred_region
          _
        $region84: #{masked_model_rank1.1} parent=51 // pred_fallthru
          _
      $region52: #{masked_model_rank1.1} parent=5 // pred_fallthru
        _
      %p4141 = scmp.le.s32.totalorder 2, %s22
      // Predicated region
      $region85: #{masked_model_rank1.1} parent=5 // pred_check
        %p4142 = pneg %p4141
      $region86: #{masked_model_rank1.1} parent=5 // pred_check_branch
        %4144 = sbr.rel (%p4142) target = $region88
      $region87: #{masked_model_rank1.1} parent=5 // pred_region
        %s4145 = ssub.s32 %s22, 2
        // Predicated region
        $region89: #{masked_model_rank1.1} parent=87 // pred_check
          %p4146 = pneg %p224
        $region90: #{masked_model_rank1.1} parent=87 // pred_check_branch
          %4148 = sbr.rel (%p4146) target = $region92
        $region91: #{masked_model_rank1.1} parent=87 // pred_region
          %p4149 = scmp.lt.s32.totalorder %s28, 1
          %s4150 = scalar_select %p4149, %s28, 1
          %s4151 = scalar_lea.vmem %s8, %s4150
        $region92: #{masked_model_rank1.1} parent=87 // pred_fallthru
          _
      $region88: #{masked_model_rank1.1} parent=5 // pred_fallthru
        _
    $region6: #{masked_model_rank1.1} parent=1 // loop_footer
      %s26 = sadd.s32 1, %s22
    $region7: #{masked_model_rank1.1} parent=1 // loop_footer_branch
      %21 = sbr.rel target = $region3
    $region8: #{masked_model_rank1.1} parent=1 // loop_exit
      _
    %4152 = vsyncpa [#allocation7], 1
    %s4153 = scalar_lea.sflag [#allocation7], 1
    %4154 = vsyncpa %s4153, 1
    %4155 = vsyncpa [#allocation9], 1
    %4156 = vsyncpa [#allocation12], 1
    %4157 = vsyncpa [#allocation15], 1

</llo_original>
